<compile_context>
chip_gen: v6e
topology: v6e:2x2x1
jax: 0.10.0
libtpu: 0.0.40
codegen_flags: <defaults>
</compile_context>

<pallas_src>
import functools

import jax
import jax.numpy as jnp
from jax.experimental import pallas as pl
from jax.experimental.pallas import tpu as pltpu

WIDTH = 128
IN_DIM = 28 * 28          # 784
IN_PAD = 896              # 7 * 128, lane-aligned first-layer contraction
OUT_DIM = 10
OUT_PAD = 128             # lane-dense padded output width
NUM_LAYERS = 9            # 8 hidden (Linear + ELU) + 1 output Linear
NUM_HIDDEN = NUM_LAYERS - 1
DEFAULT_TILE_N = 1024     # large M tile; clamped to padded batch when smaller


def _elu(x):
    # PyTorch nn.ELU (alpha=1.0).  The positive branch of exp() may hit +inf
    # but never NaN, and jnp.where discards it, so no clamp is needed.
    # TODO(synk): jnp.expm1 matches torch slightly better for tiny negative x;
    # exp(x)-1 kept since expm1 lowering support in Mosaic is uncertain.
    return jnp.where(x > 0, x, jnp.exp(x) - 1.0)


def mlp_elu_kernel(x_ref, w0_ref, b0_ref, wh_ref, bh_ref, wo_ref, bo_ref, out_ref):
    # x_ref : (TILE_N, 896) bf16 (cols >=784 zero)
    # w0_ref: (896, 128) bf16 (rows >=784 zero),  b0_ref: (1, 128) f32
    # wh_ref: (7, 128, 128) bf16,                 bh_ref: (7, 1, 128) f32
    # wo_ref: (128, 128) bf16 (cols >=10 zero),   bo_ref: (1, 128) f32
    # out_ref: (TILE_N, 128) bf16
    h = jnp.dot(x_ref[...], w0_ref[...],
                preferred_element_type=jnp.float32) + b0_ref[...]
    h = _elu(h)
    # Remaining 7 hidden layers (static unrolled; weights VMEM-resident).
    for i in range(NUM_HIDDEN - 1):
        h = jnp.dot(h.astype(jnp.bfloat16), wh_ref[i],
                    preferred_element_type=jnp.float32) + bh_ref[i]
        h = _elu(h)
    # Final Linear 128 -> 10 (padded to 128 lanes), no activation.
    out = jnp.dot(h.astype(jnp.bfloat16), wo_ref[...],
                  preferred_element_type=jnp.float32) + bo_ref[...]
    out_ref[...] = out.astype(out_ref.dtype)


@functools.partial(jax.jit, static_argnames=("tile_n",))
def mlp_elu_forward(x_nchw, params, tile_n=DEFAULT_TILE_N):
    """params: list of (W, b), W shaped (in, out) f32, b shaped (1, out) f32."""
    n = x_nchw.shape[0]
    x_flat = x_nchw.reshape(n, -1).astype(jnp.float32)      # nn.Flatten -> (N, 784)

    # Clamp the tile to the (128-rounded) batch so small batches don't burn a
    # huge tile; keep tiles a multiple of 128 rows (sublane-friendly for any
    # dtype).  For large batches this leaves >=2 grid steps for v7x megacore.
    tile = min(tile_n, ((n + 127) // 128) * 128)
    num_tiles = pl.cdiv(n, tile)
    n_pad = num_tiles * tile

    # Pad batch -> n_pad rows, features 784 -> 896 lanes; bf16 matmul inputs.
    x_bf = jnp.pad(x_flat.astype(jnp.bfloat16),
                   ((0, n_pad - n), (0, IN_PAD - IN_DIM)))

    # Pack parameters: padded first layer / 7 stacked hidden layers / padded last.
    w0, b0 = params[0]
    w0p = jnp.zeros((IN_PAD, WIDTH), jnp.bfloat16).at[:IN_DIM].set(
        w0.astype(jnp.bfloat16))                                      # (896, 128)
    wh = jnp.stack([params[i][0] for i in range(1, NUM_HIDDEN)]
                   ).astype(jnp.bfloat16)                             # (7, 128, 128)
    bh = jnp.stack([params[i][1] for i in range(1, NUM_HIDDEN)])      # (7, 1, 128) f32
    wo, bo = params[-1]
    wo_pad = jnp.zeros((WIDTH, OUT_PAD), jnp.bfloat16
                       ).at[:, :OUT_DIM].set(wo.astype(jnp.bfloat16))
    bo_pad = jnp.zeros((1, OUT_PAD), jnp.float32).at[:, :OUT_DIM].set(bo)

    const2 = lambda i: (0, 0)
    const3 = lambda i: (0, 0, 0)

    flops = 2 * n_pad * (IN_PAD * WIDTH
                         + (NUM_HIDDEN - 1) * WIDTH * WIDTH
                         + WIDTH * OUT_PAD)
    transcendentals = n_pad * WIDTH * NUM_HIDDEN
    bytes_accessed = (n_pad * IN_PAD * 2 + n_pad * OUT_PAD * 2
                      + (IN_PAD * WIDTH + 7 * WIDTH * WIDTH + WIDTH * OUT_PAD) * 2
                      + (NUM_HIDDEN * WIDTH + OUT_PAD) * 4)

    out = pl.pallas_call(
        mlp_elu_kernel,
        out_shape=jax.ShapeDtypeStruct((n_pad, OUT_PAD), jnp.bfloat16),
        grid=(num_tiles,),
        in_specs=[
            pl.BlockSpec((tile, IN_PAD), lambda i: (i, 0)),          # x tile (pipelined)
            pl.BlockSpec((IN_PAD, WIDTH), const2),                   # w0 (resident)
            pl.BlockSpec((1, WIDTH), const2),                        # b0
            pl.BlockSpec((NUM_HIDDEN - 1, WIDTH, WIDTH), const3),    # stacked hidden W
            pl.BlockSpec((NUM_HIDDEN - 1, 1, WIDTH), const3),        # stacked hidden b
            pl.BlockSpec((WIDTH, OUT_PAD), const2),                  # padded last W
            pl.BlockSpec((1, OUT_PAD), const2),                      # padded last b
        ],
        out_specs=pl.BlockSpec((tile, OUT_PAD), lambda i: (i, 0)),
        compiler_params=pltpu.CompilerParams(
            dimension_semantics=("parallel",),
            vmem_limit_bytes=32 << 20,
        ),
        cost_estimate=pl.CostEstimate(
            flops=flops,
            transcendentals=transcendentals,
            bytes_accessed=bytes_accessed,
        ),
    )(x_bf, w0p, b0, wh, bh, wo_pad, bo_pad)

    return out[:n, :OUT_DIM].astype(jnp.float32)


def init_params(key):
    """Deterministic init mimicking PyTorch nn.Linear defaults
    (uniform(-1/sqrt(fan_in), 1/sqrt(fan_in)) for both W and b)."""
    dims = [IN_DIM] + [WIDTH] * NUM_HIDDEN + [OUT_DIM]
    params = []
    for i in range(NUM_LAYERS):
        fan_in, fan_out = dims[i], dims[i + 1]
        key, kw, kb = jax.random.split(key, 3)
        bound = 1.0 / (fan_in ** 0.5)
        w = jax.random.uniform(kw, (fan_in, fan_out), jnp.float32, -bound, bound)
        b = jax.random.uniform(kb, (1, fan_out), jnp.float32, -bound, bound)
        params.append((w, b))
    return params


def reference_forward(x_nchw, params):
    """Reference mirroring the kernel numerics: bf16 matmul inputs,
    f32 accumulation, f32 ELU."""
    h = x_nchw.reshape(x_nchw.shape[0], -1).astype(jnp.float32)
    for i, (w, b) in enumerate(params):
        h = jnp.dot(h.astype(jnp.bfloat16), w.astype(jnp.bfloat16),
                    preferred_element_type=jnp.float32) + b
        if i < NUM_LAYERS - 1:
            h = _elu(h)
    return h


if __name__ == "__main__":
    key = jax.random.PRNGKey(0)
    key, kx = jax.random.split(key)

    batch = 8
    x = jax.random.normal(kx, (batch, 1, 28, 28), jnp.float32)  # NCHW like PyTorch
    params = init_params(key)

    out = mlp_elu_forward(x, params)
    out = jax.block_until_ready(out)

    ref = reference_forward(x, params)
    assert out.shape == (batch, OUT_DIM), out.shape
    assert jnp.allclose(out, ref, atol=2e-2, rtol=2e-2), "mismatch vs reference"

    print("KERNEL_OK")
</pallas_src>

<mosaic_0001>
module attributes {stable_mosaic.version = 11 : i64} {
  func.func @mlp_elu_kernel(%arg0: i32, %arg1: memref<128x896xbf16, #tpu.memory_space<vmem>>, %arg2: memref<896x128xbf16, #tpu.memory_space<vmem>>, %arg3: memref<1x128xf32, #tpu.memory_space<vmem>>, %arg4: memref<7x128x128xbf16, #tpu.memory_space<vmem>>, %arg5: memref<7x1x128xf32, #tpu.memory_space<vmem>>, %arg6: memref<128x128xbf16, #tpu.memory_space<vmem>>, %arg7: memref<1x128xf32, #tpu.memory_space<vmem>>, %arg8: memref<128x128xbf16, #tpu.memory_space<vmem>>) attributes {dimension_semantics = [#tpu.dimension_semantics<parallel>], iteration_bounds = array<i64: 1>, scalar_prefetch = 0 : i64, scratch_operands = 0 : i64, tpu.core_type = #tpu.core_type<tc>, window_params = [{transform_indices = @transform_0, window_bounds = array<i64: 128, 896>}, {pipeline_mode = #tpu.pipeline_mode<synchronous>, transform_indices = @transform_1, window_bounds = array<i64: 896, 128>}, {pipeline_mode = #tpu.pipeline_mode<synchronous>, transform_indices = @transform_2, window_bounds = array<i64: 1, 128>}, {pipeline_mode = #tpu.pipeline_mode<synchronous>, transform_indices = @transform_3, window_bounds = array<i64: 7, 128, 128>}, {pipeline_mode = #tpu.pipeline_mode<synchronous>, transform_indices = @transform_4, window_bounds = array<i64: 7, 1, 128>}, {pipeline_mode = #tpu.pipeline_mode<synchronous>, transform_indices = @transform_5, window_bounds = array<i64: 128, 128>}, {pipeline_mode = #tpu.pipeline_mode<synchronous>, transform_indices = @transform_6, window_bounds = array<i64: 1, 128>}, {transform_indices = @transform_7, window_bounds = array<i64: 128, 128>}]} {
    %c0 = arith.constant 0 : index
    %c0_0 = arith.constant 0 : index
    %0 = vector.load %arg1[%c0, %c0_0] : memref<128x896xbf16, #tpu.memory_space<vmem>>, vector<128x896xbf16>
    %c0_1 = arith.constant 0 : index
    %c0_2 = arith.constant 0 : index
    %1 = vector.load %arg2[%c0_1, %c0_2] : memref<896x128xbf16, #tpu.memory_space<vmem>>, vector<896x128xbf16>
    %cst = arith.constant dense<0.000000e+00> : vector<128x128xf32>
    %2 = tpu.matmul %0, %1, %cst {dimension_numbers = #tpu.dot_dimension_numbers<[1], [0], [0], [1], [0, 0, 1, 1], [], []>} : vector<128x896xbf16>, vector<896x128xbf16>, vector<128x128xf32> -> vector<128x128xf32>
    %c0_3 = arith.constant 0 : index
    %c0_4 = arith.constant 0 : index
    %3 = vector.load %arg3[%c0_3, %c0_4] : memref<1x128xf32, #tpu.memory_space<vmem>>, vector<1x128xf32>
    %4 = vector.broadcast %3 : vector<1x128xf32> to vector<128x128xf32>
    %5 = arith.addf %2, %4 : vector<128x128xf32>
    %cst_5 = arith.constant 0.000000e+00 : f32
    %6 = vector.broadcast %cst_5 : f32 to vector<128x128xf32>
    %7 = arith.cmpf ogt, %5, %6 : vector<128x128xf32>
    %8 = math.exp %5 : vector<128x128xf32>
    %cst_6 = arith.constant 1.000000e+00 : f32
    %9 = vector.broadcast %cst_6 : f32 to vector<128x128xf32>
    %10 = arith.subf %8, %9 : vector<128x128xf32>
    %11 = arith.select %7, %5, %10 : vector<128x128xi1>, vector<128x128xf32>
    %12 = arith.truncf %11 : vector<128x128xf32> to vector<128x128xbf16>
    %c0_7 = arith.constant 0 : index
    %c0_8 = arith.constant 0 : index
    %c0_9 = arith.constant 0 : index
    %13 = vector.load %arg4[%c0_7, %c0_8, %c0_9] : memref<7x128x128xbf16, #tpu.memory_space<vmem>>, vector<1x128x128xbf16>
    %14 = vector.shape_cast %13 : vector<1x128x128xbf16> to vector<128x128xbf16>
    %cst_10 = arith.constant dense<0.000000e+00> : vector<128x128xf32>
    %15 = tpu.matmul %12, %14, %cst_10 {dimension_numbers = #tpu.dot_dimension_numbers<[1], [0], [0], [1], [0, 0, 1, 1], [], []>} : vector<128x128xbf16>, vector<128x128xbf16>, vector<128x128xf32> -> vector<128x128xf32>
    %c0_11 = arith.constant 0 : index
    %c0_12 = arith.constant 0 : index
    %c0_13 = arith.constant 0 : index
    %16 = vector.load %arg5[%c0_11, %c0_12, %c0_13] : memref<7x1x128xf32, #tpu.memory_space<vmem>>, vector<1x1x128xf32>
    %17 = vector.shape_cast %16 : vector<1x1x128xf32> to vector<1x128xf32>
    %18 = vector.broadcast %17 : vector<1x128xf32> to vector<128x128xf32>
    %19 = arith.addf %15, %18 : vector<128x128xf32>
    %cst_14 = arith.constant 0.000000e+00 : f32
    %20 = vector.broadcast %cst_14 : f32 to vector<128x128xf32>
    %21 = arith.cmpf ogt, %19, %20 : vector<128x128xf32>
    %22 = math.exp %19 : vector<128x128xf32>
    %cst_15 = arith.constant 1.000000e+00 : f32
    %23 = vector.broadcast %cst_15 : f32 to vector<128x128xf32>
    %24 = arith.subf %22, %23 : vector<128x128xf32>
    %25 = arith.select %21, %19, %24 : vector<128x128xi1>, vector<128x128xf32>
    %26 = arith.truncf %25 : vector<128x128xf32> to vector<128x128xbf16>
    %c1 = arith.constant 1 : index
    %c0_16 = arith.constant 0 : index
    %c0_17 = arith.constant 0 : index
    %27 = vector.load %arg4[%c1, %c0_16, %c0_17] : memref<7x128x128xbf16, #tpu.memory_space<vmem>>, vector<1x128x128xbf16>
    %28 = vector.shape_cast %27 : vector<1x128x128xbf16> to vector<128x128xbf16>
    %cst_18 = arith.constant dense<0.000000e+00> : vector<128x128xf32>
    %29 = tpu.matmul %26, %28, %cst_18 {dimension_numbers = #tpu.dot_dimension_numbers<[1], [0], [0], [1], [0, 0, 1, 1], [], []>} : vector<128x128xbf16>, vector<128x128xbf16>, vector<128x128xf32> -> vector<128x128xf32>
    %c1_19 = arith.constant 1 : index
    %c0_20 = arith.constant 0 : index
    %c0_21 = arith.constant 0 : index
    %30 = vector.load %arg5[%c1_19, %c0_20, %c0_21] : memref<7x1x128xf32, #tpu.memory_space<vmem>>, vector<1x1x128xf32>
    %31 = vector.shape_cast %30 : vector<1x1x128xf32> to vector<1x128xf32>
    %32 = vector.broadcast %31 : vector<1x128xf32> to vector<128x128xf32>
    %33 = arith.addf %29, %32 : vector<128x128xf32>
    %cst_22 = arith.constant 0.000000e+00 : f32
    %34 = vector.broadcast %cst_22 : f32 to vector<128x128xf32>
    %35 = arith.cmpf ogt, %33, %34 : vector<128x128xf32>
    %36 = math.exp %33 : vector<128x128xf32>
    %cst_23 = arith.constant 1.000000e+00 : f32
    %37 = vector.broadcast %cst_23 : f32 to vector<128x128xf32>
    %38 = arith.subf %36, %37 : vector<128x128xf32>
    %39 = arith.select %35, %33, %38 : vector<128x128xi1>, vector<128x128xf32>
    %40 = arith.truncf %39 : vector<128x128xf32> to vector<128x128xbf16>
    %c2 = arith.constant 2 : index
    %c0_24 = arith.constant 0 : index
    %c0_25 = arith.constant 0 : index
    %41 = vector.load %arg4[%c2, %c0_24, %c0_25] : memref<7x128x128xbf16, #tpu.memory_space<vmem>>, vector<1x128x128xbf16>
    %42 = vector.shape_cast %41 : vector<1x128x128xbf16> to vector<128x128xbf16>
    %cst_26 = arith.constant dense<0.000000e+00> : vector<128x128xf32>
    %43 = tpu.matmul %40, %42, %cst_26 {dimension_numbers = #tpu.dot_dimension_numbers<[1], [0], [0], [1], [0, 0, 1, 1], [], []>} : vector<128x128xbf16>, vector<128x128xbf16>, vector<128x128xf32> -> vector<128x128xf32>
    %c2_27 = arith.constant 2 : index
    %c0_28 = arith.constant 0 : index
    %c0_29 = arith.constant 0 : index
    %44 = vector.load %arg5[%c2_27, %c0_28, %c0_29] : memref<7x1x128xf32, #tpu.memory_space<vmem>>, vector<1x1x128xf32>
    %45 = vector.shape_cast %44 : vector<1x1x128xf32> to vector<1x128xf32>
    %46 = vector.broadcast %45 : vector<1x128xf32> to vector<128x128xf32>
    %47 = arith.addf %43, %46 : vector<128x128xf32>
    %cst_30 = arith.constant 0.000000e+00 : f32
    %48 = vector.broadcast %cst_30 : f32 to vector<128x128xf32>
    %49 = arith.cmpf ogt, %47, %48 : vector<128x128xf32>
    %50 = math.exp %47 : vector<128x128xf32>
    %cst_31 = arith.constant 1.000000e+00 : f32
    %51 = vector.broadcast %cst_31 : f32 to vector<128x128xf32>
    %52 = arith.subf %50, %51 : vector<128x128xf32>
    %53 = arith.select %49, %47, %52 : vector<128x128xi1>, vector<128x128xf32>
    %54 = arith.truncf %53 : vector<128x128xf32> to vector<128x128xbf16>
    %c3 = arith.constant 3 : index
    %c0_32 = arith.constant 0 : index
    %c0_33 = arith.constant 0 : index
    %55 = vector.load %arg4[%c3, %c0_32, %c0_33] : memref<7x128x128xbf16, #tpu.memory_space<vmem>>, vector<1x128x128xbf16>
    %56 = vector.shape_cast %55 : vector<1x128x128xbf16> to vector<128x128xbf16>
    %cst_34 = arith.constant dense<0.000000e+00> : vector<128x128xf32>
    %57 = tpu.matmul %54, %56, %cst_34 {dimension_numbers = #tpu.dot_dimension_numbers<[1], [0], [0], [1], [0, 0, 1, 1], [], []>} : vector<128x128xbf16>, vector<128x128xbf16>, vector<128x128xf32> -> vector<128x128xf32>
    %c3_35 = arith.constant 3 : index
    %c0_36 = arith.constant 0 : index
    %c0_37 = arith.constant 0 : index
    %58 = vector.load %arg5[%c3_35, %c0_36, %c0_37] : memref<7x1x128xf32, #tpu.memory_space<vmem>>, vector<1x1x128xf32>
    %59 = vector.shape_cast %58 : vector<1x1x128xf32> to vector<1x128xf32>
    %60 = vector.broadcast %59 : vector<1x128xf32> to vector<128x128xf32>
    %61 = arith.addf %57, %60 : vector<128x128xf32>
    %cst_38 = arith.constant 0.000000e+00 : f32
    %62 = vector.broadcast %cst_38 : f32 to vector<128x128xf32>
    %63 = arith.cmpf ogt, %61, %62 : vector<128x128xf32>
    %64 = math.exp %61 : vector<128x128xf32>
    %cst_39 = arith.constant 1.000000e+00 : f32
    %65 = vector.broadcast %cst_39 : f32 to vector<128x128xf32>
    %66 = arith.subf %64, %65 : vector<128x128xf32>
    %67 = arith.select %63, %61, %66 : vector<128x128xi1>, vector<128x128xf32>
    %68 = arith.truncf %67 : vector<128x128xf32> to vector<128x128xbf16>
    %c4 = arith.constant 4 : index
    %c0_40 = arith.constant 0 : index
    %c0_41 = arith.constant 0 : index
    %69 = vector.load %arg4[%c4, %c0_40, %c0_41] : memref<7x128x128xbf16, #tpu.memory_space<vmem>>, vector<1x128x128xbf16>
    %70 = vector.shape_cast %69 : vector<1x128x128xbf16> to vector<128x128xbf16>
    %cst_42 = arith.constant dense<0.000000e+00> : vector<128x128xf32>
    %71 = tpu.matmul %68, %70, %cst_42 {dimension_numbers = #tpu.dot_dimension_numbers<[1], [0], [0], [1], [0, 0, 1, 1], [], []>} : vector<128x128xbf16>, vector<128x128xbf16>, vector<128x128xf32> -> vector<128x128xf32>
    %c4_43 = arith.constant 4 : index
    %c0_44 = arith.constant 0 : index
    %c0_45 = arith.constant 0 : index
    %72 = vector.load %arg5[%c4_43, %c0_44, %c0_45] : memref<7x1x128xf32, #tpu.memory_space<vmem>>, vector<1x1x128xf32>
    %73 = vector.shape_cast %72 : vector<1x1x128xf32> to vector<1x128xf32>
    %74 = vector.broadcast %73 : vector<1x128xf32> to vector<128x128xf32>
    %75 = arith.addf %71, %74 : vector<128x128xf32>
    %cst_46 = arith.constant 0.000000e+00 : f32
    %76 = vector.broadcast %cst_46 : f32 to vector<128x128xf32>
    %77 = arith.cmpf ogt, %75, %76 : vector<128x128xf32>
    %78 = math.exp %75 : vector<128x128xf32>
    %cst_47 = arith.constant 1.000000e+00 : f32
    %79 = vector.broadcast %cst_47 : f32 to vector<128x128xf32>
    %80 = arith.subf %78, %79 : vector<128x128xf32>
    %81 = arith.select %77, %75, %80 : vector<128x128xi1>, vector<128x128xf32>
    %82 = arith.truncf %81 : vector<128x128xf32> to vector<128x128xbf16>
    %c5 = arith.constant 5 : index
    %c0_48 = arith.constant 0 : index
    %c0_49 = arith.constant 0 : index
    %83 = vector.load %arg4[%c5, %c0_48, %c0_49] : memref<7x128x128xbf16, #tpu.memory_space<vmem>>, vector<1x128x128xbf16>
    %84 = vector.shape_cast %83 : vector<1x128x128xbf16> to vector<128x128xbf16>
    %cst_50 = arith.constant dense<0.000000e+00> : vector<128x128xf32>
    %85 = tpu.matmul %82, %84, %cst_50 {dimension_numbers = #tpu.dot_dimension_numbers<[1], [0], [0], [1], [0, 0, 1, 1], [], []>} : vector<128x128xbf16>, vector<128x128xbf16>, vector<128x128xf32> -> vector<128x128xf32>
    %c5_51 = arith.constant 5 : index
    %c0_52 = arith.constant 0 : index
    %c0_53 = arith.constant 0 : index
    %86 = vector.load %arg5[%c5_51, %c0_52, %c0_53] : memref<7x1x128xf32, #tpu.memory_space<vmem>>, vector<1x1x128xf32>
    %87 = vector.shape_cast %86 : vector<1x1x128xf32> to vector<1x128xf32>
    %88 = vector.broadcast %87 : vector<1x128xf32> to vector<128x128xf32>
    %89 = arith.addf %85, %88 : vector<128x128xf32>
    %cst_54 = arith.constant 0.000000e+00 : f32
    %90 = vector.broadcast %cst_54 : f32 to vector<128x128xf32>
    %91 = arith.cmpf ogt, %89, %90 : vector<128x128xf32>
    %92 = math.exp %89 : vector<128x128xf32>
    %cst_55 = arith.constant 1.000000e+00 : f32
    %93 = vector.broadcast %cst_55 : f32 to vector<128x128xf32>
    %94 = arith.subf %92, %93 : vector<128x128xf32>
    %95 = arith.select %91, %89, %94 : vector<128x128xi1>, vector<128x128xf32>
    %96 = arith.truncf %95 : vector<128x128xf32> to vector<128x128xbf16>
    %c6 = arith.constant 6 : index
    %c0_56 = arith.constant 0 : index
    %c0_57 = arith.constant 0 : index
    %97 = vector.load %arg4[%c6, %c0_56, %c0_57] : memref<7x128x128xbf16, #tpu.memory_space<vmem>>, vector<1x128x128xbf16>
    %98 = vector.shape_cast %97 : vector<1x128x128xbf16> to vector<128x128xbf16>
    %cst_58 = arith.constant dense<0.000000e+00> : vector<128x128xf32>
    %99 = tpu.matmul %96, %98, %cst_58 {dimension_numbers = #tpu.dot_dimension_numbers<[1], [0], [0], [1], [0, 0, 1, 1], [], []>} : vector<128x128xbf16>, vector<128x128xbf16>, vector<128x128xf32> -> vector<128x128xf32>
    %c6_59 = arith.constant 6 : index
    %c0_60 = arith.constant 0 : index
    %c0_61 = arith.constant 0 : index
    %100 = vector.load %arg5[%c6_59, %c0_60, %c0_61] : memref<7x1x128xf32, #tpu.memory_space<vmem>>, vector<1x1x128xf32>
    %101 = vector.shape_cast %100 : vector<1x1x128xf32> to vector<1x128xf32>
    %102 = vector.broadcast %101 : vector<1x128xf32> to vector<128x128xf32>
    %103 = arith.addf %99, %102 : vector<128x128xf32>
    %cst_62 = arith.constant 0.000000e+00 : f32
    %104 = vector.broadcast %cst_62 : f32 to vector<128x128xf32>
    %105 = arith.cmpf ogt, %103, %104 : vector<128x128xf32>
    %106 = math.exp %103 : vector<128x128xf32>
    %cst_63 = arith.constant 1.000000e+00 : f32
    %107 = vector.broadcast %cst_63 : f32 to vector<128x128xf32>
    %108 = arith.subf %106, %107 : vector<128x128xf32>
    %109 = arith.select %105, %103, %108 : vector<128x128xi1>, vector<128x128xf32>
    %110 = arith.truncf %109 : vector<128x128xf32> to vector<128x128xbf16>
    %c0_64 = arith.constant 0 : index
    %c0_65 = arith.constant 0 : index
    %111 = vector.load %arg6[%c0_64, %c0_65] : memref<128x128xbf16, #tpu.memory_space<vmem>>, vector<128x128xbf16>
    %cst_66 = arith.constant dense<0.000000e+00> : vector<128x128xf32>
    %112 = tpu.matmul %110, %111, %cst_66 {dimension_numbers = #tpu.dot_dimension_numbers<[1], [0], [0], [1], [0, 0, 1, 1], [], []>} : vector<128x128xbf16>, vector<128x128xbf16>, vector<128x128xf32> -> vector<128x128xf32>
    %c0_67 = arith.constant 0 : index
    %c0_68 = arith.constant 0 : index
    %113 = vector.load %arg7[%c0_67, %c0_68] : memref<1x128xf32, #tpu.memory_space<vmem>>, vector<1x128xf32>
    %114 = vector.broadcast %113 : vector<1x128xf32> to vector<128x128xf32>
    %115 = arith.addf %112, %114 : vector<128x128xf32>
    %116 = arith.truncf %115 : vector<128x128xf32> to vector<128x128xbf16>
    %c0_69 = arith.constant 0 : index
    %c0_70 = arith.constant 0 : index
    %117 = vector.load %arg8[%c0_69, %c0_70] : memref<128x128xbf16, #tpu.memory_space<vmem>>, vector<128x128xbf16>
    tpu.vector_store %arg8[%c0_69, %c0_70], %116 {strides = array<i32>} : memref<128x128xbf16, #tpu.memory_space<vmem>>, vector<128x128xbf16>,
    return
  }
  func.func @transform_0(%arg0: i32) -> (i32, i32) {
    %c0_i32 = arith.constant 0 : i32
    %c0_i32_0 = arith.constant 0 : i32
    return %arg0, %c0_i32 : i32, i32
  }
  func.func @transform_1(%arg0: i32) -> (i32, i32) {
    %c0_i32 = arith.constant 0 : i32
    %c0_i32_0 = arith.constant 0 : i32
    %c0_i32_1 = arith.constant 0 : i32
    return %c0_i32, %c0_i32_0 : i32, i32
  }
  func.func @transform_2(%arg0: i32) -> (i32, i32) {
    %c0_i32 = arith.constant 0 : i32
    %c0_i32_0 = arith.constant 0 : i32
    %c0_i32_1 = arith.constant 0 : i32
    return %c0_i32, %c0_i32_0 : i32, i32
  }
  func.func @transform_3(%arg0: i32) -> (i32, i32, i32) {
    %c0_i32 = arith.constant 0 : i32
    %c0_i32_0 = arith.constant 0 : i32
    %c0_i32_1 = arith.constant 0 : i32
    %c0_i32_2 = arith.constant 0 : i32
    return %c0_i32, %c0_i32_0, %c0_i32_1 : i32, i32, i32
  }
  func.func @transform_4(%arg0: i32) -> (i32, i32, i32) {
    %c0_i32 = arith.constant 0 : i32
    %c0_i32_0 = arith.constant 0 : i32
    %c0_i32_1 = arith.constant 0 : i32
    %c0_i32_2 = arith.constant 0 : i32
    return %c0_i32, %c0_i32_0, %c0_i32_1 : i32, i32, i32
  }
  func.func @transform_5(%arg0: i32) -> (i32, i32) {
    %c0_i32 = arith.constant 0 : i32
    %c0_i32_0 = arith.constant 0 : i32
    %c0_i32_1 = arith.constant 0 : i32
    return %c0_i32, %c0_i32_0 : i32, i32
  }
  func.func @transform_6(%arg0: i32) -> (i32, i32) {
    %c0_i32 = arith.constant 0 : i32
    %c0_i32_0 = arith.constant 0 : i32
    %c0_i32_1 = arith.constant 0 : i32
    return %c0_i32, %c0_i32_0 : i32, i32
  }
  func.func @transform_7(%arg0: i32) -> (i32, i32) {
    %c0_i32 = arith.constant 0 : i32
    %c0_i32_0 = arith.constant 0 : i32
    return %arg0, %c0_i32 : i32, i32
  }
}

</mosaic_0001>

<llo_original>
// kernel: mlp_elu_forward.1
$region0: #{mlp_elu_forward.1}
  #allocation0 [shape = 'u32[]', space=smem, size = 0x4, offset = 0x4, fixed_abs, tag = 'smem constant byte address 0x4 - core index']
  #allocation1 [shape = 'u32[144,128]{1,0:T(1,128)}', space=vmem, size = 0x12000, scoped, tag = 'internal scratch']
  %s0 = inlined_call_operand.vmem [shape: bf16[128,896], index: 0, kind: input, shape index: {}]
  %s1 = inlined_call_operand.vmem [shape: bf16[896,128], index: 1, kind: input, shape index: {}]
  %s2 = inlined_call_operand.vmem [shape: f32[1,128], index: 2, kind: input, shape index: {}]
  %s3 = inlined_call_operand.vmem [shape: bf16[7,128,128], index: 3, kind: input, shape index: {}]
  %s4 = inlined_call_operand.vmem [shape: f32[7,1,128], index: 4, kind: input, shape index: {}]
  %s5 = inlined_call_operand.vmem [shape: bf16[128,128], index: 5, kind: input, shape index: {}]
  %s6 = inlined_call_operand.vmem [shape: f32[1,128], index: 6, kind: input, shape index: {}]
  %s7 = inlined_call_operand.vmem [shape: bf16[128,128], index: 7, kind: output, shape index: {}]
  %s8 = sld [smem:[#allocation0]]
  $region38: #{mlp_elu_forward.1} parent=0
    _
  %s10 = ssub.s32 1, %s8
  %s11 = scalar_select 0, %s10, %s8
  // Predicated region
  $region2: #{mlp_elu_forward.1} parent=0 // pred_check
    _
  $region3: #{mlp_elu_forward.1} parent=0 // pred_check_branch
    %13 = sbr.rel (0) target = $region5
  $region4: #{mlp_elu_forward.1} parent=0 // pred_region
    _
  $region5: #{mlp_elu_forward.1} parent=0 // pred_fallthru
    _
  // Predicated region
  $region6: #{mlp_elu_forward.1} parent=0 // pred_check
    _
  $region7: #{mlp_elu_forward.1} parent=0 // pred_check_branch
    %15 = sbr.rel (0) target = $region9
  $region8: #{mlp_elu_forward.1} parent=0 // pred_region
    _
  $region9: #{mlp_elu_forward.1} parent=0 // pred_fallthru
    _
  // Predicated region
  $region10: #{mlp_elu_forward.1} parent=0 // pred_check
    _
  $region11: #{mlp_elu_forward.1} parent=0 // pred_check_branch
    %17 = sbr.rel (0) target = $region13
  $region12: #{mlp_elu_forward.1} parent=0 // pred_region
    _
  $region13: #{mlp_elu_forward.1} parent=0 // pred_fallthru
    _
  // Predicated region
  $region14: #{mlp_elu_forward.1} parent=0 // pred_check
    _
  $region15: #{mlp_elu_forward.1} parent=0 // pred_check_branch
    %19 = sbr.rel (0) target = $region17
  $region16: #{mlp_elu_forward.1} parent=0 // pred_region
    _
  $region17: #{mlp_elu_forward.1} parent=0 // pred_fallthru
    _
  // Predicated region
  $region18: #{mlp_elu_forward.1} parent=0 // pred_check
    _
  $region19: #{mlp_elu_forward.1} parent=0 // pred_check_branch
    %21 = sbr.rel (0) target = $region21
  $region20: #{mlp_elu_forward.1} parent=0 // pred_region
    _
  $region21: #{mlp_elu_forward.1} parent=0 // pred_fallthru
    _
  // Predicated region
  $region22: #{mlp_elu_forward.1} parent=0 // pred_check
    _
  $region23: #{mlp_elu_forward.1} parent=0 // pred_check_branch
    %23 = sbr.rel (0) target = $region25
  $region24: #{mlp_elu_forward.1} parent=0 // pred_region
    _
  $region25: #{mlp_elu_forward.1} parent=0 // pred_fallthru
    _
  // Predicated region
  $region26: #{mlp_elu_forward.1} parent=0 // pred_check
    _
  $region27: #{mlp_elu_forward.1} parent=0 // pred_check_branch
    %25 = sbr.rel (0) target = $region29
  $region28: #{mlp_elu_forward.1} parent=0 // pred_region
    _
  $region29: #{mlp_elu_forward.1} parent=0 // pred_fallthru
    _
  %v27 = vld [vmem:[%s0] sm:$0xff]
  %v28 = vld [vmem:[%s0 + $0x8] sm:$0xff]
  %v29 = vld [vmem:[%s0 + $0x10] sm:$0xff]
  %v30 = vld [vmem:[%s0 + $0x18] sm:$0xf]
  %v31 = vld [vmem:[%s0 + $0x1c] sm:$0xff]
  %v32 = vld [vmem:[%s0 + $0x24] sm:$0xff]
  %v33 = vld [vmem:[%s0 + $0x2c] sm:$0xff]
  %v34 = vld [vmem:[%s0 + $0x34] sm:$0xf]
  %v35 = vld [vmem:[%s0 + $0x38] sm:$0xff]
  %v36 = vld [vmem:[%s0 + $0x40] sm:$0xff]
  %v37 = vld [vmem:[%s0 + $0x48] sm:$0xff]
  %v38 = vld [vmem:[%s0 + $0x50] sm:$0xf]
  %v39 = vld [vmem:[%s0 + $0x54] sm:$0xff]
  %v40 = vld [vmem:[%s0 + $0x5c] sm:$0xff]
  %v41 = vld [vmem:[%s0 + $0x64] sm:$0xff]
  %v42 = vld [vmem:[%s0 + $0x6c] sm:$0xf]
  %v43 = vld [vmem:[%s0 + $0x70] sm:$0xff]
  %v44 = vld [vmem:[%s0 + $0x78] sm:$0xff]
  %v45 = vld [vmem:[%s0 + $0x80] sm:$0xff]
  %v46 = vld [vmem:[%s0 + $0x88] sm:$0xf]
  %v47 = vld [vmem:[%s0 + $0x8c] sm:$0xff]
  %v48 = vld [vmem:[%s0 + $0x94] sm:$0xff]
  %v49 = vld [vmem:[%s0 + $0x9c] sm:$0xff]
  %v50 = vld [vmem:[%s0 + $0xa4] sm:$0xf]
  %v51 = vld [vmem:[%s0 + $0xa8] sm:$0xff]
  %v52 = vld [vmem:[%s0 + $0xb0] sm:$0xff]
  %v53 = vld [vmem:[%s0 + $0xb8] sm:$0xff]
  %v54 = vld [vmem:[%s0 + $0xc0] sm:$0xf]
  %v55 = vld [vmem:[%s0 + $0xc4] sm:$0xff]
  %v56 = vld [vmem:[%s0 + $0xcc] sm:$0xff]
  %v57 = vld [vmem:[%s0 + $0xd4] sm:$0xff]
  %v58 = vld [vmem:[%s0 + $0xdc] sm:$0xf]
  %v59 = vld [vmem:[%s0 + $0xe0] sm:$0xff]
  %v60 = vld [vmem:[%s0 + $0xe8] sm:$0xff]
  %v61 = vld [vmem:[%s0 + $0xf0] sm:$0xff]
  %v62 = vld [vmem:[%s0 + $0xf8] sm:$0xf]
  %v63 = vld [vmem:[%s0 + $0xfc] sm:$0xff]
  %v64 = vld [vmem:[%s0 + $0x104] sm:$0xff]
  %v65 = vld [vmem:[%s0 + $0x10c] sm:$0xff]
  %v66 = vld [vmem:[%s0 + $0x114] sm:$0xf]
  %v67 = vld [vmem:[%s0 + $0x118] sm:$0xff]
  %v68 = vld [vmem:[%s0 + $0x120] sm:$0xff]
  %v69 = vld [vmem:[%s0 + $0x128] sm:$0xff]
  %v70 = vld [vmem:[%s0 + $0x130] sm:$0xf]
  %v71 = vld [vmem:[%s0 + $0x134] sm:$0xff]
  %v72 = vld [vmem:[%s0 + $0x13c] sm:$0xff]
  %v73 = vld [vmem:[%s0 + $0x144] sm:$0xff]
  %v74 = vld [vmem:[%s0 + $0x14c] sm:$0xf]
  %v75 = vld [vmem:[%s0 + $0x150] sm:$0xff]
  %v76 = vld [vmem:[%s0 + $0x158] sm:$0xff]
  %v77 = vld [vmem:[%s0 + $0x160] sm:$0xff]
  %v78 = vld [vmem:[%s0 + $0x168] sm:$0xf]
  %v79 = vld [vmem:[%s0 + $0x16c] sm:$0xff]
  %v80 = vld [vmem:[%s0 + $0x174] sm:$0xff]
  %v81 = vld [vmem:[%s0 + $0x17c] sm:$0xff]
  %v82 = vld [vmem:[%s0 + $0x184] sm:$0xf]
  %v83 = vld [vmem:[%s0 + $0x188] sm:$0xff]
  %v84 = vld [vmem:[%s0 + $0x190] sm:$0xff]
  %v85 = vld [vmem:[%s0 + $0x198] sm:$0xff]
  %v86 = vld [vmem:[%s0 + $0x1a0] sm:$0xf]
  %v87 = vld [vmem:[%s0 + $0x1a4] sm:$0xff]
  %v88 = vld [vmem:[%s0 + $0x1ac] sm:$0xff]
  %v89 = vld [vmem:[%s0 + $0x1b4] sm:$0xff]
  %v90 = vld [vmem:[%s0 + $0x1bc] sm:$0xf]
  %v91 = vld [vmem:[%s1] sm:$0xf]
  %v92 = vld [vmem:[%s1 + $0x4] sm:$0xf]
  %v93 = vld [vmem:[%s1 + $0x8] sm:$0xf]
  %v94 = vld [vmem:[%s1 + $0xc] sm:$0xf]
  %v95 = vld [vmem:[%s1 + $0x10] sm:$0xf]
  %v96 = vld [vmem:[%s1 + $0x14] sm:$0xf]
  %v97 = vld [vmem:[%s1 + $0x18] sm:$0xf]
  %v98 = vld [vmem:[%s1 + $0x1c] sm:$0xf]
  %v99 = vld [vmem:[%s1 + $0x20] sm:$0xf]
  %v100 = vld [vmem:[%s1 + $0x24] sm:$0xf]
  %v101 = vld [vmem:[%s1 + $0x28] sm:$0xf]
  %v102 = vld [vmem:[%s1 + $0x2c] sm:$0xf]
  %v103 = vld [vmem:[%s1 + $0x30] sm:$0xf]
  %v104 = vld [vmem:[%s1 + $0x34] sm:$0xf]
  %v105 = vld [vmem:[%s1 + $0x38] sm:$0xf]
  %v106 = vld [vmem:[%s1 + $0x3c] sm:$0xf]
  %v107 = vld [vmem:[%s1 + $0x40] sm:$0xf]
  %v108 = vld [vmem:[%s1 + $0x44] sm:$0xf]
  %v109 = vld [vmem:[%s1 + $0x48] sm:$0xf]
  %v110 = vld [vmem:[%s1 + $0x4c] sm:$0xf]
  %v111 = vld [vmem:[%s1 + $0x50] sm:$0xf]
  %v112 = vld [vmem:[%s1 + $0x54] sm:$0xf]
  %v113 = vld [vmem:[%s1 + $0x58] sm:$0xf]
  %v114 = vld [vmem:[%s1 + $0x5c] sm:$0xf]
  %v115 = vld [vmem:[%s1 + $0x60] sm:$0xf]
  %v116 = vld [vmem:[%s1 + $0x64] sm:$0xf]
  %v117 = vld [vmem:[%s1 + $0x68] sm:$0xf]
  %v118 = vld [vmem:[%s1 + $0x6c] sm:$0xf]
  %v119 = vld [vmem:[%s1 + $0x70] sm:$0xf]
  %v120 = vld [vmem:[%s1 + $0x74] sm:$0xf]
  %v121 = vld [vmem:[%s1 + $0x78] sm:$0xf]
  %v122 = vld [vmem:[%s1 + $0x7c] sm:$0xf]
  %v123 = vld [vmem:[%s1 + $0x80] sm:$0xf]
  %v124 = vld [vmem:[%s1 + $0x84] sm:$0xf]
  %v125 = vld [vmem:[%s1 + $0x88] sm:$0xf]
  %v126 = vld [vmem:[%s1 + $0x8c] sm:$0xf]
  %v127 = vld [vmem:[%s1 + $0x90] sm:$0xf]
  %v128 = vld [vmem:[%s1 + $0x94] sm:$0xf]
  %v129 = vld [vmem:[%s1 + $0x98] sm:$0xf]
  %v130 = vld [vmem:[%s1 + $0x9c] sm:$0xf]
  %v131 = vld [vmem:[%s1 + $0xa0] sm:$0xf]
  %v132 = vld [vmem:[%s1 + $0xa4] sm:$0xf]
  %v133 = vld [vmem:[%s1 + $0xa8] sm:$0xf]
  %v134 = vld [vmem:[%s1 + $0xac] sm:$0xf]
  %v135 = vld [vmem:[%s1 + $0xb0] sm:$0xf]
  %v136 = vld [vmem:[%s1 + $0xb4] sm:$0xf]
  %v137 = vld [vmem:[%s1 + $0xb8] sm:$0xf]
  %v138 = vld [vmem:[%s1 + $0xbc] sm:$0xf]
  %v139 = vld [vmem:[%s1 + $0xc0] sm:$0xf]
  %v140 = vld [vmem:[%s1 + $0xc4] sm:$0xf]
  %v141 = vld [vmem:[%s1 + $0xc8] sm:$0xf]
  %v142 = vld [vmem:[%s1 + $0xcc] sm:$0xf]
  %v143 = vld [vmem:[%s1 + $0xd0] sm:$0xf]
  %v144 = vld [vmem:[%s1 + $0xd4] sm:$0xf]
  %v145 = vld [vmem:[%s1 + $0xd8] sm:$0xf]
  %v146 = vld [vmem:[%s1 + $0xdc] sm:$0xf]
  %v147 = vld [vmem:[%s1 + $0xe0] sm:$0xf]
  %v148 = vld [vmem:[%s1 + $0xe4] sm:$0xf]
  %v149 = vld [vmem:[%s1 + $0xe8] sm:$0xf]
  %v150 = vld [vmem:[%s1 + $0xec] sm:$0xf]
  %v151 = vld [vmem:[%s1 + $0xf0] sm:$0xf]
  %v152 = vld [vmem:[%s1 + $0xf4] sm:$0xf]
  %v153 = vld [vmem:[%s1 + $0xf8] sm:$0xf]
  %v154 = vld [vmem:[%s1 + $0xfc] sm:$0xf]
  %v155 = vld [vmem:[%s1 + $0x100] sm:$0xf]
  %v156 = vld [vmem:[%s1 + $0x104] sm:$0xf]
  %v157 = vld [vmem:[%s1 + $0x108] sm:$0xf]
  %v158 = vld [vmem:[%s1 + $0x10c] sm:$0xf]
  %v159 = vld [vmem:[%s1 + $0x110] sm:$0xf]
  %v160 = vld [vmem:[%s1 + $0x114] sm:$0xf]
  %v161 = vld [vmem:[%s1 + $0x118] sm:$0xf]
  %v162 = vld [vmem:[%s1 + $0x11c] sm:$0xf]
  %v163 = vld [vmem:[%s1 + $0x120] sm:$0xf]
  %v164 = vld [vmem:[%s1 + $0x124] sm:$0xf]
  %v165 = vld [vmem:[%s1 + $0x128] sm:$0xf]
  %v166 = vld [vmem:[%s1 + $0x12c] sm:$0xf]
  %v167 = vld [vmem:[%s1 + $0x130] sm:$0xf]
  %v168 = vld [vmem:[%s1 + $0x134] sm:$0xf]
  %v169 = vld [vmem:[%s1 + $0x138] sm:$0xf]
  %v170 = vld [vmem:[%s1 + $0x13c] sm:$0xf]
  %v171 = vld [vmem:[%s1 + $0x140] sm:$0xf]
  %v172 = vld [vmem:[%s1 + $0x144] sm:$0xf]
  %v173 = vld [vmem:[%s1 + $0x148] sm:$0xf]
  %v174 = vld [vmem:[%s1 + $0x14c] sm:$0xf]
  %v175 = vld [vmem:[%s1 + $0x150] sm:$0xf]
  %v176 = vld [vmem:[%s1 + $0x154] sm:$0xf]
  %v177 = vld [vmem:[%s1 + $0x158] sm:$0xf]
  %v178 = vld [vmem:[%s1 + $0x15c] sm:$0xf]
  %v179 = vld [vmem:[%s1 + $0x160] sm:$0xf]
  %v180 = vld [vmem:[%s1 + $0x164] sm:$0xf]
  %v181 = vld [vmem:[%s1 + $0x168] sm:$0xf]
  %v182 = vld [vmem:[%s1 + $0x16c] sm:$0xf]
  %v183 = vld [vmem:[%s1 + $0x170] sm:$0xf]
  %v184 = vld [vmem:[%s1 + $0x174] sm:$0xf]
  %v185 = vld [vmem:[%s1 + $0x178] sm:$0xf]
  %v186 = vld [vmem:[%s1 + $0x17c] sm:$0xf]
  %v187 = vld [vmem:[%s1 + $0x180] sm:$0xf]
  %v188 = vld [vmem:[%s1 + $0x184] sm:$0xf]
  %v189 = vld [vmem:[%s1 + $0x188] sm:$0xf]
  %v190 = vld [vmem:[%s1 + $0x18c] sm:$0xf]
  %v191 = vld [vmem:[%s1 + $0x190] sm:$0xf]
  %v192 = vld [vmem:[%s1 + $0x194] sm:$0xf]
  %v193 = vld [vmem:[%s1 + $0x198] sm:$0xf]
  %v194 = vld [vmem:[%s1 + $0x19c] sm:$0xf]
  %v195 = vld [vmem:[%s1 + $0x1a0] sm:$0xf]
  %v196 = vld [vmem:[%s1 + $0x1a4] sm:$0xf]
  %v197 = vld [vmem:[%s1 + $0x1a8] sm:$0xf]
  %v198 = vld [vmem:[%s1 + $0x1ac] sm:$0xf]
  %v199 = vld [vmem:[%s1 + $0x1b0] sm:$0xf]
  %v200 = vld [vmem:[%s1 + $0x1b4] sm:$0xf]
  %v201 = vld [vmem:[%s1 + $0x1b8] sm:$0xf]
  %v202 = vld [vmem:[%s1 + $0x1bc] sm:$0xf]
  %v203 = vld [vmem:[%s2] sm:$0x1]
  %v205 = vlaneseq
  %v206 = vshrl.u32 %v205, 7
  %v207 = vsub.s32 0, %v206
  %v208 = vrot.slane %v203, %v207
  %v274 = vunpack.c.l.b16 %v27
  %v275 = vunpack.c.h.b16 %v27
  %v276 = vunpack.c.l.b16 %v28
  %v277 = vunpack.c.h.b16 %v28
  %v278 = vunpack.c.l.b16 %v29
  %v279 = vunpack.c.h.b16 %v29
  %v280 = vunpack.c.l.b16 %v30
  %v281 = vunpack.c.l.b16 %v31
  %v282 = vunpack.c.h.b16 %v31
  %v283 = vunpack.c.l.b16 %v32
  %v284 = vunpack.c.h.b16 %v32
  %v285 = vunpack.c.l.b16 %v33
  %v286 = vunpack.c.h.b16 %v33
  %v287 = vunpack.c.l.b16 %v34
  %v288 = vunpack.c.l.b16 %v35
  %v289 = vunpack.c.h.b16 %v35
  %v290 = vunpack.c.l.b16 %v36
  %v291 = vunpack.c.h.b16 %v36
  %v292 = vunpack.c.l.b16 %v37
  %v293 = vunpack.c.h.b16 %v37
  %v294 = vunpack.c.l.b16 %v38
  %v295 = vunpack.c.l.b16 %v39
  %v296 = vunpack.c.h.b16 %v39
  %v297 = vunpack.c.l.b16 %v40
  %v298 = vunpack.c.h.b16 %v40
  %v299 = vunpack.c.l.b16 %v41
  %v300 = vunpack.c.h.b16 %v41
  %v301 = vunpack.c.l.b16 %v42
  %v302 = vunpack.c.l.b16 %v43
  %v303 = vunpack.c.h.b16 %v43
  %v304 = vunpack.c.l.b16 %v44
  %v305 = vunpack.c.h.b16 %v44
  %v306 = vunpack.c.l.b16 %v45
  %v307 = vunpack.c.h.b16 %v45
  %v308 = vunpack.c.l.b16 %v46
  %v309 = vunpack.c.l.b16 %v47
  %v310 = vunpack.c.h.b16 %v47
  %v311 = vunpack.c.l.b16 %v48
  %v312 = vunpack.c.h.b16 %v48
  %v313 = vunpack.c.l.b16 %v49
  %v314 = vunpack.c.h.b16 %v49
  %v315 = vunpack.c.l.b16 %v50
  %v316 = vunpack.c.l.b16 %v51
  %v317 = vunpack.c.h.b16 %v51
  %v318 = vunpack.c.l.b16 %v52
  %v319 = vunpack.c.h.b16 %v52
  %v320 = vunpack.c.l.b16 %v53
  %v321 = vunpack.c.h.b16 %v53
  %v322 = vunpack.c.l.b16 %v54
  %v323 = vunpack.c.l.b16 %v55
  %v324 = vunpack.c.h.b16 %v55
  %v325 = vunpack.c.l.b16 %v56
  %v326 = vunpack.c.h.b16 %v56
  %v327 = vunpack.c.l.b16 %v57
  %v328 = vunpack.c.h.b16 %v57
  %v329 = vunpack.c.l.b16 %v58
  %v330 = vunpack.c.l.b16 %v59
  %v331 = vunpack.c.h.b16 %v59
  %v332 = vunpack.c.l.b16 %v60
  %v333 = vunpack.c.h.b16 %v60
  %v334 = vunpack.c.l.b16 %v61
  %v335 = vunpack.c.h.b16 %v61
  %v336 = vunpack.c.l.b16 %v62
  %v337 = vunpack.c.l.b16 %v63
  %v338 = vunpack.c.h.b16 %v63
  %v339 = vunpack.c.l.b16 %v64
  %v340 = vunpack.c.h.b16 %v64
  %v341 = vunpack.c.l.b16 %v65
  %v342 = vunpack.c.h.b16 %v65
  %v343 = vunpack.c.l.b16 %v66
  %v344 = vunpack.c.l.b16 %v67
  %v345 = vunpack.c.h.b16 %v67
  %v346 = vunpack.c.l.b16 %v68
  %v347 = vunpack.c.h.b16 %v68
  %v348 = vunpack.c.l.b16 %v69
  %v349 = vunpack.c.h.b16 %v69
  %v350 = vunpack.c.l.b16 %v70
  %v351 = vunpack.c.l.b16 %v71
  %v352 = vunpack.c.h.b16 %v71
  %v353 = vunpack.c.l.b16 %v72
  %v354 = vunpack.c.h.b16 %v72
  %v355 = vunpack.c.l.b16 %v73
  %v356 = vunpack.c.h.b16 %v73
  %v357 = vunpack.c.l.b16 %v74
  %v358 = vunpack.c.l.b16 %v75
  %v359 = vunpack.c.h.b16 %v75
  %v360 = vunpack.c.l.b16 %v76
  %v361 = vunpack.c.h.b16 %v76
  %v362 = vunpack.c.l.b16 %v77
  %v363 = vunpack.c.h.b16 %v77
  %v364 = vunpack.c.l.b16 %v78
  %v365 = vunpack.c.l.b16 %v79
  %v366 = vunpack.c.h.b16 %v79
  %v367 = vunpack.c.l.b16 %v80
  %v368 = vunpack.c.h.b16 %v80
  %v369 = vunpack.c.l.b16 %v81
  %v370 = vunpack.c.h.b16 %v81
  %v371 = vunpack.c.l.b16 %v82
  %v372 = vunpack.c.l.b16 %v83
  %v373 = vunpack.c.h.b16 %v83
  %v374 = vunpack.c.l.b16 %v84
  %v375 = vunpack.c.h.b16 %v84
  %v376 = vunpack.c.l.b16 %v85
  %v377 = vunpack.c.h.b16 %v85
  %v378 = vunpack.c.l.b16 %v86
  %v379 = vunpack.c.l.b16 %v87
  %v380 = vunpack.c.h.b16 %v87
  %v381 = vunpack.c.l.b16 %v88
  %v382 = vunpack.c.h.b16 %v88
  %v383 = vunpack.c.l.b16 %v89
  %v384 = vunpack.c.h.b16 %v89
  %v385 = vunpack.c.l.b16 %v90
  %v386 = vpack.c.b16 %v281, %v274
  %v387 = vpack.c.b16 %v282, %v275
  %v388 = vpack.c.b16 %v283, %v276
  %v389 = vpack.c.b16 %v284, %v277
  %v390 = vpack.c.b16 %v285, %v278
  %v391 = vpack.c.b16 %v286, %v279
  %v392 = vpack.c.b16 %v287, %v280
  %v393 = vpack.c.b16 %v295, %v288
  %v394 = vpack.c.b16 %v296, %v289
  %v395 = vpack.c.b16 %v297, %v290
  %v396 = vpack.c.b16 %v298, %v291
  %v397 = vpack.c.b16 %v299, %v292
  %v398 = vpack.c.b16 %v300, %v293
  %v399 = vpack.c.b16 %v301, %v294
  %v400 = vpack.c.b16 %v309, %v302
  %v401 = vpack.c.b16 %v310, %v303
  %v402 = vpack.c.b16 %v311, %v304
  %v403 = vpack.c.b16 %v312, %v305
  %v404 = vpack.c.b16 %v313, %v306
  %v405 = vpack.c.b16 %v314, %v307
  %v406 = vpack.c.b16 %v315, %v308
  %v407 = vpack.c.b16 %v323, %v316
  %v408 = vpack.c.b16 %v324, %v317
  %v409 = vpack.c.b16 %v325, %v318
  %v410 = vpack.c.b16 %v326, %v319
  %v411 = vpack.c.b16 %v327, %v320
  %v412 = vpack.c.b16 %v328, %v321
  %v413 = vpack.c.b16 %v329, %v322
  %v414 = vpack.c.b16 %v337, %v330
  %v415 = vpack.c.b16 %v338, %v331
  %v416 = vpack.c.b16 %v339, %v332
  %v417 = vpack.c.b16 %v340, %v333
  %v418 = vpack.c.b16 %v341, %v334
  %v419 = vpack.c.b16 %v342, %v335
  %v420 = vpack.c.b16 %v343, %v336
  %v421 = vpack.c.b16 %v351, %v344
  %v422 = vpack.c.b16 %v352, %v345
  %v423 = vpack.c.b16 %v353, %v346
  %v424 = vpack.c.b16 %v354, %v347
  %v425 = vpack.c.b16 %v355, %v348
  %v426 = vpack.c.b16 %v356, %v349
  %v427 = vpack.c.b16 %v357, %v350
  %v428 = vpack.c.b16 %v365, %v358
  %v429 = vpack.c.b16 %v366, %v359
  %v430 = vpack.c.b16 %v367, %v360
  %v431 = vpack.c.b16 %v368, %v361
  %v432 = vpack.c.b16 %v369, %v362
  %v433 = vpack.c.b16 %v370, %v363
  %v434 = vpack.c.b16 %v371, %v364
  %v435 = vpack.c.b16 %v379, %v372
  %v436 = vpack.c.b16 %v380, %v373
  %v437 = vpack.c.b16 %v381, %v374
  %v438 = vpack.c.b16 %v382, %v375
  %v439 = vpack.c.b16 %v383, %v376
  %v440 = vpack.c.b16 %v384, %v377
  %v441 = vpack.c.b16 %v385, %v378
  %v610 = vunpack.c.l.b16 %v91
  %v611 = vunpack.c.l.b16 %v92
  %v612 = vunpack.c.l.b16 %v93
  %v613 = vunpack.c.l.b16 %v94
  %v614 = vunpack.c.l.b16 %v95
  %v615 = vunpack.c.l.b16 %v96
  %v616 = vunpack.c.l.b16 %v97
  %v617 = vunpack.c.l.b16 %v98
  %v618 = vunpack.c.l.b16 %v99
  %v619 = vunpack.c.l.b16 %v100
  %v620 = vunpack.c.l.b16 %v101
  %v621 = vunpack.c.l.b16 %v102
  %v622 = vunpack.c.l.b16 %v103
  %v623 = vunpack.c.l.b16 %v104
  %v624 = vunpack.c.l.b16 %v105
  %v625 = vunpack.c.l.b16 %v106
  %v626 = vunpack.c.l.b16 %v107
  %v627 = vunpack.c.l.b16 %v108
  %v628 = vunpack.c.l.b16 %v109
  %v629 = vunpack.c.l.b16 %v110
  %v630 = vunpack.c.l.b16 %v111
  %v631 = vunpack.c.l.b16 %v112
  %v632 = vunpack.c.l.b16 %v113
  %v633 = vunpack.c.l.b16 %v114
  %v634 = vunpack.c.l.b16 %v115
  %v635 = vunpack.c.l.b16 %v116
  %v636 = vunpack.c.l.b16 %v117
  %v637 = vunpack.c.l.b16 %v118
  %v638 = vunpack.c.l.b16 %v119
  %v639 = vunpack.c.l.b16 %v120
  %v640 = vunpack.c.l.b16 %v121
  %v641 = vunpack.c.l.b16 %v122
  %v642 = vunpack.c.l.b16 %v123
  %v643 = vunpack.c.l.b16 %v124
  %v644 = vunpack.c.l.b16 %v125
  %v645 = vunpack.c.l.b16 %v126
  %v646 = vunpack.c.l.b16 %v127
  %v647 = vunpack.c.l.b16 %v128
  %v648 = vunpack.c.l.b16 %v129
  %v649 = vunpack.c.l.b16 %v130
  %v650 = vunpack.c.l.b16 %v131
  %v651 = vunpack.c.l.b16 %v132
  %v652 = vunpack.c.l.b16 %v133
  %v653 = vunpack.c.l.b16 %v134
  %v654 = vunpack.c.l.b16 %v135
  %v655 = vunpack.c.l.b16 %v136
  %v656 = vunpack.c.l.b16 %v137
  %v657 = vunpack.c.l.b16 %v138
  %v658 = vunpack.c.l.b16 %v139
  %v659 = vunpack.c.l.b16 %v140
  %v660 = vunpack.c.l.b16 %v141
  %v661 = vunpack.c.l.b16 %v142
  %v662 = vunpack.c.l.b16 %v143
  %v663 = vunpack.c.l.b16 %v144
  %v664 = vunpack.c.l.b16 %v145
  %v665 = vunpack.c.l.b16 %v146
  %v666 = vunpack.c.l.b16 %v147
  %v667 = vunpack.c.l.b16 %v148
  %v668 = vunpack.c.l.b16 %v149
  %v669 = vunpack.c.l.b16 %v150
  %v670 = vunpack.c.l.b16 %v151
  %v671 = vunpack.c.l.b16 %v152
  %v672 = vunpack.c.l.b16 %v153
  %v673 = vunpack.c.l.b16 %v154
  %v674 = vunpack.c.l.b16 %v155
  %v675 = vunpack.c.l.b16 %v156
  %v676 = vunpack.c.l.b16 %v157
  %v677 = vunpack.c.l.b16 %v158
  %v678 = vunpack.c.l.b16 %v159
  %v679 = vunpack.c.l.b16 %v160
  %v680 = vunpack.c.l.b16 %v161
  %v681 = vunpack.c.l.b16 %v162
  %v682 = vunpack.c.l.b16 %v163
  %v683 = vunpack.c.l.b16 %v164
  %v684 = vunpack.c.l.b16 %v165
  %v685 = vunpack.c.l.b16 %v166
  %v686 = vunpack.c.l.b16 %v167
  %v687 = vunpack.c.l.b16 %v168
  %v688 = vunpack.c.l.b16 %v169
  %v689 = vunpack.c.l.b16 %v170
  %v690 = vunpack.c.l.b16 %v171
  %v691 = vunpack.c.l.b16 %v172
  %v692 = vunpack.c.l.b16 %v173
  %v693 = vunpack.c.l.b16 %v174
  %v694 = vunpack.c.l.b16 %v175
  %v695 = vunpack.c.l.b16 %v176
  %v696 = vunpack.c.l.b16 %v177
  %v697 = vunpack.c.l.b16 %v178
  %v698 = vunpack.c.l.b16 %v179
  %v699 = vunpack.c.l.b16 %v180
  %v700 = vunpack.c.l.b16 %v181
  %v701 = vunpack.c.l.b16 %v182
  %v702 = vunpack.c.l.b16 %v183
  %v703 = vunpack.c.l.b16 %v184
  %v704 = vunpack.c.l.b16 %v185
  %v705 = vunpack.c.l.b16 %v186
  %v706 = vunpack.c.l.b16 %v187
  %v707 = vunpack.c.l.b16 %v188
  %v708 = vunpack.c.l.b16 %v189
  %v709 = vunpack.c.l.b16 %v190
  %v710 = vunpack.c.l.b16 %v191
  %v711 = vunpack.c.l.b16 %v192
  %v712 = vunpack.c.l.b16 %v193
  %v713 = vunpack.c.l.b16 %v194
  %v714 = vunpack.c.l.b16 %v195
  %v715 = vunpack.c.l.b16 %v196
  %v716 = vunpack.c.l.b16 %v197
  %v717 = vunpack.c.l.b16 %v198
  %v718 = vunpack.c.l.b16 %v199
  %v719 = vunpack.c.l.b16 %v200
  %v720 = vunpack.c.l.b16 %v201
  %v721 = vunpack.c.l.b16 %v202
  %v722 = vpack.c.b16 %v611, %v610
  %v723 = vpack.c.b16 %v613, %v612
  %v724 = vpack.c.b16 %v615, %v614
  %v725 = vpack.c.b16 %v617, %v616
  %v726 = vpack.c.b16 %v619, %v618
  %v727 = vpack.c.b16 %v621, %v620
  %v728 = vpack.c.b16 %v623, %v622
  %v729 = vpack.c.b16 %v625, %v624
  %v730 = vpack.c.b16 %v627, %v626
  %v731 = vpack.c.b16 %v629, %v628
  %v732 = vpack.c.b16 %v631, %v630
  %v733 = vpack.c.b16 %v633, %v632
  %v734 = vpack.c.b16 %v635, %v634
  %v735 = vpack.c.b16 %v637, %v636
  %v736 = vpack.c.b16 %v639, %v638
  %v737 = vpack.c.b16 %v641, %v640
  %v738 = vpack.c.b16 %v643, %v642
  %v739 = vpack.c.b16 %v645, %v644
  %v740 = vpack.c.b16 %v647, %v646
  %v741 = vpack.c.b16 %v649, %v648
  %v742 = vpack.c.b16 %v651, %v650
  %v743 = vpack.c.b16 %v653, %v652
  %v744 = vpack.c.b16 %v655, %v654
  %v745 = vpack.c.b16 %v657, %v656
  %v746 = vpack.c.b16 %v659, %v658
  %v747 = vpack.c.b16 %v661, %v660
  %v748 = vpack.c.b16 %v663, %v662
  %v749 = vpack.c.b16 %v665, %v664
  %v750 = vpack.c.b16 %v667, %v666
  %v751 = vpack.c.b16 %v669, %v668
  %v752 = vpack.c.b16 %v671, %v670
  %v753 = vpack.c.b16 %v673, %v672
  %v754 = vpack.c.b16 %v675, %v674
  %v755 = vpack.c.b16 %v677, %v676
  %v756 = vpack.c.b16 %v679, %v678
  %v757 = vpack.c.b16 %v681, %v680
  %v758 = vpack.c.b16 %v683, %v682
  %v759 = vpack.c.b16 %v685, %v684
  %v760 = vpack.c.b16 %v687, %v686
  %v761 = vpack.c.b16 %v689, %v688
  %v762 = vpack.c.b16 %v691, %v690
  %v763 = vpack.c.b16 %v693, %v692
  %v764 = vpack.c.b16 %v695, %v694
  %v765 = vpack.c.b16 %v697, %v696
  %v766 = vpack.c.b16 %v699, %v698
  %v767 = vpack.c.b16 %v701, %v700
  %v768 = vpack.c.b16 %v703, %v702
  %v769 = vpack.c.b16 %v705, %v704
  %v770 = vpack.c.b16 %v707, %v706
  %v771 = vpack.c.b16 %v709, %v708
  %v772 = vpack.c.b16 %v711, %v710
  %v773 = vpack.c.b16 %v713, %v712
  %v774 = vpack.c.b16 %v715, %v714
  %v775 = vpack.c.b16 %v717, %v716
  %v776 = vpack.c.b16 %v719, %v718
  %v777 = vpack.c.b16 %v721, %v720
  %834 = vmatprep.subr.bf16.mxu0 0
  %835 = vmatpush1.bf16.msra.mxu0 %v729
  %836 = vmatprep.subr.bf16.mxu0 0
  %837 = vmatpush1.bf16.msra.mxu0 %v728
  %838 = vmatprep.subr.bf16.mxu0 0
  %839 = vmatpush1.bf16.msra.mxu0 %v727
  %840 = vmatprep.subr.bf16.mxu0 0
  %841 = vmatpush1.bf16.msra.mxu0 %v726
  %842 = vmatprep.subr.bf16.mxu0 0
  %843 = vmatpush1.bf16.msra.mxu0 %v725
  %844 = vmatprep.subr.bf16.mxu0 0
  %845 = vmatpush1.bf16.msra.mxu0 %v724
  %846 = vmatprep.subr.bf16.mxu0 0
  %847 = vmatpush1.bf16.msra.mxu0 %v723
  %848 = vmatprep.subr.bf16.mxu0 0
  %849 = vmatpush1.bf16.msra.mxu0 %v722
  %850 = vmatprep.subr.bf16.mxu0 0
  %851 = vmatpush2.bf16.msra.mxu0 %v737
  %852 = vmatprep.subr.bf16.mxu0 0
  %853 = vmatpush2.bf16.msra.mxu0 %v736
  %854 = vmatprep.subr.bf16.mxu0 0
  %855 = vmatpush2.bf16.msra.mxu0 %v735
  %856 = vmatprep.subr.bf16.mxu0 0
  %857 = vmatpush2.bf16.msra.mxu0 %v734
  %858 = vmatprep.subr.bf16.mxu0 0
  %859 = vmatpush2.bf16.msra.mxu0 %v733
  %860 = vmatprep.subr.bf16.mxu0 0
  %861 = vmatpush2.bf16.msra.mxu0 %v732
  %862 = vmatprep.subr.bf16.mxu0 0
  %863 = vmatpush2.bf16.msra.mxu0 %v731
  %864 = vmatprep.subr.bf16.mxu0 0
  %865 = vmatpush2.bf16.msra.mxu0 %v730
  %866 = vmatprep.mubr.bf16.mxu0 %v387
  %867 = vmatmul.mubr.bf16.gmra.mxu0 %v386
  %v868 = vpop.f32.mrf.mxu0
  %v869 = vadd.f32 %v208, %v868
  %v870 = vpop.f32.mrf.mxu0
  %v871 = vpop.f32.mrf.mxu0
  %v872 = vadd.f32 %v208, %v871
  %v873 = vpop.f32.mrf.mxu0
  %874 = vmatprep.mubr.bf16.mxu0 %v394
  %875 = vmatmul.mubr.bf16.gmra.mxu0 %v393
  %v876 = vpop.f32.mrf.mxu0
  %v877 = vadd.f32 %v208, %v876
  %v878 = vpop.f32.mrf.mxu0
  %v879 = vpop.f32.mrf.mxu0
  %v880 = vadd.f32 %v208, %v879
  %v881 = vpop.f32.mrf.mxu0
  %882 = vmatprep.mubr.bf16.mxu0 %v401
  %883 = vmatmul.mubr.bf16.gmra.mxu0 %v400
  %v884 = vpop.f32.mrf.mxu0
  %v885 = vadd.f32 %v208, %v884
  %v886 = vpop.f32.mrf.mxu0
  %v887 = vpop.f32.mrf.mxu0
  %v888 = vadd.f32 %v208, %v887
  %v889 = vpop.f32.mrf.mxu0
  %890 = vmatprep.mubr.bf16.mxu0 %v408
  %891 = vmatmul.mubr.bf16.gmra.mxu0 %v407
  %v892 = vpop.f32.mrf.mxu0
  %v893 = vadd.f32 %v208, %v892
  %v894 = vpop.f32.mrf.mxu0
  %v895 = vpop.f32.mrf.mxu0
  %v896 = vadd.f32 %v208, %v895
  %v897 = vpop.f32.mrf.mxu0
  %898 = vmatprep.mubr.bf16.mxu0 %v415
  %899 = vmatmul.mubr.bf16.gmra.mxu0 %v414
  %v900 = vpop.f32.mrf.mxu0
  %v901 = vadd.f32 %v208, %v900
  %v902 = vpop.f32.mrf.mxu0
  %v903 = vpop.f32.mrf.mxu0
  %v904 = vadd.f32 %v208, %v903
  %v905 = vpop.f32.mrf.mxu0
  %906 = vmatprep.mubr.bf16.mxu0 %v422
  %907 = vmatmul.mubr.bf16.gmra.mxu0 %v421
  %v908 = vpop.f32.mrf.mxu0
  %v909 = vadd.f32 %v208, %v908
  %v910 = vpop.f32.mrf.mxu0
  %v911 = vpop.f32.mrf.mxu0
  %v912 = vadd.f32 %v208, %v911
  %v913 = vpop.f32.mrf.mxu0
  %914 = vmatprep.mubr.bf16.mxu0 %v429
  %915 = vmatmul.mubr.bf16.gmra.mxu0 %v428
  %v916 = vpop.f32.mrf.mxu0
  %v917 = vadd.f32 %v208, %v916
  %v918 = vpop.f32.mrf.mxu0
  %v919 = vpop.f32.mrf.mxu0
  %v920 = vadd.f32 %v208, %v919
  %v921 = vpop.f32.mrf.mxu0
  %922 = vmatprep.mubr.bf16.mxu0 %v436
  %923 = vmatmul.mubr.bf16.gmra.mxu0 %v435
  %v924 = vpop.f32.mrf.mxu0
  %v925 = vadd.f32 %v208, %v924
  %v926 = vpop.f32.mrf.mxu0
  %v927 = vpop.f32.mrf.mxu0
  %v928 = vadd.f32 %v208, %v927
  %v929 = vpop.f32.mrf.mxu0
  %930 = vdwg.mxu0
  %931 = vmatprep.subr.bf16.mxu0 0
  %932 = vmatpush1.bf16.msra.mxu0 %v745
  %933 = vmatprep.subr.bf16.mxu0 0
  %934 = vmatpush1.bf16.msra.mxu0 %v744
  %935 = vmatprep.subr.bf16.mxu0 0
  %936 = vmatpush1.bf16.msra.mxu0 %v743
  %937 = vmatprep.subr.bf16.mxu0 0
  %938 = vmatpush1.bf16.msra.mxu0 %v742
  %939 = vmatprep.subr.bf16.mxu0 0
  %940 = vmatpush1.bf16.msra.mxu0 %v741
  %941 = vmatprep.subr.bf16.mxu0 0
  %942 = vmatpush1.bf16.msra.mxu0 %v740
  %943 = vmatprep.subr.bf16.mxu0 0
  %944 = vmatpush1.bf16.msra.mxu0 %v739
  %945 = vmatprep.subr.bf16.mxu0 0
  %946 = vmatpush1.bf16.msra.mxu0 %v738
  %947 = vmatprep.subr.bf16.mxu0 0
  %948 = vmatpush2.bf16.msra.mxu0 %v753
  %949 = vmatprep.subr.bf16.mxu0 0
  %950 = vmatpush2.bf16.msra.mxu0 %v752
  %951 = vmatprep.subr.bf16.mxu0 0
  %952 = vmatpush2.bf16.msra.mxu0 %v751
  %953 = vmatprep.subr.bf16.mxu0 0
  %954 = vmatpush2.bf16.msra.mxu0 %v750
  %955 = vmatprep.subr.bf16.mxu0 0
  %956 = vmatpush2.bf16.msra.mxu0 %v749
  %957 = vmatprep.subr.bf16.mxu0 0
  %958 = vmatpush2.bf16.msra.mxu0 %v748
  %959 = vmatprep.subr.bf16.mxu0 0
  %960 = vmatpush2.bf16.msra.mxu0 %v747
  %961 = vmatprep.subr.bf16.mxu0 0
  %962 = vmatpush2.bf16.msra.mxu0 %v746
  %963 = vmatprep.mubr.bf16.mxu0 %v389
  %964 = vmatmul.mubr.bf16.gmra.mxu0 %v388
  %v965 = vpop.f32.mrf.mxu0
  %v966 = vadd.f32 %v869, %v965
  %v967 = vpop.f32.mrf.mxu0
  %v968 = vpop.f32.mrf.mxu0
  %v969 = vadd.f32 %v872, %v968
  %v970 = vpop.f32.mrf.mxu0
  %971 = vmatprep.mubr.bf16.mxu0 %v396
  %972 = vmatmul.mubr.bf16.gmra.mxu0 %v395
  %v973 = vpop.f32.mrf.mxu0
  %v974 = vadd.f32 %v877, %v973
  %v975 = vpop.f32.mrf.mxu0
  %v976 = vpop.f32.mrf.mxu0
  %v977 = vadd.f32 %v880, %v976
  %v978 = vpop.f32.mrf.mxu0
  %979 = vmatprep.mubr.bf16.mxu0 %v403
  %980 = vmatmul.mubr.bf16.gmra.mxu0 %v402
  %v981 = vpop.f32.mrf.mxu0
  %v982 = vadd.f32 %v885, %v981
  %v983 = vpop.f32.mrf.mxu0
  %v984 = vpop.f32.mrf.mxu0
  %v985 = vadd.f32 %v888, %v984
  %v986 = vpop.f32.mrf.mxu0
  %987 = vmatprep.mubr.bf16.mxu0 %v410
  %988 = vmatmul.mubr.bf16.gmra.mxu0 %v409
  %v989 = vpop.f32.mrf.mxu0
  %v990 = vadd.f32 %v893, %v989
  %v991 = vpop.f32.mrf.mxu0
  %v992 = vpop.f32.mrf.mxu0
  %v993 = vadd.f32 %v896, %v992
  %v994 = vpop.f32.mrf.mxu0
  %995 = vmatprep.mubr.bf16.mxu0 %v417
  %996 = vmatmul.mubr.bf16.gmra.mxu0 %v416
  %v997 = vpop.f32.mrf.mxu0
  %v998 = vadd.f32 %v901, %v997
  %v999 = vpop.f32.mrf.mxu0
  %v1000 = vpop.f32.mrf.mxu0
  %v1001 = vadd.f32 %v904, %v1000
  %v1002 = vpop.f32.mrf.mxu0
  %1003 = vmatprep.mubr.bf16.mxu0 %v424
  %1004 = vmatmul.mubr.bf16.gmra.mxu0 %v423
  %v1005 = vpop.f32.mrf.mxu0
  %v1006 = vadd.f32 %v909, %v1005
  %v1007 = vpop.f32.mrf.mxu0
  %v1008 = vpop.f32.mrf.mxu0
  %v1009 = vadd.f32 %v912, %v1008
  %v1010 = vpop.f32.mrf.mxu0
  %1011 = vmatprep.mubr.bf16.mxu0 %v431
  %1012 = vmatmul.mubr.bf16.gmra.mxu0 %v430
  %v1013 = vpop.f32.mrf.mxu0
  %v1014 = vadd.f32 %v917, %v1013
  %v1015 = vpop.f32.mrf.mxu0
  %v1016 = vpop.f32.mrf.mxu0
  %v1017 = vadd.f32 %v920, %v1016
  %v1018 = vpop.f32.mrf.mxu0
  %1019 = vmatprep.mubr.bf16.mxu0 %v438
  %1020 = vmatmul.mubr.bf16.gmra.mxu0 %v437
  %v1021 = vpop.f32.mrf.mxu0
  %v1022 = vadd.f32 %v925, %v1021
  %v1023 = vpop.f32.mrf.mxu0
  %v1024 = vpop.f32.mrf.mxu0
  %v1025 = vadd.f32 %v928, %v1024
  %v1026 = vpop.f32.mrf.mxu0
  %1027 = vdwg.mxu0
  %1028 = vmatprep.subr.bf16.mxu0 0
  %1029 = vmatpush1.bf16.msra.mxu0 %v761
  %1030 = vmatprep.subr.bf16.mxu0 0
  %1031 = vmatpush1.bf16.msra.mxu0 %v760
  %1032 = vmatprep.subr.bf16.mxu0 0
  %1033 = vmatpush1.bf16.msra.mxu0 %v759
  %1034 = vmatprep.subr.bf16.mxu0 0
  %1035 = vmatpush1.bf16.msra.mxu0 %v758
  %1036 = vmatprep.subr.bf16.mxu0 0
  %1037 = vmatpush1.bf16.msra.mxu0 %v757
  %1038 = vmatprep.subr.bf16.mxu0 0
  %1039 = vmatpush1.bf16.msra.mxu0 %v756
  %1040 = vmatprep.subr.bf16.mxu0 0
  %1041 = vmatpush1.bf16.msra.mxu0 %v755
  %1042 = vmatprep.subr.bf16.mxu0 0
  %1043 = vmatpush1.bf16.msra.mxu0 %v754
  %1044 = vmatprep.subr.bf16.mxu0 0
  %1045 = vmatpush2.bf16.msra.mxu0 %v769
  %1046 = vmatprep.subr.bf16.mxu0 0
  %1047 = vmatpush2.bf16.msra.mxu0 %v768
  %1048 = vmatprep.subr.bf16.mxu0 0
  %1049 = vmatpush2.bf16.msra.mxu0 %v767
  %1050 = vmatprep.subr.bf16.mxu0 0
  %1051 = vmatpush2.bf16.msra.mxu0 %v766
  %1052 = vmatprep.subr.bf16.mxu0 0
  %1053 = vmatpush2.bf16.msra.mxu0 %v765
  %1054 = vmatprep.subr.bf16.mxu0 0
  %1055 = vmatpush2.bf16.msra.mxu0 %v764
  %1056 = vmatprep.subr.bf16.mxu0 0
  %1057 = vmatpush2.bf16.msra.mxu0 %v763
  %1058 = vmatprep.subr.bf16.mxu0 0
  %1059 = vmatpush2.bf16.msra.mxu0 %v762
  %1060 = vmatprep.mubr.bf16.mxu0 %v391
  %1061 = vmatmul.mubr.bf16.gmra.mxu0 %v390
  %v1062 = vpop.f32.mrf.mxu0
  %v1063 = vadd.f32 %v966, %v1062
  %v1064 = vpop.f32.mrf.mxu0
  %v1065 = vpop.f32.mrf.mxu0
  %v1066 = vadd.f32 %v969, %v1065
  %v1067 = vpop.f32.mrf.mxu0
  %1068 = vmatprep.mubr.bf16.mxu0 %v398
  %1069 = vmatmul.mubr.bf16.gmra.mxu0 %v397
  %v1070 = vpop.f32.mrf.mxu0
  %v1071 = vadd.f32 %v974, %v1070
  %v1072 = vpop.f32.mrf.mxu0
  %v1073 = vpop.f32.mrf.mxu0
  %v1074 = vadd.f32 %v977, %v1073
  %v1075 = vpop.f32.mrf.mxu0
  %1076 = vmatprep.mubr.bf16.mxu0 %v405
  %1077 = vmatmul.mubr.bf16.gmra.mxu0 %v404
  %v1078 = vpop.f32.mrf.mxu0
  %v1079 = vadd.f32 %v982, %v1078
  %v1080 = vpop.f32.mrf.mxu0
  %v1081 = vpop.f32.mrf.mxu0
  %v1082 = vadd.f32 %v985, %v1081
  %v1083 = vpop.f32.mrf.mxu0
  %1084 = vmatprep.mubr.bf16.mxu0 %v412
  %1085 = vmatmul.mubr.bf16.gmra.mxu0 %v411
  %v1086 = vpop.f32.mrf.mxu0
  %v1087 = vadd.f32 %v990, %v1086
  %v1088 = vpop.f32.mrf.mxu0
  %v1089 = vpop.f32.mrf.mxu0
  %v1090 = vadd.f32 %v993, %v1089
  %v1091 = vpop.f32.mrf.mxu0
  %1092 = vmatprep.mubr.bf16.mxu0 %v419
  %1093 = vmatmul.mubr.bf16.gmra.mxu0 %v418
  %v1094 = vpop.f32.mrf.mxu0
  %v1095 = vadd.f32 %v998, %v1094
  %v1096 = vpop.f32.mrf.mxu0
  %v1097 = vpop.f32.mrf.mxu0
  %v1098 = vadd.f32 %v1001, %v1097
  %v1099 = vpop.f32.mrf.mxu0
  %1100 = vmatprep.mubr.bf16.mxu0 %v426
  %1101 = vmatmul.mubr.bf16.gmra.mxu0 %v425
  %v1102 = vpop.f32.mrf.mxu0
  %v1103 = vadd.f32 %v1006, %v1102
  %v1104 = vpop.f32.mrf.mxu0
  %v1105 = vpop.f32.mrf.mxu0
  %v1106 = vadd.f32 %v1009, %v1105
  %v1107 = vpop.f32.mrf.mxu0
  %1108 = vmatprep.mubr.bf16.mxu0 %v433
  %1109 = vmatmul.mubr.bf16.gmra.mxu0 %v432
  %v1110 = vpop.f32.mrf.mxu0
  %v1111 = vadd.f32 %v1014, %v1110
  %v1112 = vpop.f32.mrf.mxu0
  %v1113 = vpop.f32.mrf.mxu0
  %v1114 = vadd.f32 %v1017, %v1113
  %v1115 = vpop.f32.mrf.mxu0
  %1116 = vmatprep.mubr.bf16.mxu0 %v440
  %1117 = vmatmul.mubr.bf16.gmra.mxu0 %v439
  %v1118 = vpop.f32.mrf.mxu0
  %v1119 = vadd.f32 %v1022, %v1118
  %v1120 = vpop.f32.mrf.mxu0
  %v1121 = vpop.f32.mrf.mxu0
  %v1122 = vadd.f32 %v1025, %v1121
  %v1123 = vpop.f32.mrf.mxu0
  %1124 = vdwg.mxu0
  %1125 = vmatprep.subr.bf16.mxu0 0
  %1126 = vmatpush1.bf16.msra.mxu0 %v777
  %1127 = vmatprep.subr.bf16.mxu0 0
  %1128 = vmatpush1.bf16.msra.mxu0 %v776
  %1129 = vmatprep.subr.bf16.mxu0 0
  %1130 = vmatpush1.bf16.msra.mxu0 %v775
  %1131 = vmatprep.subr.bf16.mxu0 0
  %1132 = vmatpush1.bf16.msra.mxu0 %v774
  %1133 = vmatprep.subr.bf16.mxu0 0
  %1134 = vmatpush1.bf16.msra.mxu0 %v773
  %1135 = vmatprep.subr.bf16.mxu0 0
  %1136 = vmatpush1.bf16.msra.mxu0 %v772
  %1137 = vmatprep.subr.bf16.mxu0 0
  %1138 = vmatpush1.bf16.msra.mxu0 %v771
  %1139 = vmatprep.subr.bf16.mxu0 0
  %1140 = vmatpush1.bf16.msra.mxu0 %v770
  %1141 = vmatprep.subr.bf16.mxu0 0
  %1142 = vmatpush2.bf16.msra.mxu0 0
  %1143 = vmatprep.subr.bf16.mxu0 0
  %1144 = vmatpush2.bf16.msra.mxu0 0
  %1145 = vmatprep.subr.bf16.mxu0 0
  %1146 = vmatpush2.bf16.msra.mxu0 0
  %1147 = vmatprep.subr.bf16.mxu0 0
  %1148 = vmatpush2.bf16.msra.mxu0 0
  %1149 = vmatprep.subr.bf16.mxu0 0
  %1150 = vmatpush2.bf16.msra.mxu0 0
  %1151 = vmatprep.subr.bf16.mxu0 0
  %1152 = vmatpush2.bf16.msra.mxu0 0
  %1153 = vmatprep.subr.bf16.mxu0 0
  %1154 = vmatpush2.bf16.msra.mxu0 0
  %1155 = vmatprep.subr.bf16.mxu0 0
  %1156 = vmatpush2.bf16.msra.mxu0 0
  %1157 = vmatprep.mubr.bf16.mxu0 0
  %1158 = vmatmul.mubr.bf16.gmra.mxu0 %v392
  %v1159 = vpop.f32.mrf.mxu0
  %v1160 = vadd.f32 %v1063, %v1159
  %v1161 = vpop.f32.mrf.mxu0
  %v1162 = vpop.f32.mrf.mxu0
  %v1163 = vadd.f32 %v1066, %v1162
  %v1164 = vpop.f32.mrf.mxu0
  %1165 = vmatprep.mubr.bf16.mxu0 0
  %1166 = vmatmul.mubr.bf16.gmra.mxu0 %v399
  %v1167 = vpop.f32.mrf.mxu0
  %v1168 = vadd.f32 %v1071, %v1167
  %v1169 = vpop.f32.mrf.mxu0
  %v1170 = vpop.f32.mrf.mxu0
  %v1171 = vadd.f32 %v1074, %v1170
  %v1172 = vpop.f32.mrf.mxu0
  %1173 = vmatprep.mubr.bf16.mxu0 0
  %1174 = vmatmul.mubr.bf16.gmra.mxu0 %v406
  %v1175 = vpop.f32.mrf.mxu0
  %v1176 = vadd.f32 %v1079, %v1175
  %v1177 = vpop.f32.mrf.mxu0
  %v1178 = vpop.f32.mrf.mxu0
  %v1179 = vadd.f32 %v1082, %v1178
  %v1180 = vpop.f32.mrf.mxu0
  %1181 = vmatprep.mubr.bf16.mxu0 0
  %1182 = vmatmul.mubr.bf16.gmra.mxu0 %v413
  %v1183 = vpop.f32.mrf.mxu0
  %v1184 = vadd.f32 %v1087, %v1183
  %v1185 = vpop.f32.mrf.mxu0
  %v1186 = vpop.f32.mrf.mxu0
  %v1187 = vadd.f32 %v1090, %v1186
  %v1188 = vpop.f32.mrf.mxu0
  %1189 = vmatprep.mubr.bf16.mxu0 0
  %1190 = vmatmul.mubr.bf16.gmra.mxu0 %v420
  %v1191 = vpop.f32.mrf.mxu0
  %v1192 = vadd.f32 %v1095, %v1191
  %v1193 = vpop.f32.mrf.mxu0
  %v1194 = vpop.f32.mrf.mxu0
  %v1195 = vadd.f32 %v1098, %v1194
  %v1196 = vpop.f32.mrf.mxu0
  %1197 = vmatprep.mubr.bf16.mxu0 0
  %1198 = vmatmul.mubr.bf16.gmra.mxu0 %v427
  %v1199 = vpop.f32.mrf.mxu0
  %v1200 = vadd.f32 %v1103, %v1199
  %v1201 = vpop.f32.mrf.mxu0
  %v1202 = vpop.f32.mrf.mxu0
  %v1203 = vadd.f32 %v1106, %v1202
  %v1204 = vpop.f32.mrf.mxu0
  %1205 = vmatprep.mubr.bf16.mxu0 0
  %1206 = vmatmul.mubr.bf16.gmra.mxu0 %v434
  %v1207 = vpop.f32.mrf.mxu0
  %v1208 = vadd.f32 %v1111, %v1207
  %v1209 = vpop.f32.mrf.mxu0
  %v1210 = vpop.f32.mrf.mxu0
  %v1211 = vadd.f32 %v1114, %v1210
  %v1212 = vpop.f32.mrf.mxu0
  %1213 = vmatprep.mubr.bf16.mxu0 0
  %1214 = vmatmul.mubr.bf16.gmra.mxu0 %v441
  %v1215 = vpop.f32.mrf.mxu0
  %v1216 = vadd.f32 %v1119, %v1215
  %v1217 = vpop.f32.mrf.mxu0
  %v1218 = vpop.f32.mrf.mxu0
  %v1219 = vadd.f32 %v1122, %v1218
  %v1220 = vpop.f32.mrf.mxu0
  %1221 = vdwg.mxu0
  %vm1222 = vcmp.gt.f32.partialorder %v1160, 0.0
  %vm1223 = vcmp.gt.f32.partialorder %v1163, 0.0
  %vm1224 = vcmp.gt.f32.partialorder %v1168, 0.0
  %vm1225 = vcmp.gt.f32.partialorder %v1171, 0.0
  %vm1226 = vcmp.gt.f32.partialorder %v1176, 0.0
  %vm1227 = vcmp.gt.f32.partialorder %v1179, 0.0
  %vm1228 = vcmp.gt.f32.partialorder %v1184, 0.0
  %vm1229 = vcmp.gt.f32.partialorder %v1187, 0.0
  %vm1230 = vcmp.gt.f32.partialorder %v1192, 0.0
  %vm1231 = vcmp.gt.f32.partialorder %v1195, 0.0
  %vm1232 = vcmp.gt.f32.partialorder %v1200, 0.0
  %vm1233 = vcmp.gt.f32.partialorder %v1203, 0.0
  %vm1234 = vcmp.gt.f32.partialorder %v1208, 0.0
  %vm1235 = vcmp.gt.f32.partialorder %v1211, 0.0
  %vm1236 = vcmp.gt.f32.partialorder %v1216, 0.0
  %vm1237 = vcmp.gt.f32.partialorder %v1219, 0.0
  %v1238 = vmul.f32 %v1160, 1.442695
  %v1239 = vpow.pop %v1238
  %v1240 = vmul.f32 %v1163, 1.442695
  %v1241 = vpow.pop %v1240
  %v1242 = vmul.f32 %v1168, 1.442695
  %v1243 = vpow.pop %v1242
  %v1244 = vmul.f32 %v1171, 1.442695
  %v1245 = vpow.pop %v1244
  %v1246 = vmul.f32 %v1176, 1.442695
  %v1247 = vpow.pop %v1246
  %v1248 = vmul.f32 %v1179, 1.442695
  %v1249 = vpow.pop %v1248
  %v1250 = vmul.f32 %v1184, 1.442695
  %v1251 = vpow.pop %v1250
  %v1252 = vmul.f32 %v1187, 1.442695
  %v1253 = vpow.pop %v1252
  %v1254 = vmul.f32 %v1192, 1.442695
  %v1255 = vpow.pop %v1254
  %v1256 = vmul.f32 %v1195, 1.442695
  %v1257 = vpow.pop %v1256
  %v1258 = vmul.f32 %v1200, 1.442695
  %v1259 = vpow.pop %v1258
  %v1260 = vmul.f32 %v1203, 1.442695
  %v1261 = vpow.pop %v1260
  %v1262 = vmul.f32 %v1208, 1.442695
  %v1263 = vpow.pop %v1262
  %v1264 = vmul.f32 %v1211, 1.442695
  %v1265 = vpow.pop %v1264
  %v1266 = vmul.f32 %v1216, 1.442695
  %v1267 = vpow.pop %v1266
  %v1268 = vmul.f32 %v1219, 1.442695
  %v1269 = vpow.pop %v1268
  %v1270 = vsub.f32 %v1239, 1.0
  %v1271 = vsub.f32 %v1241, 1.0
  %v1272 = vsub.f32 %v1243, 1.0
  %v1273 = vsub.f32 %v1245, 1.0
  %v1274 = vsub.f32 %v1247, 1.0
  %v1275 = vsub.f32 %v1249, 1.0
  %v1276 = vsub.f32 %v1251, 1.0
  %v1277 = vsub.f32 %v1253, 1.0
  %v1278 = vsub.f32 %v1255, 1.0
  %v1279 = vsub.f32 %v1257, 1.0
  %v1280 = vsub.f32 %v1259, 1.0
  %v1281 = vsub.f32 %v1261, 1.0
  %v1282 = vsub.f32 %v1263, 1.0
  %v1283 = vsub.f32 %v1265, 1.0
  %v1284 = vsub.f32 %v1267, 1.0
  %v1285 = vsub.f32 %v1269, 1.0
  %v1286 = vsel %vm1222, %v1160, %v1270
  %v1287 = vsel %vm1223, %v1163, %v1271
  %v1288 = vsel %vm1224, %v1168, %v1272
  %v1289 = vsel %vm1225, %v1171, %v1273
  %v1290 = vsel %vm1226, %v1176, %v1274
  %v1291 = vsel %vm1227, %v1179, %v1275
  %v1292 = vsel %vm1228, %v1184, %v1276
  %v1293 = vsel %vm1229, %v1187, %v1277
  %v1294 = vsel %vm1230, %v1192, %v1278
  %v1295 = vsel %vm1231, %v1195, %v1279
  %v1296 = vsel %vm1232, %v1200, %v1280
  %v1297 = vsel %vm1233, %v1203, %v1281
  %v1298 = vsel %vm1234, %v1208, %v1282
  %v1299 = vsel %vm1235, %v1211, %v1283
  %v1300 = vsel %vm1236, %v1216, %v1284
  %v1301 = vsel %vm1237, %v1219, %v1285
  %v1302 = vpack.c.bf16 %v1287, %v1286
  %v1303 = vpack.c.bf16 %v1289, %v1288
  %v1304 = vpack.c.bf16 %v1291, %v1290
  %v1305 = vpack.c.bf16 %v1293, %v1292
  %v1306 = vpack.c.bf16 %v1295, %v1294
  %v1307 = vpack.c.bf16 %v1297, %v1296
  %v1308 = vpack.c.bf16 %v1299, %v1298
  %v1309 = vpack.c.bf16 %v1301, %v1300
  %v1310 = vld [vmem:[%s3] sm:$0xf]
  %v1311 = vld [vmem:[%s3 + $0x4] sm:$0xf]
  %v1312 = vld [vmem:[%s3 + $0x8] sm:$0xf]
  %v1313 = vld [vmem:[%s3 + $0xc] sm:$0xf]
  %v1314 = vld [vmem:[%s3 + $0x10] sm:$0xf]
  %v1315 = vld [vmem:[%s3 + $0x14] sm:$0xf]
  %v1316 = vld [vmem:[%s3 + $0x18] sm:$0xf]
  %v1317 = vld [vmem:[%s3 + $0x1c] sm:$0xf]
  %v1318 = vld [vmem:[%s3 + $0x20] sm:$0xf]
  %v1319 = vld [vmem:[%s3 + $0x24] sm:$0xf]
  %v1320 = vld [vmem:[%s3 + $0x28] sm:$0xf]
  %v1321 = vld [vmem:[%s3 + $0x2c] sm:$0xf]
  %v1322 = vld [vmem:[%s3 + $0x30] sm:$0xf]
  %v1323 = vld [vmem:[%s3 + $0x34] sm:$0xf]
  %v1324 = vld [vmem:[%s3 + $0x38] sm:$0xf]
  %v1325 = vld [vmem:[%s3 + $0x3c] sm:$0xf]
  %v1326 = vld [vmem:[%s4] sm:$0x1]
  %v1328 = vlaneseq
  %v1329 = vshrl.u32 %v1328, 7
  %v1330 = vsub.s32 0, %v1329
  %v1331 = vrot.slane %v1326, %v1330
  %v1349 = vunpack.c.l.b16 %v1310
  %v1350 = vunpack.c.l.b16 %v1311
  %v1351 = vunpack.c.l.b16 %v1312
  %v1352 = vunpack.c.l.b16 %v1313
  %v1353 = vunpack.c.l.b16 %v1314
  %v1354 = vunpack.c.l.b16 %v1315
  %v1355 = vunpack.c.l.b16 %v1316
  %v1356 = vunpack.c.l.b16 %v1317
  %v1357 = vunpack.c.l.b16 %v1318
  %v1358 = vunpack.c.l.b16 %v1319
  %v1359 = vunpack.c.l.b16 %v1320
  %v1360 = vunpack.c.l.b16 %v1321
  %v1361 = vunpack.c.l.b16 %v1322
  %v1362 = vunpack.c.l.b16 %v1323
  %v1363 = vunpack.c.l.b16 %v1324
  %v1364 = vunpack.c.l.b16 %v1325
  %v1365 = vpack.c.b16 %v1350, %v1349
  %v1366 = vpack.c.b16 %v1352, %v1351
  %v1367 = vpack.c.b16 %v1354, %v1353
  %v1368 = vpack.c.b16 %v1356, %v1355
  %v1369 = vpack.c.b16 %v1358, %v1357
  %v1370 = vpack.c.b16 %v1360, %v1359
  %v1371 = vpack.c.b16 %v1362, %v1361
  %v1372 = vpack.c.b16 %v1364, %v1363
  %1381 = vmatprep.subr.bf16.mxu0 0
  %1382 = vmatpush1.bf16.msra.mxu0 %v1372
  %1383 = vmatprep.subr.bf16.mxu0 0
  %1384 = vmatpush1.bf16.msra.mxu0 %v1371
  %1385 = vmatprep.subr.bf16.mxu0 0
  %1386 = vmatpush1.bf16.msra.mxu0 %v1370
  %1387 = vmatprep.subr.bf16.mxu0 0
  %1388 = vmatpush1.bf16.msra.mxu0 %v1369
  %1389 = vmatprep.subr.bf16.mxu0 0
  %1390 = vmatpush1.bf16.msra.mxu0 %v1368
  %1391 = vmatprep.subr.bf16.mxu0 0
  %1392 = vmatpush1.bf16.msra.mxu0 %v1367
  %1393 = vmatprep.subr.bf16.mxu0 0
  %1394 = vmatpush1.bf16.msra.mxu0 %v1366
  %1395 = vmatprep.subr.bf16.mxu0 0
  %1396 = vmatpush1.bf16.msra.mxu0 %v1365
  %1397 = vmatprep.subr.bf16.mxu0 0
  %1398 = vmatpush2.bf16.msra.mxu0 0
  %1399 = vmatprep.subr.bf16.mxu0 0
  %1400 = vmatpush2.bf16.msra.mxu0 0
  %1401 = vmatprep.subr.bf16.mxu0 0
  %1402 = vmatpush2.bf16.msra.mxu0 0
  %1403 = vmatprep.subr.bf16.mxu0 0
  %1404 = vmatpush2.bf16.msra.mxu0 0
  %1405 = vmatprep.subr.bf16.mxu0 0
  %1406 = vmatpush2.bf16.msra.mxu0 0
  %1407 = vmatprep.subr.bf16.mxu0 0
  %1408 = vmatpush2.bf16.msra.mxu0 0
  %1409 = vmatprep.subr.bf16.mxu0 0
  %1410 = vmatpush2.bf16.msra.mxu0 0
  %1411 = vmatprep.subr.bf16.mxu0 0
  %1412 = vmatpush2.bf16.msra.mxu0 0
  %1413 = vmatprep.mubr.bf16.mxu0 0
  %1414 = vmatmul.mubr.bf16.gmra.mxu0 %v1302
  %v1415 = vpop.f32.mrf.mxu0
  %v1416 = vadd.f32 %v1331, %v1415
  %v1417 = vpop.f32.mrf.mxu0
  %v1418 = vpop.f32.mrf.mxu0
  %v1419 = vadd.f32 %v1331, %v1418
  %v1420 = vpop.f32.mrf.mxu0
  %1421 = vmatprep.mubr.bf16.mxu0 0
  %1422 = vmatmul.mubr.bf16.gmra.mxu0 %v1303
  %v1423 = vpop.f32.mrf.mxu0
  %v1424 = vadd.f32 %v1331, %v1423
  %v1425 = vpop.f32.mrf.mxu0
  %v1426 = vpop.f32.mrf.mxu0
  %v1427 = vadd.f32 %v1331, %v1426
  %v1428 = vpop.f32.mrf.mxu0
  %1429 = vmatprep.mubr.bf16.mxu0 0
  %1430 = vmatmul.mubr.bf16.gmra.mxu0 %v1304
  %v1431 = vpop.f32.mrf.mxu0
  %v1432 = vadd.f32 %v1331, %v1431
  %v1433 = vpop.f32.mrf.mxu0
  %v1434 = vpop.f32.mrf.mxu0
  %v1435 = vadd.f32 %v1331, %v1434
  %v1436 = vpop.f32.mrf.mxu0
  %1437 = vmatprep.mubr.bf16.mxu0 0
  %1438 = vmatmul.mubr.bf16.gmra.mxu0 %v1305
  %v1439 = vpop.f32.mrf.mxu0
  %v1440 = vadd.f32 %v1331, %v1439
  %v1441 = vpop.f32.mrf.mxu0
  %v1442 = vpop.f32.mrf.mxu0
  %v1443 = vadd.f32 %v1331, %v1442
  %v1444 = vpop.f32.mrf.mxu0
  %1445 = vmatprep.mubr.bf16.mxu0 0
  %1446 = vmatmul.mubr.bf16.gmra.mxu0 %v1306
  %v1447 = vpop.f32.mrf.mxu0
  %v1448 = vadd.f32 %v1331, %v1447
  %v1449 = vpop.f32.mrf.mxu0
  %v1450 = vpop.f32.mrf.mxu0
  %v1451 = vadd.f32 %v1331, %v1450
  %v1452 = vpop.f32.mrf.mxu0
  %1453 = vmatprep.mubr.bf16.mxu0 0
  %1454 = vmatmul.mubr.bf16.gmra.mxu0 %v1307
  %v1455 = vpop.f32.mrf.mxu0
  %v1456 = vadd.f32 %v1331, %v1455
  %v1457 = vpop.f32.mrf.mxu0
  %v1458 = vpop.f32.mrf.mxu0
  %v1459 = vadd.f32 %v1331, %v1458
  %v1460 = vpop.f32.mrf.mxu0
  %1461 = vmatprep.mubr.bf16.mxu0 0
  %1462 = vmatmul.mubr.bf16.gmra.mxu0 %v1308
  %v1463 = vpop.f32.mrf.mxu0
  %v1464 = vadd.f32 %v1331, %v1463
  %v1465 = vpop.f32.mrf.mxu0
  %v1466 = vpop.f32.mrf.mxu0
  %v1467 = vadd.f32 %v1331, %v1466
  %v1468 = vpop.f32.mrf.mxu0
  %1469 = vmatprep.mubr.bf16.mxu0 0
  %1470 = vmatmul.mubr.bf16.gmra.mxu0 %v1309
  %v1471 = vpop.f32.mrf.mxu0
  %v1472 = vadd.f32 %v1331, %v1471
  %v1473 = vpop.f32.mrf.mxu0
  %v1474 = vpop.f32.mrf.mxu0
  %v1475 = vadd.f32 %v1331, %v1474
  %v1476 = vpop.f32.mrf.mxu0
  %1477 = vdwg.mxu0
  %vm1478 = vcmp.gt.f32.partialorder %v1416, 0.0
  %vm1479 = vcmp.gt.f32.partialorder %v1419, 0.0
  %vm1480 = vcmp.gt.f32.partialorder %v1424, 0.0
  %vm1481 = vcmp.gt.f32.partialorder %v1427, 0.0
  %vm1482 = vcmp.gt.f32.partialorder %v1432, 0.0
  %vm1483 = vcmp.gt.f32.partialorder %v1435, 0.0
  %vm1484 = vcmp.gt.f32.partialorder %v1440, 0.0
  %vm1485 = vcmp.gt.f32.partialorder %v1443, 0.0
  %vm1486 = vcmp.gt.f32.partialorder %v1448, 0.0
  %vm1487 = vcmp.gt.f32.partialorder %v1451, 0.0
  %vm1488 = vcmp.gt.f32.partialorder %v1456, 0.0
  %vm1489 = vcmp.gt.f32.partialorder %v1459, 0.0
  %vm1490 = vcmp.gt.f32.partialorder %v1464, 0.0
  %vm1491 = vcmp.gt.f32.partialorder %v1467, 0.0
  %vm1492 = vcmp.gt.f32.partialorder %v1472, 0.0
  %vm1493 = vcmp.gt.f32.partialorder %v1475, 0.0
  %v1494 = vmul.f32 %v1416, 1.442695
  %v1495 = vpow.pop %v1494
  %v1496 = vmul.f32 %v1419, 1.442695
  %v1497 = vpow.pop %v1496
  %v1498 = vmul.f32 %v1424, 1.442695
  %v1499 = vpow.pop %v1498
  %v1500 = vmul.f32 %v1427, 1.442695
  %v1501 = vpow.pop %v1500
  %v1502 = vmul.f32 %v1432, 1.442695
  %v1503 = vpow.pop %v1502
  %v1504 = vmul.f32 %v1435, 1.442695
  %v1505 = vpow.pop %v1504
  %v1506 = vmul.f32 %v1440, 1.442695
  %v1507 = vpow.pop %v1506
  %v1508 = vmul.f32 %v1443, 1.442695
  %v1509 = vpow.pop %v1508
  %v1510 = vmul.f32 %v1448, 1.442695
  %v1511 = vpow.pop %v1510
  %v1512 = vmul.f32 %v1451, 1.442695
  %v1513 = vpow.pop %v1512
  %v1514 = vmul.f32 %v1456, 1.442695
  %v1515 = vpow.pop %v1514
  %v1516 = vmul.f32 %v1459, 1.442695
  %v1517 = vpow.pop %v1516
  %v1518 = vmul.f32 %v1464, 1.442695
  %v1519 = vpow.pop %v1518
  %v1520 = vmul.f32 %v1467, 1.442695
  %v1521 = vpow.pop %v1520
  %v1522 = vmul.f32 %v1472, 1.442695
  %v1523 = vpow.pop %v1522
  %v1524 = vmul.f32 %v1475, 1.442695
  %v1525 = vpow.pop %v1524
  %v1526 = vsub.f32 %v1495, 1.0
  %v1527 = vsub.f32 %v1497, 1.0
  %v1528 = vsub.f32 %v1499, 1.0
  %v1529 = vsub.f32 %v1501, 1.0
  %v1530 = vsub.f32 %v1503, 1.0
  %v1531 = vsub.f32 %v1505, 1.0
  %v1532 = vsub.f32 %v1507, 1.0
  %v1533 = vsub.f32 %v1509, 1.0
  %v1534 = vsub.f32 %v1511, 1.0
  %v1535 = vsub.f32 %v1513, 1.0
  %v1536 = vsub.f32 %v1515, 1.0
  %v1537 = vsub.f32 %v1517, 1.0
  %v1538 = vsub.f32 %v1519, 1.0
  %v1539 = vsub.f32 %v1521, 1.0
  %v1540 = vsub.f32 %v1523, 1.0
  %v1541 = vsub.f32 %v1525, 1.0
  %v1542 = vsel %vm1478, %v1416, %v1526
  %v1543 = vsel %vm1479, %v1419, %v1527
  %v1544 = vsel %vm1480, %v1424, %v1528
  %v1545 = vsel %vm1481, %v1427, %v1529
  %v1546 = vsel %vm1482, %v1432, %v1530
  %v1547 = vsel %vm1483, %v1435, %v1531
  %v1548 = vsel %vm1484, %v1440, %v1532
  %v1549 = vsel %vm1485, %v1443, %v1533
  %v1550 = vsel %vm1486, %v1448, %v1534
  %v1551 = vsel %vm1487, %v1451, %v1535
  %v1552 = vsel %vm1488, %v1456, %v1536
  %v1553 = vsel %vm1489, %v1459, %v1537
  %v1554 = vsel %vm1490, %v1464, %v1538
  %v1555 = vsel %vm1491, %v1467, %v1539
  %v1556 = vsel %vm1492, %v1472, %v1540
  %v1557 = vsel %vm1493, %v1475, %v1541
  %v1558 = vpack.c.bf16 %v1543, %v1542
  %v1559 = vpack.c.bf16 %v1545, %v1544
  %v1560 = vpack.c.bf16 %v1547, %v1546
  %v1561 = vpack.c.bf16 %v1549, %v1548
  %v1562 = vpack.c.bf16 %v1551, %v1550
  %v1563 = vpack.c.bf16 %v1553, %v1552
  %v1564 = vpack.c.bf16 %v1555, %v1554
  %v1565 = vpack.c.bf16 %v1557, %v1556
  %s1566 = scalar_lea.vmem %s3, 64
  %v1567 = vld [vmem:[%s1566] sm:$0xf]
  %v1568 = vld [vmem:[%s1566 + $0x4] sm:$0xf]
  %v1569 = vld [vmem:[%s1566 + $0x8] sm:$0xf]
  %v1570 = vld [vmem:[%s1566 + $0xc] sm:$0xf]
  %v1571 = vld [vmem:[%s1566 + $0x10] sm:$0xf]
  %v1572 = vld [vmem:[%s1566 + $0x14] sm:$0xf]
  %v1573 = vld [vmem:[%s1566 + $0x18] sm:$0xf]
  %v1574 = vld [vmem:[%s1566 + $0x1c] sm:$0xf]
  %v1575 = vld [vmem:[%s1566 + $0x20] sm:$0xf]
  %v1576 = vld [vmem:[%s1566 + $0x24] sm:$0xf]
  %v1577 = vld [vmem:[%s1566 + $0x28] sm:$0xf]
  %v1578 = vld [vmem:[%s1566 + $0x2c] sm:$0xf]
  %v1579 = vld [vmem:[%s1566 + $0x30] sm:$0xf]
  %v1580 = vld [vmem:[%s1566 + $0x34] sm:$0xf]
  %v1581 = vld [vmem:[%s1566 + $0x38] sm:$0xf]
  %v1582 = vld [vmem:[%s1566 + $0x3c] sm:$0xf]
  %s1583 = scalar_lea.vmem %s4, 1
  %v1584 = vld [vmem:[%s1583] sm:$0x1]
  %v1586 = vlaneseq
  %v1587 = vshrl.u32 %v1586, 7
  %v1588 = vsub.s32 0, %v1587
  %v1589 = vrot.slane %v1584, %v1588
  %v1607 = vunpack.c.l.b16 %v1567
  %v1608 = vunpack.c.l.b16 %v1568
  %v1609 = vunpack.c.l.b16 %v1569
  %v1610 = vunpack.c.l.b16 %v1570
  %v1611 = vunpack.c.l.b16 %v1571
  %v1612 = vunpack.c.l.b16 %v1572
  %v1613 = vunpack.c.l.b16 %v1573
  %v1614 = vunpack.c.l.b16 %v1574
  %v1615 = vunpack.c.l.b16 %v1575
  %v1616 = vunpack.c.l.b16 %v1576
  %v1617 = vunpack.c.l.b16 %v1577
  %v1618 = vunpack.c.l.b16 %v1578
  %v1619 = vunpack.c.l.b16 %v1579
  %v1620 = vunpack.c.l.b16 %v1580
  %v1621 = vunpack.c.l.b16 %v1581
  %v1622 = vunpack.c.l.b16 %v1582
  %v1623 = vpack.c.b16 %v1608, %v1607
  %v1624 = vpack.c.b16 %v1610, %v1609
  %v1625 = vpack.c.b16 %v1612, %v1611
  %v1626 = vpack.c.b16 %v1614, %v1613
  %v1627 = vpack.c.b16 %v1616, %v1615
  %v1628 = vpack.c.b16 %v1618, %v1617
  %v1629 = vpack.c.b16 %v1620, %v1619
  %v1630 = vpack.c.b16 %v1622, %v1621
  %1639 = vmatprep.subr.bf16.mxu0 0
  %1640 = vmatpush1.bf16.msra.mxu0 %v1630
  %1641 = vmatprep.subr.bf16.mxu0 0
  %1642 = vmatpush1.bf16.msra.mxu0 %v1629
  %1643 = vmatprep.subr.bf16.mxu0 0
  %1644 = vmatpush1.bf16.msra.mxu0 %v1628
  %1645 = vmatprep.subr.bf16.mxu0 0
  %1646 = vmatpush1.bf16.msra.mxu0 %v1627
  %1647 = vmatprep.subr.bf16.mxu0 0
  %1648 = vmatpush1.bf16.msra.mxu0 %v1626
  %1649 = vmatprep.subr.bf16.mxu0 0
  %1650 = vmatpush1.bf16.msra.mxu0 %v1625
  %1651 = vmatprep.subr.bf16.mxu0 0
  %1652 = vmatpush1.bf16.msra.mxu0 %v1624
  %1653 = vmatprep.subr.bf16.mxu0 0
  %1654 = vmatpush1.bf16.msra.mxu0 %v1623
  %1655 = vmatprep.subr.bf16.mxu0 0
  %1656 = vmatpush2.bf16.msra.mxu0 0
  %1657 = vmatprep.subr.bf16.mxu0 0
  %1658 = vmatpush2.bf16.msra.mxu0 0
  %1659 = vmatprep.subr.bf16.mxu0 0
  %1660 = vmatpush2.bf16.msra.mxu0 0
  %1661 = vmatprep.subr.bf16.mxu0 0
  %1662 = vmatpush2.bf16.msra.mxu0 0
  %1663 = vmatprep.subr.bf16.mxu0 0
  %1664 = vmatpush2.bf16.msra.mxu0 0
  %1665 = vmatprep.subr.bf16.mxu0 0
  %1666 = vmatpush2.bf16.msra.mxu0 0
  %1667 = vmatprep.subr.bf16.mxu0 0
  %1668 = vmatpush2.bf16.msra.mxu0 0
  %1669 = vmatprep.subr.bf16.mxu0 0
  %1670 = vmatpush2.bf16.msra.mxu0 0
  %1671 = vmatprep.mubr.bf16.mxu0 0
  %1672 = vmatmul.mubr.bf16.gmra.mxu0 %v1558
  %v1673 = vpop.f32.mrf.mxu0
  %v1674 = vadd.f32 %v1589, %v1673
  %v1675 = vpop.f32.mrf.mxu0
  %v1676 = vpop.f32.mrf.mxu0
  %v1677 = vadd.f32 %v1589, %v1676
  %v1678 = vpop.f32.mrf.mxu0
  %1679 = vmatprep.mubr.bf16.mxu0 0
  %1680 = vmatmul.mubr.bf16.gmra.mxu0 %v1559
  %v1681 = vpop.f32.mrf.mxu0
  %v1682 = vadd.f32 %v1589, %v1681
  %v1683 = vpop.f32.mrf.mxu0
  %v1684 = vpop.f32.mrf.mxu0
  %v1685 = vadd.f32 %v1589, %v1684
  %v1686 = vpop.f32.mrf.mxu0
  %1687 = vmatprep.mubr.bf16.mxu0 0
  %1688 = vmatmul.mubr.bf16.gmra.mxu0 %v1560
  %v1689 = vpop.f32.mrf.mxu0
  %v1690 = vadd.f32 %v1589, %v1689
  %v1691 = vpop.f32.mrf.mxu0
  %v1692 = vpop.f32.mrf.mxu0
  %v1693 = vadd.f32 %v1589, %v1692
  %v1694 = vpop.f32.mrf.mxu0
  %1695 = vmatprep.mubr.bf16.mxu0 0
  %1696 = vmatmul.mubr.bf16.gmra.mxu0 %v1561
  %v1697 = vpop.f32.mrf.mxu0
  %v1698 = vadd.f32 %v1589, %v1697
  %v1699 = vpop.f32.mrf.mxu0
  %v1700 = vpop.f32.mrf.mxu0
  %v1701 = vadd.f32 %v1589, %v1700
  %v1702 = vpop.f32.mrf.mxu0
  %1703 = vmatprep.mubr.bf16.mxu0 0
  %1704 = vmatmul.mubr.bf16.gmra.mxu0 %v1562
  %v1705 = vpop.f32.mrf.mxu0
  %v1706 = vadd.f32 %v1589, %v1705
  %v1707 = vpop.f32.mrf.mxu0
  %v1708 = vpop.f32.mrf.mxu0
  %v1709 = vadd.f32 %v1589, %v1708
  %v1710 = vpop.f32.mrf.mxu0
  %1711 = vmatprep.mubr.bf16.mxu0 0
  %1712 = vmatmul.mubr.bf16.gmra.mxu0 %v1563
  %v1713 = vpop.f32.mrf.mxu0
  %v1714 = vadd.f32 %v1589, %v1713
  %v1715 = vpop.f32.mrf.mxu0
  %v1716 = vpop.f32.mrf.mxu0
  %v1717 = vadd.f32 %v1589, %v1716
  %v1718 = vpop.f32.mrf.mxu0
  %1719 = vmatprep.mubr.bf16.mxu0 0
  %1720 = vmatmul.mubr.bf16.gmra.mxu0 %v1564
  %v1721 = vpop.f32.mrf.mxu0
  %v1722 = vadd.f32 %v1589, %v1721
  %v1723 = vpop.f32.mrf.mxu0
  %v1724 = vpop.f32.mrf.mxu0
  %v1725 = vadd.f32 %v1589, %v1724
  %v1726 = vpop.f32.mrf.mxu0
  %1727 = vmatprep.mubr.bf16.mxu0 0
  %1728 = vmatmul.mubr.bf16.gmra.mxu0 %v1565
  %v1729 = vpop.f32.mrf.mxu0
  %v1730 = vadd.f32 %v1589, %v1729
  %v1731 = vpop.f32.mrf.mxu0
  %v1732 = vpop.f32.mrf.mxu0
  %v1733 = vadd.f32 %v1589, %v1732
  %v1734 = vpop.f32.mrf.mxu0
  %1735 = vdwg.mxu0
  %vm1736 = vcmp.gt.f32.partialorder %v1674, 0.0
  %vm1737 = vcmp.gt.f32.partialorder %v1677, 0.0
  %vm1738 = vcmp.gt.f32.partialorder %v1682, 0.0
  %vm1739 = vcmp.gt.f32.partialorder %v1685, 0.0
  %vm1740 = vcmp.gt.f32.partialorder %v1690, 0.0
  %vm1741 = vcmp.gt.f32.partialorder %v1693, 0.0
  %vm1742 = vcmp.gt.f32.partialorder %v1698, 0.0
  %vm1743 = vcmp.gt.f32.partialorder %v1701, 0.0
  %vm1744 = vcmp.gt.f32.partialorder %v1706, 0.0
  %vm1745 = vcmp.gt.f32.partialorder %v1709, 0.0
  %vm1746 = vcmp.gt.f32.partialorder %v1714, 0.0
  %vm1747 = vcmp.gt.f32.partialorder %v1717, 0.0
  %vm1748 = vcmp.gt.f32.partialorder %v1722, 0.0
  %vm1749 = vcmp.gt.f32.partialorder %v1725, 0.0
  %vm1750 = vcmp.gt.f32.partialorder %v1730, 0.0
  %vm1751 = vcmp.gt.f32.partialorder %v1733, 0.0
  %v1752 = vmul.f32 %v1674, 1.442695
  %v1753 = vpow.pop %v1752
  %v1754 = vmul.f32 %v1677, 1.442695
  %v1755 = vpow.pop %v1754
  %v1756 = vmul.f32 %v1682, 1.442695
  %v1757 = vpow.pop %v1756
  %v1758 = vmul.f32 %v1685, 1.442695
  %v1759 = vpow.pop %v1758
  %v1760 = vmul.f32 %v1690, 1.442695
  %v1761 = vpow.pop %v1760
  %v1762 = vmul.f32 %v1693, 1.442695
  %v1763 = vpow.pop %v1762
  %v1764 = vmul.f32 %v1698, 1.442695
  %v1765 = vpow.pop %v1764
  %v1766 = vmul.f32 %v1701, 1.442695
  %v1767 = vpow.pop %v1766
  %v1768 = vmul.f32 %v1706, 1.442695
  %v1769 = vpow.pop %v1768
  %v1770 = vmul.f32 %v1709, 1.442695
  %v1771 = vpow.pop %v1770
  %v1772 = vmul.f32 %v1714, 1.442695
  %v1773 = vpow.pop %v1772
  %v1774 = vmul.f32 %v1717, 1.442695
  %v1775 = vpow.pop %v1774
  %v1776 = vmul.f32 %v1722, 1.442695
  %v1777 = vpow.pop %v1776
  %v1778 = vmul.f32 %v1725, 1.442695
  %v1779 = vpow.pop %v1778
  %v1780 = vmul.f32 %v1730, 1.442695
  %v1781 = vpow.pop %v1780
  %v1782 = vmul.f32 %v1733, 1.442695
  %v1783 = vpow.pop %v1782
  %v1784 = vsub.f32 %v1753, 1.0
  %v1785 = vsub.f32 %v1755, 1.0
  %v1786 = vsub.f32 %v1757, 1.0
  %v1787 = vsub.f32 %v1759, 1.0
  %v1788 = vsub.f32 %v1761, 1.0
  %v1789 = vsub.f32 %v1763, 1.0
  %v1790 = vsub.f32 %v1765, 1.0
  %v1791 = vsub.f32 %v1767, 1.0
  %v1792 = vsub.f32 %v1769, 1.0
  %v1793 = vsub.f32 %v1771, 1.0
  %v1794 = vsub.f32 %v1773, 1.0
  %v1795 = vsub.f32 %v1775, 1.0
  %v1796 = vsub.f32 %v1777, 1.0
  %v1797 = vsub.f32 %v1779, 1.0
  %v1798 = vsub.f32 %v1781, 1.0
  %v1799 = vsub.f32 %v1783, 1.0
  %v1800 = vsel %vm1736, %v1674, %v1784
  %v1801 = vsel %vm1737, %v1677, %v1785
  %v1802 = vsel %vm1738, %v1682, %v1786
  %v1803 = vsel %vm1739, %v1685, %v1787
  %v1804 = vsel %vm1740, %v1690, %v1788
  %v1805 = vsel %vm1741, %v1693, %v1789
  %v1806 = vsel %vm1742, %v1698, %v1790
  %v1807 = vsel %vm1743, %v1701, %v1791
  %v1808 = vsel %vm1744, %v1706, %v1792
  %v1809 = vsel %vm1745, %v1709, %v1793
  %v1810 = vsel %vm1746, %v1714, %v1794
  %v1811 = vsel %vm1747, %v1717, %v1795
  %v1812 = vsel %vm1748, %v1722, %v1796
  %v1813 = vsel %vm1749, %v1725, %v1797
  %v1814 = vsel %vm1750, %v1730, %v1798
  %v1815 = vsel %vm1751, %v1733, %v1799
  %v1816 = vpack.c.bf16 %v1801, %v1800
  %v1817 = vpack.c.bf16 %v1803, %v1802
  %v1818 = vpack.c.bf16 %v1805, %v1804
  %v1819 = vpack.c.bf16 %v1807, %v1806
  %v1820 = vpack.c.bf16 %v1809, %v1808
  %v1821 = vpack.c.bf16 %v1811, %v1810
  %v1822 = vpack.c.bf16 %v1813, %v1812
  %v1823 = vpack.c.bf16 %v1815, %v1814
  %s1824 = scalar_lea.vmem %s3, 128
  %v1825 = vld [vmem:[%s1824] sm:$0xf]
  %v1826 = vld [vmem:[%s1824 + $0x4] sm:$0xf]
  %v1827 = vld [vmem:[%s1824 + $0x8] sm:$0xf]
  %v1828 = vld [vmem:[%s1824 + $0xc] sm:$0xf]
  %v1829 = vld [vmem:[%s1824 + $0x10] sm:$0xf]
  %v1830 = vld [vmem:[%s1824 + $0x14] sm:$0xf]
  %v1831 = vld [vmem:[%s1824 + $0x18] sm:$0xf]
  %v1832 = vld [vmem:[%s1824 + $0x1c] sm:$0xf]
  %v1833 = vld [vmem:[%s1824 + $0x20] sm:$0xf]
  %v1834 = vld [vmem:[%s1824 + $0x24] sm:$0xf]
  %v1835 = vld [vmem:[%s1824 + $0x28] sm:$0xf]
  %v1836 = vld [vmem:[%s1824 + $0x2c] sm:$0xf]
  %v1837 = vld [vmem:[%s1824 + $0x30] sm:$0xf]
  %v1838 = vld [vmem:[%s1824 + $0x34] sm:$0xf]
  %v1839 = vld [vmem:[%s1824 + $0x38] sm:$0xf]
  %v1840 = vld [vmem:[%s1824 + $0x3c] sm:$0xf]
  %s1841 = scalar_lea.vmem %s4, 2
  %v1842 = vld [vmem:[%s1841] sm:$0x1]
  %v1844 = vlaneseq
  %v1845 = vshrl.u32 %v1844, 7
  %v1846 = vsub.s32 0, %v1845
  %v1847 = vrot.slane %v1842, %v1846
  %v1865 = vunpack.c.l.b16 %v1825
  %v1866 = vunpack.c.l.b16 %v1826
  %v1867 = vunpack.c.l.b16 %v1827
  %v1868 = vunpack.c.l.b16 %v1828
  %v1869 = vunpack.c.l.b16 %v1829
  %v1870 = vunpack.c.l.b16 %v1830
  %v1871 = vunpack.c.l.b16 %v1831
  %v1872 = vunpack.c.l.b16 %v1832
  %v1873 = vunpack.c.l.b16 %v1833
  %v1874 = vunpack.c.l.b16 %v1834
  %v1875 = vunpack.c.l.b16 %v1835
  %v1876 = vunpack.c.l.b16 %v1836
  %v1877 = vunpack.c.l.b16 %v1837
  %v1878 = vunpack.c.l.b16 %v1838
  %v1879 = vunpack.c.l.b16 %v1839
  %v1880 = vunpack.c.l.b16 %v1840
  %v1881 = vpack.c.b16 %v1866, %v1865
  %v1882 = vpack.c.b16 %v1868, %v1867
  %v1883 = vpack.c.b16 %v1870, %v1869
  %v1884 = vpack.c.b16 %v1872, %v1871
  %v1885 = vpack.c.b16 %v1874, %v1873
  %v1886 = vpack.c.b16 %v1876, %v1875
  %v1887 = vpack.c.b16 %v1878, %v1877
  %v1888 = vpack.c.b16 %v1880, %v1879
  %1897 = vmatprep.subr.bf16.mxu0 0
  %1898 = vmatpush1.bf16.msra.mxu0 %v1888
  %1899 = vmatprep.subr.bf16.mxu0 0
  %1900 = vmatpush1.bf16.msra.mxu0 %v1887
  %1901 = vmatprep.subr.bf16.mxu0 0
  %1902 = vmatpush1.bf16.msra.mxu0 %v1886
  %1903 = vmatprep.subr.bf16.mxu0 0
  %1904 = vmatpush1.bf16.msra.mxu0 %v1885
  %1905 = vmatprep.subr.bf16.mxu0 0
  %1906 = vmatpush1.bf16.msra.mxu0 %v1884
  %1907 = vmatprep.subr.bf16.mxu0 0
  %1908 = vmatpush1.bf16.msra.mxu0 %v1883
  %1909 = vmatprep.subr.bf16.mxu0 0
  %1910 = vmatpush1.bf16.msra.mxu0 %v1882
  %1911 = vmatprep.subr.bf16.mxu0 0
  %1912 = vmatpush1.bf16.msra.mxu0 %v1881
  %1913 = vmatprep.subr.bf16.mxu0 0
  %1914 = vmatpush2.bf16.msra.mxu0 0
  %1915 = vmatprep.subr.bf16.mxu0 0
  %1916 = vmatpush2.bf16.msra.mxu0 0
  %1917 = vmatprep.subr.bf16.mxu0 0
  %1918 = vmatpush2.bf16.msra.mxu0 0
  %1919 = vmatprep.subr.bf16.mxu0 0
  %1920 = vmatpush2.bf16.msra.mxu0 0
  %1921 = vmatprep.subr.bf16.mxu0 0
  %1922 = vmatpush2.bf16.msra.mxu0 0
  %1923 = vmatprep.subr.bf16.mxu0 0
  %1924 = vmatpush2.bf16.msra.mxu0 0
  %1925 = vmatprep.subr.bf16.mxu0 0
  %1926 = vmatpush2.bf16.msra.mxu0 0
  %1927 = vmatprep.subr.bf16.mxu0 0
  %1928 = vmatpush2.bf16.msra.mxu0 0
  %1929 = vmatprep.mubr.bf16.mxu0 0
  %1930 = vmatmul.mubr.bf16.gmra.mxu0 %v1816
  %v1931 = vpop.f32.mrf.mxu0
  %v1932 = vadd.f32 %v1847, %v1931
  %v1933 = vpop.f32.mrf.mxu0
  %v1934 = vpop.f32.mrf.mxu0
  %v1935 = vadd.f32 %v1847, %v1934
  %v1936 = vpop.f32.mrf.mxu0
  %1937 = vmatprep.mubr.bf16.mxu0 0
  %1938 = vmatmul.mubr.bf16.gmra.mxu0 %v1817
  %v1939 = vpop.f32.mrf.mxu0
  %v1940 = vadd.f32 %v1847, %v1939
  %v1941 = vpop.f32.mrf.mxu0
  %v1942 = vpop.f32.mrf.mxu0
  %v1943 = vadd.f32 %v1847, %v1942
  %v1944 = vpop.f32.mrf.mxu0
  %1945 = vmatprep.mubr.bf16.mxu0 0
  %1946 = vmatmul.mubr.bf16.gmra.mxu0 %v1818
  %v1947 = vpop.f32.mrf.mxu0
  %v1948 = vadd.f32 %v1847, %v1947
  %v1949 = vpop.f32.mrf.mxu0
  %v1950 = vpop.f32.mrf.mxu0
  %v1951 = vadd.f32 %v1847, %v1950
  %v1952 = vpop.f32.mrf.mxu0
  %1953 = vmatprep.mubr.bf16.mxu0 0
  %1954 = vmatmul.mubr.bf16.gmra.mxu0 %v1819
  %v1955 = vpop.f32.mrf.mxu0
  %v1956 = vadd.f32 %v1847, %v1955
  %v1957 = vpop.f32.mrf.mxu0
  %v1958 = vpop.f32.mrf.mxu0
  %v1959 = vadd.f32 %v1847, %v1958
  %v1960 = vpop.f32.mrf.mxu0
  %1961 = vmatprep.mubr.bf16.mxu0 0
  %1962 = vmatmul.mubr.bf16.gmra.mxu0 %v1820
  %v1963 = vpop.f32.mrf.mxu0
  %v1964 = vadd.f32 %v1847, %v1963
  %v1965 = vpop.f32.mrf.mxu0
  %v1966 = vpop.f32.mrf.mxu0
  %v1967 = vadd.f32 %v1847, %v1966
  %v1968 = vpop.f32.mrf.mxu0
  %1969 = vmatprep.mubr.bf16.mxu0 0
  %1970 = vmatmul.mubr.bf16.gmra.mxu0 %v1821
  %v1971 = vpop.f32.mrf.mxu0
  %v1972 = vadd.f32 %v1847, %v1971
  %v1973 = vpop.f32.mrf.mxu0
  %v1974 = vpop.f32.mrf.mxu0
  %v1975 = vadd.f32 %v1847, %v1974
  %v1976 = vpop.f32.mrf.mxu0
  %1977 = vmatprep.mubr.bf16.mxu0 0
  %1978 = vmatmul.mubr.bf16.gmra.mxu0 %v1822
  %v1979 = vpop.f32.mrf.mxu0
  %v1980 = vadd.f32 %v1847, %v1979
  %v1981 = vpop.f32.mrf.mxu0
  %v1982 = vpop.f32.mrf.mxu0
  %v1983 = vadd.f32 %v1847, %v1982
  %v1984 = vpop.f32.mrf.mxu0
  %1985 = vmatprep.mubr.bf16.mxu0 0
  %1986 = vmatmul.mubr.bf16.gmra.mxu0 %v1823
  %v1987 = vpop.f32.mrf.mxu0
  %v1988 = vadd.f32 %v1847, %v1987
  %v1989 = vpop.f32.mrf.mxu0
  %v1990 = vpop.f32.mrf.mxu0
  %v1991 = vadd.f32 %v1847, %v1990
  %v1992 = vpop.f32.mrf.mxu0
  %1993 = vdwg.mxu0
  %vm1994 = vcmp.gt.f32.partialorder %v1932, 0.0
  %vm1995 = vcmp.gt.f32.partialorder %v1935, 0.0
  %vm1996 = vcmp.gt.f32.partialorder %v1940, 0.0
  %vm1997 = vcmp.gt.f32.partialorder %v1943, 0.0
  %vm1998 = vcmp.gt.f32.partialorder %v1948, 0.0
  %vm1999 = vcmp.gt.f32.partialorder %v1951, 0.0
  %vm2000 = vcmp.gt.f32.partialorder %v1956, 0.0
  %vm2001 = vcmp.gt.f32.partialorder %v1959, 0.0
  %vm2002 = vcmp.gt.f32.partialorder %v1964, 0.0
  %vm2003 = vcmp.gt.f32.partialorder %v1967, 0.0
  %vm2004 = vcmp.gt.f32.partialorder %v1972, 0.0
  %vm2005 = vcmp.gt.f32.partialorder %v1975, 0.0
  %vm2006 = vcmp.gt.f32.partialorder %v1980, 0.0
  %vm2007 = vcmp.gt.f32.partialorder %v1983, 0.0
  %vm2008 = vcmp.gt.f32.partialorder %v1988, 0.0
  %vm2009 = vcmp.gt.f32.partialorder %v1991, 0.0
  %v2010 = vmul.f32 %v1932, 1.442695
  %v2011 = vpow.pop %v2010
  %v2012 = vmul.f32 %v1935, 1.442695
  %v2013 = vpow.pop %v2012
  %v2014 = vmul.f32 %v1940, 1.442695
  %v2015 = vpow.pop %v2014
  %v2016 = vmul.f32 %v1943, 1.442695
  %v2017 = vpow.pop %v2016
  %v2018 = vmul.f32 %v1948, 1.442695
  %v2019 = vpow.pop %v2018
  %v2020 = vmul.f32 %v1951, 1.442695
  %v2021 = vpow.pop %v2020
  %v2022 = vmul.f32 %v1956, 1.442695
  %v2023 = vpow.pop %v2022
  %v2024 = vmul.f32 %v1959, 1.442695
  %v2025 = vpow.pop %v2024
  %v2026 = vmul.f32 %v1964, 1.442695
  %v2027 = vpow.pop %v2026
  %v2028 = vmul.f32 %v1967, 1.442695
  %v2029 = vpow.pop %v2028
  %v2030 = vmul.f32 %v1972, 1.442695
  %v2031 = vpow.pop %v2030
  %v2032 = vmul.f32 %v1975, 1.442695
  %v2033 = vpow.pop %v2032
  %v2034 = vmul.f32 %v1980, 1.442695
  %v2035 = vpow.pop %v2034
  %v2036 = vmul.f32 %v1983, 1.442695
  %v2037 = vpow.pop %v2036
  %v2038 = vmul.f32 %v1988, 1.442695
  %v2039 = vpow.pop %v2038
  %v2040 = vmul.f32 %v1991, 1.442695
  %v2041 = vpow.pop %v2040
  %v2042 = vsub.f32 %v2011, 1.0
  %v2043 = vsub.f32 %v2013, 1.0
  %v2044 = vsub.f32 %v2015, 1.0
  %v2045 = vsub.f32 %v2017, 1.0
  %v2046 = vsub.f32 %v2019, 1.0
  %v2047 = vsub.f32 %v2021, 1.0
  %v2048 = vsub.f32 %v2023, 1.0
  %v2049 = vsub.f32 %v2025, 1.0
  %v2050 = vsub.f32 %v2027, 1.0
  %v2051 = vsub.f32 %v2029, 1.0
  %v2052 = vsub.f32 %v2031, 1.0
  %v2053 = vsub.f32 %v2033, 1.0
  %v2054 = vsub.f32 %v2035, 1.0
  %v2055 = vsub.f32 %v2037, 1.0
  %v2056 = vsub.f32 %v2039, 1.0
  %v2057 = vsub.f32 %v2041, 1.0
  %v2058 = vsel %vm1994, %v1932, %v2042
  %v2059 = vsel %vm1995, %v1935, %v2043
  %v2060 = vsel %vm1996, %v1940, %v2044
  %v2061 = vsel %vm1997, %v1943, %v2045
  %v2062 = vsel %vm1998, %v1948, %v2046
  %v2063 = vsel %vm1999, %v1951, %v2047
  %v2064 = vsel %vm2000, %v1956, %v2048
  %v2065 = vsel %vm2001, %v1959, %v2049
  %v2066 = vsel %vm2002, %v1964, %v2050
  %v2067 = vsel %vm2003, %v1967, %v2051
  %v2068 = vsel %vm2004, %v1972, %v2052
  %v2069 = vsel %vm2005, %v1975, %v2053
  %v2070 = vsel %vm2006, %v1980, %v2054
  %v2071 = vsel %vm2007, %v1983, %v2055
  %v2072 = vsel %vm2008, %v1988, %v2056
  %v2073 = vsel %vm2009, %v1991, %v2057
  %v2074 = vpack.c.bf16 %v2059, %v2058
  %v2075 = vpack.c.bf16 %v2061, %v2060
  %v2076 = vpack.c.bf16 %v2063, %v2062
  %v2077 = vpack.c.bf16 %v2065, %v2064
  %v2078 = vpack.c.bf16 %v2067, %v2066
  %v2079 = vpack.c.bf16 %v2069, %v2068
  %v2080 = vpack.c.bf16 %v2071, %v2070
  %v2081 = vpack.c.bf16 %v2073, %v2072
  %s2082 = scalar_lea.vmem %s3, 192
  %v2083 = vld [vmem:[%s2082] sm:$0xf]
  %v2084 = vld [vmem:[%s2082 + $0x4] sm:$0xf]
  %v2085 = vld [vmem:[%s2082 + $0x8] sm:$0xf]
  %v2086 = vld [vmem:[%s2082 + $0xc] sm:$0xf]
  %v2087 = vld [vmem:[%s2082 + $0x10] sm:$0xf]
  %v2088 = vld [vmem:[%s2082 + $0x14] sm:$0xf]
  %v2089 = vld [vmem:[%s2082 + $0x18] sm:$0xf]
  %v2090 = vld [vmem:[%s2082 + $0x1c] sm:$0xf]
  %v2091 = vld [vmem:[%s2082 + $0x20] sm:$0xf]
  %v2092 = vld [vmem:[%s2082 + $0x24] sm:$0xf]
  %v2093 = vld [vmem:[%s2082 + $0x28] sm:$0xf]
  %v2094 = vld [vmem:[%s2082 + $0x2c] sm:$0xf]
  %v2095 = vld [vmem:[%s2082 + $0x30] sm:$0xf]
  %v2096 = vld [vmem:[%s2082 + $0x34] sm:$0xf]
  %v2097 = vld [vmem:[%s2082 + $0x38] sm:$0xf]
  %v2098 = vld [vmem:[%s2082 + $0x3c] sm:$0xf]
  %s2099 = scalar_lea.vmem %s4, 3
  %v2100 = vld [vmem:[%s2099] sm:$0x1]
  %v2102 = vlaneseq
  %v2103 = vshrl.u32 %v2102, 7
  %v2104 = vsub.s32 0, %v2103
  %v2105 = vrot.slane %v2100, %v2104
  %v2123 = vunpack.c.l.b16 %v2083
  %v2124 = vunpack.c.l.b16 %v2084
  %v2125 = vunpack.c.l.b16 %v2085
  %v2126 = vunpack.c.l.b16 %v2086
  %v2127 = vunpack.c.l.b16 %v2087
  %v2128 = vunpack.c.l.b16 %v2088
  %v2129 = vunpack.c.l.b16 %v2089
  %v2130 = vunpack.c.l.b16 %v2090
  %v2131 = vunpack.c.l.b16 %v2091
  %v2132 = vunpack.c.l.b16 %v2092
  %v2133 = vunpack.c.l.b16 %v2093
  %v2134 = vunpack.c.l.b16 %v2094
  %v2135 = vunpack.c.l.b16 %v2095
  %v2136 = vunpack.c.l.b16 %v2096
  %v2137 = vunpack.c.l.b16 %v2097
  %v2138 = vunpack.c.l.b16 %v2098
  %v2139 = vpack.c.b16 %v2124, %v2123
  %v2140 = vpack.c.b16 %v2126, %v2125
  %v2141 = vpack.c.b16 %v2128, %v2127
  %v2142 = vpack.c.b16 %v2130, %v2129
  %v2143 = vpack.c.b16 %v2132, %v2131
  %v2144 = vpack.c.b16 %v2134, %v2133
  %v2145 = vpack.c.b16 %v2136, %v2135
  %v2146 = vpack.c.b16 %v2138, %v2137
  %2155 = vmatprep.subr.bf16.mxu0 0
  %2156 = vmatpush1.bf16.msra.mxu0 %v2146
  %2157 = vmatprep.subr.bf16.mxu0 0
  %2158 = vmatpush1.bf16.msra.mxu0 %v2145
  %2159 = vmatprep.subr.bf16.mxu0 0
  %2160 = vmatpush1.bf16.msra.mxu0 %v2144
  %2161 = vmatprep.subr.bf16.mxu0 0
  %2162 = vmatpush1.bf16.msra.mxu0 %v2143
  %2163 = vmatprep.subr.bf16.mxu0 0
  %2164 = vmatpush1.bf16.msra.mxu0 %v2142
  %2165 = vmatprep.subr.bf16.mxu0 0
  %2166 = vmatpush1.bf16.msra.mxu0 %v2141
  %2167 = vmatprep.subr.bf16.mxu0 0
  %2168 = vmatpush1.bf16.msra.mxu0 %v2140
  %2169 = vmatprep.subr.bf16.mxu0 0
  %2170 = vmatpush1.bf16.msra.mxu0 %v2139
  %2171 = vmatprep.subr.bf16.mxu0 0
  %2172 = vmatpush2.bf16.msra.mxu0 0
  %2173 = vmatprep.subr.bf16.mxu0 0
  %2174 = vmatpush2.bf16.msra.mxu0 0
  %2175 = vmatprep.subr.bf16.mxu0 0
  %2176 = vmatpush2.bf16.msra.mxu0 0
  %2177 = vmatprep.subr.bf16.mxu0 0
  %2178 = vmatpush2.bf16.msra.mxu0 0
  %2179 = vmatprep.subr.bf16.mxu0 0
  %2180 = vmatpush2.bf16.msra.mxu0 0
  %2181 = vmatprep.subr.bf16.mxu0 0
  %2182 = vmatpush2.bf16.msra.mxu0 0
  %2183 = vmatprep.subr.bf16.mxu0 0
  %2184 = vmatpush2.bf16.msra.mxu0 0
  %2185 = vmatprep.subr.bf16.mxu0 0
  %2186 = vmatpush2.bf16.msra.mxu0 0
  %2187 = vmatprep.mubr.bf16.mxu0 0
  %2188 = vmatmul.mubr.bf16.gmra.mxu0 %v2074
  %v2189 = vpop.f32.mrf.mxu0
  %v2190 = vadd.f32 %v2105, %v2189
  %v2191 = vpop.f32.mrf.mxu0
  %v2192 = vpop.f32.mrf.mxu0
  %v2193 = vadd.f32 %v2105, %v2192
  %v2194 = vpop.f32.mrf.mxu0
  %2195 = vmatprep.mubr.bf16.mxu0 0
  %2196 = vmatmul.mubr.bf16.gmra.mxu0 %v2075
  %v2197 = vpop.f32.mrf.mxu0
  %v2198 = vadd.f32 %v2105, %v2197
  %v2199 = vpop.f32.mrf.mxu0
  %v2200 = vpop.f32.mrf.mxu0
  %v2201 = vadd.f32 %v2105, %v2200
  %v2202 = vpop.f32.mrf.mxu0
  %2203 = vmatprep.mubr.bf16.mxu0 0
  %2204 = vmatmul.mubr.bf16.gmra.mxu0 %v2076
  %v2205 = vpop.f32.mrf.mxu0
  %v2206 = vadd.f32 %v2105, %v2205
  %v2207 = vpop.f32.mrf.mxu0
  %v2208 = vpop.f32.mrf.mxu0
  %v2209 = vadd.f32 %v2105, %v2208
  %v2210 = vpop.f32.mrf.mxu0
  %2211 = vmatprep.mubr.bf16.mxu0 0
  %2212 = vmatmul.mubr.bf16.gmra.mxu0 %v2077
  %v2213 = vpop.f32.mrf.mxu0
  %v2214 = vadd.f32 %v2105, %v2213
  %v2215 = vpop.f32.mrf.mxu0
  %v2216 = vpop.f32.mrf.mxu0
  %v2217 = vadd.f32 %v2105, %v2216
  %v2218 = vpop.f32.mrf.mxu0
  %2219 = vmatprep.mubr.bf16.mxu0 0
  %2220 = vmatmul.mubr.bf16.gmra.mxu0 %v2078
  %v2221 = vpop.f32.mrf.mxu0
  %v2222 = vadd.f32 %v2105, %v2221
  %v2223 = vpop.f32.mrf.mxu0
  %v2224 = vpop.f32.mrf.mxu0
  %v2225 = vadd.f32 %v2105, %v2224
  %v2226 = vpop.f32.mrf.mxu0
  %2227 = vmatprep.mubr.bf16.mxu0 0
  %2228 = vmatmul.mubr.bf16.gmra.mxu0 %v2079
  %v2229 = vpop.f32.mrf.mxu0
  %v2230 = vadd.f32 %v2105, %v2229
  %v2231 = vpop.f32.mrf.mxu0
  %v2232 = vpop.f32.mrf.mxu0
  %v2233 = vadd.f32 %v2105, %v2232
  %v2234 = vpop.f32.mrf.mxu0
  %2235 = vmatprep.mubr.bf16.mxu0 0
  %2236 = vmatmul.mubr.bf16.gmra.mxu0 %v2080
  %v2237 = vpop.f32.mrf.mxu0
  %v2238 = vadd.f32 %v2105, %v2237
  %v2239 = vpop.f32.mrf.mxu0
  %v2240 = vpop.f32.mrf.mxu0
  %v2241 = vadd.f32 %v2105, %v2240
  %v2242 = vpop.f32.mrf.mxu0
  %2243 = vmatprep.mubr.bf16.mxu0 0
  %2244 = vmatmul.mubr.bf16.gmra.mxu0 %v2081
  %v2245 = vpop.f32.mrf.mxu0
  %v2246 = vadd.f32 %v2105, %v2245
  %v2247 = vpop.f32.mrf.mxu0
  %v2248 = vpop.f32.mrf.mxu0
  %v2249 = vadd.f32 %v2105, %v2248
  %v2250 = vpop.f32.mrf.mxu0
  %2251 = vdwg.mxu0
  %vm2252 = vcmp.gt.f32.partialorder %v2190, 0.0
  %vm2253 = vcmp.gt.f32.partialorder %v2193, 0.0
  %vm2254 = vcmp.gt.f32.partialorder %v2198, 0.0
  %vm2255 = vcmp.gt.f32.partialorder %v2201, 0.0
  %vm2256 = vcmp.gt.f32.partialorder %v2206, 0.0
  %vm2257 = vcmp.gt.f32.partialorder %v2209, 0.0
  %vm2258 = vcmp.gt.f32.partialorder %v2214, 0.0
  %vm2259 = vcmp.gt.f32.partialorder %v2217, 0.0
  %vm2260 = vcmp.gt.f32.partialorder %v2222, 0.0
  %vm2261 = vcmp.gt.f32.partialorder %v2225, 0.0
  %vm2262 = vcmp.gt.f32.partialorder %v2230, 0.0
  %vm2263 = vcmp.gt.f32.partialorder %v2233, 0.0
  %vm2264 = vcmp.gt.f32.partialorder %v2238, 0.0
  %vm2265 = vcmp.gt.f32.partialorder %v2241, 0.0
  %vm2266 = vcmp.gt.f32.partialorder %v2246, 0.0
  %vm2267 = vcmp.gt.f32.partialorder %v2249, 0.0
  %v2268 = vmul.f32 %v2190, 1.442695
  %v2269 = vpow.pop %v2268
  %v2270 = vmul.f32 %v2193, 1.442695
  %v2271 = vpow.pop %v2270
  %v2272 = vmul.f32 %v2198, 1.442695
  %v2273 = vpow.pop %v2272
  %v2274 = vmul.f32 %v2201, 1.442695
  %v2275 = vpow.pop %v2274
  %v2276 = vmul.f32 %v2206, 1.442695
  %v2277 = vpow.pop %v2276
  %v2278 = vmul.f32 %v2209, 1.442695
  %v2279 = vpow.pop %v2278
  %v2280 = vmul.f32 %v2214, 1.442695
  %v2281 = vpow.pop %v2280
  %v2282 = vmul.f32 %v2217, 1.442695
  %v2283 = vpow.pop %v2282
  %v2284 = vmul.f32 %v2222, 1.442695
  %v2285 = vpow.pop %v2284
  %v2286 = vmul.f32 %v2225, 1.442695
  %v2287 = vpow.pop %v2286
  %v2288 = vmul.f32 %v2230, 1.442695
  %v2289 = vpow.pop %v2288
  %v2290 = vmul.f32 %v2233, 1.442695
  %v2291 = vpow.pop %v2290
  %v2292 = vmul.f32 %v2238, 1.442695
  %v2293 = vpow.pop %v2292
  %v2294 = vmul.f32 %v2241, 1.442695
  %v2295 = vpow.pop %v2294
  %v2296 = vmul.f32 %v2246, 1.442695
  %v2297 = vpow.pop %v2296
  %v2298 = vmul.f32 %v2249, 1.442695
  %v2299 = vpow.pop %v2298
  %v2300 = vsub.f32 %v2269, 1.0
  %v2301 = vsub.f32 %v2271, 1.0
  %v2302 = vsub.f32 %v2273, 1.0
  %v2303 = vsub.f32 %v2275, 1.0
  %v2304 = vsub.f32 %v2277, 1.0
  %v2305 = vsub.f32 %v2279, 1.0
  %v2306 = vsub.f32 %v2281, 1.0
  %v2307 = vsub.f32 %v2283, 1.0
  %v2308 = vsub.f32 %v2285, 1.0
  %v2309 = vsub.f32 %v2287, 1.0
  %v2310 = vsub.f32 %v2289, 1.0
  %v2311 = vsub.f32 %v2291, 1.0
  %v2312 = vsub.f32 %v2293, 1.0
  %v2313 = vsub.f32 %v2295, 1.0
  %v2314 = vsub.f32 %v2297, 1.0
  %v2315 = vsub.f32 %v2299, 1.0
  %v2316 = vsel %vm2252, %v2190, %v2300
  %v2317 = vsel %vm2253, %v2193, %v2301
  %v2318 = vsel %vm2254, %v2198, %v2302
  %v2319 = vsel %vm2255, %v2201, %v2303
  %v2320 = vsel %vm2256, %v2206, %v2304
  %v2321 = vsel %vm2257, %v2209, %v2305
  %v2322 = vsel %vm2258, %v2214, %v2306
  %v2323 = vsel %vm2259, %v2217, %v2307
  %v2324 = vsel %vm2260, %v2222, %v2308
  %v2325 = vsel %vm2261, %v2225, %v2309
  %v2326 = vsel %vm2262, %v2230, %v2310
  %v2327 = vsel %vm2263, %v2233, %v2311
  %v2328 = vsel %vm2264, %v2238, %v2312
  %v2329 = vsel %vm2265, %v2241, %v2313
  %v2330 = vsel %vm2266, %v2246, %v2314
  %v2331 = vsel %vm2267, %v2249, %v2315
  %v2332 = vpack.c.bf16 %v2317, %v2316
  %v2333 = vpack.c.bf16 %v2319, %v2318
  %v2334 = vpack.c.bf16 %v2321, %v2320
  %v2335 = vpack.c.bf16 %v2323, %v2322
  %v2336 = vpack.c.bf16 %v2325, %v2324
  %v2337 = vpack.c.bf16 %v2327, %v2326
  %v2338 = vpack.c.bf16 %v2329, %v2328
  %v2339 = vpack.c.bf16 %v2331, %v2330
  %s2340 = scalar_lea.vmem %s3, 256
  %v2341 = vld [vmem:[%s2340] sm:$0xf]
  %v2342 = vld [vmem:[%s2340 + $0x4] sm:$0xf]
  %v2343 = vld [vmem:[%s2340 + $0x8] sm:$0xf]
  %v2344 = vld [vmem:[%s2340 + $0xc] sm:$0xf]
  %v2345 = vld [vmem:[%s2340 + $0x10] sm:$0xf]
  %v2346 = vld [vmem:[%s2340 + $0x14] sm:$0xf]
  %v2347 = vld [vmem:[%s2340 + $0x18] sm:$0xf]
  %v2348 = vld [vmem:[%s2340 + $0x1c] sm:$0xf]
  %v2349 = vld [vmem:[%s2340 + $0x20] sm:$0xf]
  %v2350 = vld [vmem:[%s2340 + $0x24] sm:$0xf]
  %v2351 = vld [vmem:[%s2340 + $0x28] sm:$0xf]
  %v2352 = vld [vmem:[%s2340 + $0x2c] sm:$0xf]
  %v2353 = vld [vmem:[%s2340 + $0x30] sm:$0xf]
  %v2354 = vld [vmem:[%s2340 + $0x34] sm:$0xf]
  %v2355 = vld [vmem:[%s2340 + $0x38] sm:$0xf]
  %v2356 = vld [vmem:[%s2340 + $0x3c] sm:$0xf]
  %s2357 = scalar_lea.vmem %s4, 4
  %v2358 = vld [vmem:[%s2357] sm:$0x1]
  %v2360 = vlaneseq
  %v2361 = vshrl.u32 %v2360, 7
  %v2362 = vsub.s32 0, %v2361
  %v2363 = vrot.slane %v2358, %v2362
  %v2381 = vunpack.c.l.b16 %v2341
  %v2382 = vunpack.c.l.b16 %v2342
  %v2383 = vunpack.c.l.b16 %v2343
  %v2384 = vunpack.c.l.b16 %v2344
  %v2385 = vunpack.c.l.b16 %v2345
  %v2386 = vunpack.c.l.b16 %v2346
  %v2387 = vunpack.c.l.b16 %v2347
  %v2388 = vunpack.c.l.b16 %v2348
  %v2389 = vunpack.c.l.b16 %v2349
  %v2390 = vunpack.c.l.b16 %v2350
  %v2391 = vunpack.c.l.b16 %v2351
  %v2392 = vunpack.c.l.b16 %v2352
  %v2393 = vunpack.c.l.b16 %v2353
  %v2394 = vunpack.c.l.b16 %v2354
  %v2395 = vunpack.c.l.b16 %v2355
  %v2396 = vunpack.c.l.b16 %v2356
  %v2397 = vpack.c.b16 %v2382, %v2381
  %v2398 = vpack.c.b16 %v2384, %v2383
  %v2399 = vpack.c.b16 %v2386, %v2385
  %v2400 = vpack.c.b16 %v2388, %v2387
  %v2401 = vpack.c.b16 %v2390, %v2389
  %v2402 = vpack.c.b16 %v2392, %v2391
  %v2403 = vpack.c.b16 %v2394, %v2393
  %v2404 = vpack.c.b16 %v2396, %v2395
  %2413 = vmatprep.subr.bf16.mxu0 0
  %2414 = vmatpush1.bf16.msra.mxu0 %v2404
  %2415 = vmatprep.subr.bf16.mxu0 0
  %2416 = vmatpush1.bf16.msra.mxu0 %v2403
  %2417 = vmatprep.subr.bf16.mxu0 0
  %2418 = vmatpush1.bf16.msra.mxu0 %v2402
  %2419 = vmatprep.subr.bf16.mxu0 0
  %2420 = vmatpush1.bf16.msra.mxu0 %v2401
  %2421 = vmatprep.subr.bf16.mxu0 0
  %2422 = vmatpush1.bf16.msra.mxu0 %v2400
  %2423 = vmatprep.subr.bf16.mxu0 0
  %2424 = vmatpush1.bf16.msra.mxu0 %v2399
  %2425 = vmatprep.subr.bf16.mxu0 0
  %2426 = vmatpush1.bf16.msra.mxu0 %v2398
  %2427 = vmatprep.subr.bf16.mxu0 0
  %2428 = vmatpush1.bf16.msra.mxu0 %v2397
  %2429 = vmatprep.subr.bf16.mxu0 0
  %2430 = vmatpush2.bf16.msra.mxu0 0
  %2431 = vmatprep.subr.bf16.mxu0 0
  %2432 = vmatpush2.bf16.msra.mxu0 0
  %2433 = vmatprep.subr.bf16.mxu0 0
  %2434 = vmatpush2.bf16.msra.mxu0 0
  %2435 = vmatprep.subr.bf16.mxu0 0
  %2436 = vmatpush2.bf16.msra.mxu0 0
  %2437 = vmatprep.subr.bf16.mxu0 0
  %2438 = vmatpush2.bf16.msra.mxu0 0
  %2439 = vmatprep.subr.bf16.mxu0 0
  %2440 = vmatpush2.bf16.msra.mxu0 0
  %2441 = vmatprep.subr.bf16.mxu0 0
  %2442 = vmatpush2.bf16.msra.mxu0 0
  %2443 = vmatprep.subr.bf16.mxu0 0
  %2444 = vmatpush2.bf16.msra.mxu0 0
  %2445 = vmatprep.mubr.bf16.mxu0 0
  %2446 = vmatmul.mubr.bf16.gmra.mxu0 %v2332
  %v2447 = vpop.f32.mrf.mxu0
  %v2448 = vadd.f32 %v2363, %v2447
  %v2449 = vpop.f32.mrf.mxu0
  %v2450 = vpop.f32.mrf.mxu0
  %v2451 = vadd.f32 %v2363, %v2450
  %v2452 = vpop.f32.mrf.mxu0
  %2453 = vmatprep.mubr.bf16.mxu0 0
  %2454 = vmatmul.mubr.bf16.gmra.mxu0 %v2333
  %v2455 = vpop.f32.mrf.mxu0
  %v2456 = vadd.f32 %v2363, %v2455
  %v2457 = vpop.f32.mrf.mxu0
  %v2458 = vpop.f32.mrf.mxu0
  %v2459 = vadd.f32 %v2363, %v2458
  %v2460 = vpop.f32.mrf.mxu0
  %2461 = vmatprep.mubr.bf16.mxu0 0
  %2462 = vmatmul.mubr.bf16.gmra.mxu0 %v2334
  %v2463 = vpop.f32.mrf.mxu0
  %v2464 = vadd.f32 %v2363, %v2463
  %v2465 = vpop.f32.mrf.mxu0
  %v2466 = vpop.f32.mrf.mxu0
  %v2467 = vadd.f32 %v2363, %v2466
  %v2468 = vpop.f32.mrf.mxu0
  %2469 = vmatprep.mubr.bf16.mxu0 0
  %2470 = vmatmul.mubr.bf16.gmra.mxu0 %v2335
  %v2471 = vpop.f32.mrf.mxu0
  %v2472 = vadd.f32 %v2363, %v2471
  %v2473 = vpop.f32.mrf.mxu0
  %v2474 = vpop.f32.mrf.mxu0
  %v2475 = vadd.f32 %v2363, %v2474
  %v2476 = vpop.f32.mrf.mxu0
  %2477 = vmatprep.mubr.bf16.mxu0 0
  %2478 = vmatmul.mubr.bf16.gmra.mxu0 %v2336
  %v2479 = vpop.f32.mrf.mxu0
  %v2480 = vadd.f32 %v2363, %v2479
  %v2481 = vpop.f32.mrf.mxu0
  %v2482 = vpop.f32.mrf.mxu0
  %v2483 = vadd.f32 %v2363, %v2482
  %v2484 = vpop.f32.mrf.mxu0
  %2485 = vmatprep.mubr.bf16.mxu0 0
  %2486 = vmatmul.mubr.bf16.gmra.mxu0 %v2337
  %v2487 = vpop.f32.mrf.mxu0
  %v2488 = vadd.f32 %v2363, %v2487
  %v2489 = vpop.f32.mrf.mxu0
  %v2490 = vpop.f32.mrf.mxu0
  %v2491 = vadd.f32 %v2363, %v2490
  %v2492 = vpop.f32.mrf.mxu0
  %2493 = vmatprep.mubr.bf16.mxu0 0
  %2494 = vmatmul.mubr.bf16.gmra.mxu0 %v2338
  %v2495 = vpop.f32.mrf.mxu0
  %v2496 = vadd.f32 %v2363, %v2495
  %v2497 = vpop.f32.mrf.mxu0
  %v2498 = vpop.f32.mrf.mxu0
  %v2499 = vadd.f32 %v2363, %v2498
  %v2500 = vpop.f32.mrf.mxu0
  %2501 = vmatprep.mubr.bf16.mxu0 0
  %2502 = vmatmul.mubr.bf16.gmra.mxu0 %v2339
  %v2503 = vpop.f32.mrf.mxu0
  %v2504 = vadd.f32 %v2363, %v2503
  %v2505 = vpop.f32.mrf.mxu0
  %v2506 = vpop.f32.mrf.mxu0
  %v2507 = vadd.f32 %v2363, %v2506
  %v2508 = vpop.f32.mrf.mxu0
  %2509 = vdwg.mxu0
  %vm2510 = vcmp.gt.f32.partialorder %v2448, 0.0
  %vm2511 = vcmp.gt.f32.partialorder %v2451, 0.0
  %vm2512 = vcmp.gt.f32.partialorder %v2456, 0.0
  %vm2513 = vcmp.gt.f32.partialorder %v2459, 0.0
  %vm2514 = vcmp.gt.f32.partialorder %v2464, 0.0
  %vm2515 = vcmp.gt.f32.partialorder %v2467, 0.0
  %vm2516 = vcmp.gt.f32.partialorder %v2472, 0.0
  %vm2517 = vcmp.gt.f32.partialorder %v2475, 0.0
  %vm2518 = vcmp.gt.f32.partialorder %v2480, 0.0
  %vm2519 = vcmp.gt.f32.partialorder %v2483, 0.0
  %vm2520 = vcmp.gt.f32.partialorder %v2488, 0.0
  %vm2521 = vcmp.gt.f32.partialorder %v2491, 0.0
  %vm2522 = vcmp.gt.f32.partialorder %v2496, 0.0
  %vm2523 = vcmp.gt.f32.partialorder %v2499, 0.0
  %vm2524 = vcmp.gt.f32.partialorder %v2504, 0.0
  %vm2525 = vcmp.gt.f32.partialorder %v2507, 0.0
  %v2526 = vmul.f32 %v2448, 1.442695
  %v2527 = vpow.pop %v2526
  %v2528 = vmul.f32 %v2451, 1.442695
  %v2529 = vpow.pop %v2528
  %v2530 = vmul.f32 %v2456, 1.442695
  %v2531 = vpow.pop %v2530
  %v2532 = vmul.f32 %v2459, 1.442695
  %v2533 = vpow.pop %v2532
  %v2534 = vmul.f32 %v2464, 1.442695
  %v2535 = vpow.pop %v2534
  %v2536 = vmul.f32 %v2467, 1.442695
  %v2537 = vpow.pop %v2536
  %v2538 = vmul.f32 %v2472, 1.442695
  %v2539 = vpow.pop %v2538
  %v2540 = vmul.f32 %v2475, 1.442695
  %v2541 = vpow.pop %v2540
  %v2542 = vmul.f32 %v2480, 1.442695
  %v2543 = vpow.pop %v2542
  %v2544 = vmul.f32 %v2483, 1.442695
  %v2545 = vpow.pop %v2544
  %v2546 = vmul.f32 %v2488, 1.442695
  %v2547 = vpow.pop %v2546
  %v2548 = vmul.f32 %v2491, 1.442695
  %v2549 = vpow.pop %v2548
  %v2550 = vmul.f32 %v2496, 1.442695
  %v2551 = vpow.pop %v2550
  %v2552 = vmul.f32 %v2499, 1.442695
  %v2553 = vpow.pop %v2552
  %v2554 = vmul.f32 %v2504, 1.442695
  %v2555 = vpow.pop %v2554
  %v2556 = vmul.f32 %v2507, 1.442695
  %v2557 = vpow.pop %v2556
  %v2558 = vsub.f32 %v2527, 1.0
  %v2559 = vsub.f32 %v2529, 1.0
  %v2560 = vsub.f32 %v2531, 1.0
  %v2561 = vsub.f32 %v2533, 1.0
  %v2562 = vsub.f32 %v2535, 1.0
  %v2563 = vsub.f32 %v2537, 1.0
  %v2564 = vsub.f32 %v2539, 1.0
  %v2565 = vsub.f32 %v2541, 1.0
  %v2566 = vsub.f32 %v2543, 1.0
  %v2567 = vsub.f32 %v2545, 1.0
  %v2568 = vsub.f32 %v2547, 1.0
  %v2569 = vsub.f32 %v2549, 1.0
  %v2570 = vsub.f32 %v2551, 1.0
  %v2571 = vsub.f32 %v2553, 1.0
  %v2572 = vsub.f32 %v2555, 1.0
  %v2573 = vsub.f32 %v2557, 1.0
  %v2574 = vsel %vm2510, %v2448, %v2558
  %v2575 = vsel %vm2511, %v2451, %v2559
  %v2576 = vsel %vm2512, %v2456, %v2560
  %v2577 = vsel %vm2513, %v2459, %v2561
  %v2578 = vsel %vm2514, %v2464, %v2562
  %v2579 = vsel %vm2515, %v2467, %v2563
  %v2580 = vsel %vm2516, %v2472, %v2564
  %v2581 = vsel %vm2517, %v2475, %v2565
  %v2582 = vsel %vm2518, %v2480, %v2566
  %v2583 = vsel %vm2519, %v2483, %v2567
  %v2584 = vsel %vm2520, %v2488, %v2568
  %v2585 = vsel %vm2521, %v2491, %v2569
  %v2586 = vsel %vm2522, %v2496, %v2570
  %v2587 = vsel %vm2523, %v2499, %v2571
  %v2588 = vsel %vm2524, %v2504, %v2572
  %v2589 = vsel %vm2525, %v2507, %v2573
  %v2590 = vpack.c.bf16 %v2575, %v2574
  %v2591 = vpack.c.bf16 %v2577, %v2576
  %v2592 = vpack.c.bf16 %v2579, %v2578
  %v2593 = vpack.c.bf16 %v2581, %v2580
  %v2594 = vpack.c.bf16 %v2583, %v2582
  %v2595 = vpack.c.bf16 %v2585, %v2584
  %v2596 = vpack.c.bf16 %v2587, %v2586
  %v2597 = vpack.c.bf16 %v2589, %v2588
  %s2598 = scalar_lea.vmem %s3, 320
  %v2599 = vld [vmem:[%s2598] sm:$0xf]
  %v2600 = vld [vmem:[%s2598 + $0x4] sm:$0xf]
  %v2601 = vld [vmem:[%s2598 + $0x8] sm:$0xf]
  %v2602 = vld [vmem:[%s2598 + $0xc] sm:$0xf]
  %v2603 = vld [vmem:[%s2598 + $0x10] sm:$0xf]
  %v2604 = vld [vmem:[%s2598 + $0x14] sm:$0xf]
  %v2605 = vld [vmem:[%s2598 + $0x18] sm:$0xf]
  %v2606 = vld [vmem:[%s2598 + $0x1c] sm:$0xf]
  %v2607 = vld [vmem:[%s2598 + $0x20] sm:$0xf]
  %v2608 = vld [vmem:[%s2598 + $0x24] sm:$0xf]
  %v2609 = vld [vmem:[%s2598 + $0x28] sm:$0xf]
  %v2610 = vld [vmem:[%s2598 + $0x2c] sm:$0xf]
  %v2611 = vld [vmem:[%s2598 + $0x30] sm:$0xf]
  %v2612 = vld [vmem:[%s2598 + $0x34] sm:$0xf]
  %v2613 = vld [vmem:[%s2598 + $0x38] sm:$0xf]
  %v2614 = vld [vmem:[%s2598 + $0x3c] sm:$0xf]
  %s2615 = scalar_lea.vmem %s4, 5
  %v2616 = vld [vmem:[%s2615] sm:$0x1]
  %v2618 = vlaneseq
  %v2619 = vshrl.u32 %v2618, 7
  %v2620 = vsub.s32 0, %v2619
  %v2621 = vrot.slane %v2616, %v2620
  %v2639 = vunpack.c.l.b16 %v2599
  %v2640 = vunpack.c.l.b16 %v2600
  %v2641 = vunpack.c.l.b16 %v2601
  %v2642 = vunpack.c.l.b16 %v2602
  %v2643 = vunpack.c.l.b16 %v2603
  %v2644 = vunpack.c.l.b16 %v2604
  %v2645 = vunpack.c.l.b16 %v2605
  %v2646 = vunpack.c.l.b16 %v2606
  %v2647 = vunpack.c.l.b16 %v2607
  %v2648 = vunpack.c.l.b16 %v2608
  %v2649 = vunpack.c.l.b16 %v2609
  %v2650 = vunpack.c.l.b16 %v2610
  %v2651 = vunpack.c.l.b16 %v2611
  %v2652 = vunpack.c.l.b16 %v2612
  %v2653 = vunpack.c.l.b16 %v2613
  %v2654 = vunpack.c.l.b16 %v2614
  %v2655 = vpack.c.b16 %v2640, %v2639
  %v2656 = vpack.c.b16 %v2642, %v2641
  %v2657 = vpack.c.b16 %v2644, %v2643
  %v2658 = vpack.c.b16 %v2646, %v2645
  %v2659 = vpack.c.b16 %v2648, %v2647
  %v2660 = vpack.c.b16 %v2650, %v2649
  %v2661 = vpack.c.b16 %v2652, %v2651
  %v2662 = vpack.c.b16 %v2654, %v2653
  %2671 = vmatprep.subr.bf16.mxu0 0
  %2672 = vmatpush1.bf16.msra.mxu0 %v2662
  %2673 = vmatprep.subr.bf16.mxu0 0
  %2674 = vmatpush1.bf16.msra.mxu0 %v2661
  %2675 = vmatprep.subr.bf16.mxu0 0
  %2676 = vmatpush1.bf16.msra.mxu0 %v2660
  %2677 = vmatprep.subr.bf16.mxu0 0
  %2678 = vmatpush1.bf16.msra.mxu0 %v2659
  %2679 = vmatprep.subr.bf16.mxu0 0
  %2680 = vmatpush1.bf16.msra.mxu0 %v2658
  %2681 = vmatprep.subr.bf16.mxu0 0
  %2682 = vmatpush1.bf16.msra.mxu0 %v2657
  %2683 = vmatprep.subr.bf16.mxu0 0
  %2684 = vmatpush1.bf16.msra.mxu0 %v2656
  %2685 = vmatprep.subr.bf16.mxu0 0
  %2686 = vmatpush1.bf16.msra.mxu0 %v2655
  %2687 = vmatprep.subr.bf16.mxu0 0
  %2688 = vmatpush2.bf16.msra.mxu0 0
  %2689 = vmatprep.subr.bf16.mxu0 0
  %2690 = vmatpush2.bf16.msra.mxu0 0
  %2691 = vmatprep.subr.bf16.mxu0 0
  %2692 = vmatpush2.bf16.msra.mxu0 0
  %2693 = vmatprep.subr.bf16.mxu0 0
  %2694 = vmatpush2.bf16.msra.mxu0 0
  %2695 = vmatprep.subr.bf16.mxu0 0
  %2696 = vmatpush2.bf16.msra.mxu0 0
  %2697 = vmatprep.subr.bf16.mxu0 0
  %2698 = vmatpush2.bf16.msra.mxu0 0
  %2699 = vmatprep.subr.bf16.mxu0 0
  %2700 = vmatpush2.bf16.msra.mxu0 0
  %2701 = vmatprep.subr.bf16.mxu0 0
  %2702 = vmatpush2.bf16.msra.mxu0 0
  %2703 = vmatprep.mubr.bf16.mxu0 0
  %2704 = vmatmul.mubr.bf16.gmra.mxu0 %v2590
  %v2705 = vpop.f32.mrf.mxu0
  %v2706 = vadd.f32 %v2621, %v2705
  %v2707 = vpop.f32.mrf.mxu0
  %v2708 = vpop.f32.mrf.mxu0
  %v2709 = vadd.f32 %v2621, %v2708
  %v2710 = vpop.f32.mrf.mxu0
  %2711 = vmatprep.mubr.bf16.mxu0 0
  %2712 = vmatmul.mubr.bf16.gmra.mxu0 %v2591
  %v2713 = vpop.f32.mrf.mxu0
  %v2714 = vadd.f32 %v2621, %v2713
  %v2715 = vpop.f32.mrf.mxu0
  %v2716 = vpop.f32.mrf.mxu0
  %v2717 = vadd.f32 %v2621, %v2716
  %v2718 = vpop.f32.mrf.mxu0
  %2719 = vmatprep.mubr.bf16.mxu0 0
  %2720 = vmatmul.mubr.bf16.gmra.mxu0 %v2592
  %v2721 = vpop.f32.mrf.mxu0
  %v2722 = vadd.f32 %v2621, %v2721
  %v2723 = vpop.f32.mrf.mxu0
  %v2724 = vpop.f32.mrf.mxu0
  %v2725 = vadd.f32 %v2621, %v2724
  %v2726 = vpop.f32.mrf.mxu0
  %2727 = vmatprep.mubr.bf16.mxu0 0
  %2728 = vmatmul.mubr.bf16.gmra.mxu0 %v2593
  %v2729 = vpop.f32.mrf.mxu0
  %v2730 = vadd.f32 %v2621, %v2729
  %v2731 = vpop.f32.mrf.mxu0
  %v2732 = vpop.f32.mrf.mxu0
  %v2733 = vadd.f32 %v2621, %v2732
  %v2734 = vpop.f32.mrf.mxu0
  %2735 = vmatprep.mubr.bf16.mxu0 0
  %2736 = vmatmul.mubr.bf16.gmra.mxu0 %v2594
  %v2737 = vpop.f32.mrf.mxu0
  %v2738 = vadd.f32 %v2621, %v2737
  %v2739 = vpop.f32.mrf.mxu0
  %v2740 = vpop.f32.mrf.mxu0
  %v2741 = vadd.f32 %v2621, %v2740
  %v2742 = vpop.f32.mrf.mxu0
  %2743 = vmatprep.mubr.bf16.mxu0 0
  %2744 = vmatmul.mubr.bf16.gmra.mxu0 %v2595
  %v2745 = vpop.f32.mrf.mxu0
  %v2746 = vadd.f32 %v2621, %v2745
  %v2747 = vpop.f32.mrf.mxu0
  %v2748 = vpop.f32.mrf.mxu0
  %v2749 = vadd.f32 %v2621, %v2748
  %v2750 = vpop.f32.mrf.mxu0
  %2751 = vmatprep.mubr.bf16.mxu0 0
  %2752 = vmatmul.mubr.bf16.gmra.mxu0 %v2596
  %v2753 = vpop.f32.mrf.mxu0
  %v2754 = vadd.f32 %v2621, %v2753
  %v2755 = vpop.f32.mrf.mxu0
  %v2756 = vpop.f32.mrf.mxu0
  %v2757 = vadd.f32 %v2621, %v2756
  %v2758 = vpop.f32.mrf.mxu0
  %2759 = vmatprep.mubr.bf16.mxu0 0
  %2760 = vmatmul.mubr.bf16.gmra.mxu0 %v2597
  %v2761 = vpop.f32.mrf.mxu0
  %v2762 = vadd.f32 %v2621, %v2761
  %v2763 = vpop.f32.mrf.mxu0
  %v2764 = vpop.f32.mrf.mxu0
  %v2765 = vadd.f32 %v2621, %v2764
  %v2766 = vpop.f32.mrf.mxu0
  %2767 = vdwg.mxu0
  %vm2768 = vcmp.gt.f32.partialorder %v2706, 0.0
  %vm2769 = vcmp.gt.f32.partialorder %v2709, 0.0
  %vm2770 = vcmp.gt.f32.partialorder %v2714, 0.0
  %vm2771 = vcmp.gt.f32.partialorder %v2717, 0.0
  %vm2772 = vcmp.gt.f32.partialorder %v2722, 0.0
  %vm2773 = vcmp.gt.f32.partialorder %v2725, 0.0
  %vm2774 = vcmp.gt.f32.partialorder %v2730, 0.0
  %vm2775 = vcmp.gt.f32.partialorder %v2733, 0.0
  %vm2776 = vcmp.gt.f32.partialorder %v2738, 0.0
  %vm2777 = vcmp.gt.f32.partialorder %v2741, 0.0
  %vm2778 = vcmp.gt.f32.partialorder %v2746, 0.0
  %vm2779 = vcmp.gt.f32.partialorder %v2749, 0.0
  %vm2780 = vcmp.gt.f32.partialorder %v2754, 0.0
  %vm2781 = vcmp.gt.f32.partialorder %v2757, 0.0
  %vm2782 = vcmp.gt.f32.partialorder %v2762, 0.0
  %vm2783 = vcmp.gt.f32.partialorder %v2765, 0.0
  %v2784 = vmul.f32 %v2706, 1.442695
  %v2785 = vpow.pop %v2784
  %v2786 = vmul.f32 %v2709, 1.442695
  %v2787 = vpow.pop %v2786
  %v2788 = vmul.f32 %v2714, 1.442695
  %v2789 = vpow.pop %v2788
  %v2790 = vmul.f32 %v2717, 1.442695
  %v2791 = vpow.pop %v2790
  %v2792 = vmul.f32 %v2722, 1.442695
  %v2793 = vpow.pop %v2792
  %v2794 = vmul.f32 %v2725, 1.442695
  %v2795 = vpow.pop %v2794
  %v2796 = vmul.f32 %v2730, 1.442695
  %v2797 = vpow.pop %v2796
  %v2798 = vmul.f32 %v2733, 1.442695
  %v2799 = vpow.pop %v2798
  %v2800 = vmul.f32 %v2738, 1.442695
  %v2801 = vpow.pop %v2800
  %v2802 = vmul.f32 %v2741, 1.442695
  %v2803 = vpow.pop %v2802
  %v2804 = vmul.f32 %v2746, 1.442695
  %v2805 = vpow.pop %v2804
  %v2806 = vmul.f32 %v2749, 1.442695
  %v2807 = vpow.pop %v2806
  %v2808 = vmul.f32 %v2754, 1.442695
  %v2809 = vpow.pop %v2808
  %v2810 = vmul.f32 %v2757, 1.442695
  %v2811 = vpow.pop %v2810
  %v2812 = vmul.f32 %v2762, 1.442695
  %v2813 = vpow.pop %v2812
  %v2814 = vmul.f32 %v2765, 1.442695
  %v2815 = vpow.pop %v2814
  %v2816 = vsub.f32 %v2785, 1.0
  %v2817 = vsub.f32 %v2787, 1.0
  %v2818 = vsub.f32 %v2789, 1.0
  %v2819 = vsub.f32 %v2791, 1.0
  %v2820 = vsub.f32 %v2793, 1.0
  %v2821 = vsub.f32 %v2795, 1.0
  %v2822 = vsub.f32 %v2797, 1.0
  %v2823 = vsub.f32 %v2799, 1.0
  %v2824 = vsub.f32 %v2801, 1.0
  %v2825 = vsub.f32 %v2803, 1.0
  %v2826 = vsub.f32 %v2805, 1.0
  %v2827 = vsub.f32 %v2807, 1.0
  %v2828 = vsub.f32 %v2809, 1.0
  %v2829 = vsub.f32 %v2811, 1.0
  %v2830 = vsub.f32 %v2813, 1.0
  %v2831 = vsub.f32 %v2815, 1.0
  %v2832 = vsel %vm2768, %v2706, %v2816
  %v2833 = vsel %vm2769, %v2709, %v2817
  %v2834 = vsel %vm2770, %v2714, %v2818
  %v2835 = vsel %vm2771, %v2717, %v2819
  %v2836 = vsel %vm2772, %v2722, %v2820
  %v2837 = vsel %vm2773, %v2725, %v2821
  %v2838 = vsel %vm2774, %v2730, %v2822
  %v2839 = vsel %vm2775, %v2733, %v2823
  %v2840 = vsel %vm2776, %v2738, %v2824
  %v2841 = vsel %vm2777, %v2741, %v2825
  %v2842 = vsel %vm2778, %v2746, %v2826
  %v2843 = vsel %vm2779, %v2749, %v2827
  %v2844 = vsel %vm2780, %v2754, %v2828
  %v2845 = vsel %vm2781, %v2757, %v2829
  %v2846 = vsel %vm2782, %v2762, %v2830
  %v2847 = vsel %vm2783, %v2765, %v2831
  %v2848 = vpack.c.bf16 %v2833, %v2832
  %v2849 = vpack.c.bf16 %v2835, %v2834
  %v2850 = vpack.c.bf16 %v2837, %v2836
  %v2851 = vpack.c.bf16 %v2839, %v2838
  %v2852 = vpack.c.bf16 %v2841, %v2840
  %v2853 = vpack.c.bf16 %v2843, %v2842
  %v2854 = vpack.c.bf16 %v2845, %v2844
  %v2855 = vpack.c.bf16 %v2847, %v2846
  %s2856 = scalar_lea.vmem %s3, 384
  %v2857 = vld [vmem:[%s2856] sm:$0xf]
  %v2858 = vld [vmem:[%s2856 + $0x4] sm:$0xf]
  %v2859 = vld [vmem:[%s2856 + $0x8] sm:$0xf]
  %v2860 = vld [vmem:[%s2856 + $0xc] sm:$0xf]
  %v2861 = vld [vmem:[%s2856 + $0x10] sm:$0xf]
  %v2862 = vld [vmem:[%s2856 + $0x14] sm:$0xf]
  %v2863 = vld [vmem:[%s2856 + $0x18] sm:$0xf]
  %v2864 = vld [vmem:[%s2856 + $0x1c] sm:$0xf]
  %v2865 = vld [vmem:[%s2856 + $0x20] sm:$0xf]
  %v2866 = vld [vmem:[%s2856 + $0x24] sm:$0xf]
  %v2867 = vld [vmem:[%s2856 + $0x28] sm:$0xf]
  %v2868 = vld [vmem:[%s2856 + $0x2c] sm:$0xf]
  %v2869 = vld [vmem:[%s2856 + $0x30] sm:$0xf]
  %v2870 = vld [vmem:[%s2856 + $0x34] sm:$0xf]
  %v2871 = vld [vmem:[%s2856 + $0x38] sm:$0xf]
  %v2872 = vld [vmem:[%s2856 + $0x3c] sm:$0xf]
  %s2873 = scalar_lea.vmem %s4, 6
  %v2874 = vld [vmem:[%s2873] sm:$0x1]
  %v2876 = vlaneseq
  %v2877 = vshrl.u32 %v2876, 7
  %v2878 = vsub.s32 0, %v2877
  %v2879 = vrot.slane %v2874, %v2878
  %v2897 = vunpack.c.l.b16 %v2857
  %v2898 = vunpack.c.l.b16 %v2858
  %v2899 = vunpack.c.l.b16 %v2859
  %v2900 = vunpack.c.l.b16 %v2860
  %v2901 = vunpack.c.l.b16 %v2861
  %v2902 = vunpack.c.l.b16 %v2862
  %v2903 = vunpack.c.l.b16 %v2863
  %v2904 = vunpack.c.l.b16 %v2864
  %v2905 = vunpack.c.l.b16 %v2865
  %v2906 = vunpack.c.l.b16 %v2866
  %v2907 = vunpack.c.l.b16 %v2867
  %v2908 = vunpack.c.l.b16 %v2868
  %v2909 = vunpack.c.l.b16 %v2869
  %v2910 = vunpack.c.l.b16 %v2870
  %v2911 = vunpack.c.l.b16 %v2871
  %v2912 = vunpack.c.l.b16 %v2872
  %v2913 = vpack.c.b16 %v2898, %v2897
  %v2914 = vpack.c.b16 %v2900, %v2899
  %v2915 = vpack.c.b16 %v2902, %v2901
  %v2916 = vpack.c.b16 %v2904, %v2903
  %v2917 = vpack.c.b16 %v2906, %v2905
  %v2918 = vpack.c.b16 %v2908, %v2907
  %v2919 = vpack.c.b16 %v2910, %v2909
  %v2920 = vpack.c.b16 %v2912, %v2911
  %2929 = vmatprep.subr.bf16.mxu0 0
  %2930 = vmatpush1.bf16.msra.mxu0 %v2920
  %2931 = vmatprep.subr.bf16.mxu0 0
  %2932 = vmatpush1.bf16.msra.mxu0 %v2919
  %2933 = vmatprep.subr.bf16.mxu0 0
  %2934 = vmatpush1.bf16.msra.mxu0 %v2918
  %2935 = vmatprep.subr.bf16.mxu0 0
  %2936 = vmatpush1.bf16.msra.mxu0 %v2917
  %2937 = vmatprep.subr.bf16.mxu0 0
  %2938 = vmatpush1.bf16.msra.mxu0 %v2916
  %2939 = vmatprep.subr.bf16.mxu0 0
  %2940 = vmatpush1.bf16.msra.mxu0 %v2915
  %2941 = vmatprep.subr.bf16.mxu0 0
  %2942 = vmatpush1.bf16.msra.mxu0 %v2914
  %2943 = vmatprep.subr.bf16.mxu0 0
  %2944 = vmatpush1.bf16.msra.mxu0 %v2913
  %2945 = vmatprep.subr.bf16.mxu0 0
  %2946 = vmatpush2.bf16.msra.mxu0 0
  %2947 = vmatprep.subr.bf16.mxu0 0
  %2948 = vmatpush2.bf16.msra.mxu0 0
  %2949 = vmatprep.subr.bf16.mxu0 0
  %2950 = vmatpush2.bf16.msra.mxu0 0
  %2951 = vmatprep.subr.bf16.mxu0 0
  %2952 = vmatpush2.bf16.msra.mxu0 0
  %2953 = vmatprep.subr.bf16.mxu0 0
  %2954 = vmatpush2.bf16.msra.mxu0 0
  %2955 = vmatprep.subr.bf16.mxu0 0
  %2956 = vmatpush2.bf16.msra.mxu0 0
  %2957 = vmatprep.subr.bf16.mxu0 0
  %2958 = vmatpush2.bf16.msra.mxu0 0
  %2959 = vmatprep.subr.bf16.mxu0 0
  %2960 = vmatpush2.bf16.msra.mxu0 0
  %2961 = vmatprep.mubr.bf16.mxu0 0
  %2962 = vmatmul.mubr.bf16.gmra.mxu0 %v2848
  %v2963 = vpop.f32.mrf.mxu0
  %v2964 = vadd.f32 %v2879, %v2963
  %v2965 = vpop.f32.mrf.mxu0
  %v2966 = vpop.f32.mrf.mxu0
  %v2967 = vadd.f32 %v2879, %v2966
  %v2968 = vpop.f32.mrf.mxu0
  %2969 = vmatprep.mubr.bf16.mxu0 0
  %2970 = vmatmul.mubr.bf16.gmra.mxu0 %v2849
  %v2971 = vpop.f32.mrf.mxu0
  %v2972 = vadd.f32 %v2879, %v2971
  %v2973 = vpop.f32.mrf.mxu0
  %v2974 = vpop.f32.mrf.mxu0
  %v2975 = vadd.f32 %v2879, %v2974
  %v2976 = vpop.f32.mrf.mxu0
  %2977 = vmatprep.mubr.bf16.mxu0 0
  %2978 = vmatmul.mubr.bf16.gmra.mxu0 %v2850
  %v2979 = vpop.f32.mrf.mxu0
  %v2980 = vadd.f32 %v2879, %v2979
  %v2981 = vpop.f32.mrf.mxu0
  %v2982 = vpop.f32.mrf.mxu0
  %v2983 = vadd.f32 %v2879, %v2982
  %v2984 = vpop.f32.mrf.mxu0
  %2985 = vmatprep.mubr.bf16.mxu0 0
  %2986 = vmatmul.mubr.bf16.gmra.mxu0 %v2851
  %v2987 = vpop.f32.mrf.mxu0
  %v2988 = vadd.f32 %v2879, %v2987
  %v2989 = vpop.f32.mrf.mxu0
  %v2990 = vpop.f32.mrf.mxu0
  %v2991 = vadd.f32 %v2879, %v2990
  %v2992 = vpop.f32.mrf.mxu0
  %2993 = vmatprep.mubr.bf16.mxu0 0
  %2994 = vmatmul.mubr.bf16.gmra.mxu0 %v2852
  %v2995 = vpop.f32.mrf.mxu0
  %v2996 = vadd.f32 %v2879, %v2995
  %v2997 = vpop.f32.mrf.mxu0
  %v2998 = vpop.f32.mrf.mxu0
  %v2999 = vadd.f32 %v2879, %v2998
  %v3000 = vpop.f32.mrf.mxu0
  %3001 = vmatprep.mubr.bf16.mxu0 0
  %3002 = vmatmul.mubr.bf16.gmra.mxu0 %v2853
  %v3003 = vpop.f32.mrf.mxu0
  %v3004 = vadd.f32 %v2879, %v3003
  %v3005 = vpop.f32.mrf.mxu0
  %v3006 = vpop.f32.mrf.mxu0
  %v3007 = vadd.f32 %v2879, %v3006
  %v3008 = vpop.f32.mrf.mxu0
  %3009 = vmatprep.mubr.bf16.mxu0 0
  %3010 = vmatmul.mubr.bf16.gmra.mxu0 %v2854
  %v3011 = vpop.f32.mrf.mxu0
  %v3012 = vadd.f32 %v2879, %v3011
  %v3013 = vpop.f32.mrf.mxu0
  %v3014 = vpop.f32.mrf.mxu0
  %v3015 = vadd.f32 %v2879, %v3014
  %v3016 = vpop.f32.mrf.mxu0
  %3017 = vmatprep.mubr.bf16.mxu0 0
  %3018 = vmatmul.mubr.bf16.gmra.mxu0 %v2855
  %v3019 = vpop.f32.mrf.mxu0
  %v3020 = vadd.f32 %v2879, %v3019
  %v3021 = vpop.f32.mrf.mxu0
  %v3022 = vpop.f32.mrf.mxu0
  %v3023 = vadd.f32 %v2879, %v3022
  %v3024 = vpop.f32.mrf.mxu0
  %3025 = vdwg.mxu0
  %vm3026 = vcmp.gt.f32.partialorder %v2964, 0.0
  %vm3027 = vcmp.gt.f32.partialorder %v2967, 0.0
  %vm3028 = vcmp.gt.f32.partialorder %v2972, 0.0
  %vm3029 = vcmp.gt.f32.partialorder %v2975, 0.0
  %vm3030 = vcmp.gt.f32.partialorder %v2980, 0.0
  %vm3031 = vcmp.gt.f32.partialorder %v2983, 0.0
  %vm3032 = vcmp.gt.f32.partialorder %v2988, 0.0
  %vm3033 = vcmp.gt.f32.partialorder %v2991, 0.0
  %vm3034 = vcmp.gt.f32.partialorder %v2996, 0.0
  %vm3035 = vcmp.gt.f32.partialorder %v2999, 0.0
  %vm3036 = vcmp.gt.f32.partialorder %v3004, 0.0
  %vm3037 = vcmp.gt.f32.partialorder %v3007, 0.0
  %vm3038 = vcmp.gt.f32.partialorder %v3012, 0.0
  %vm3039 = vcmp.gt.f32.partialorder %v3015, 0.0
  %vm3040 = vcmp.gt.f32.partialorder %v3020, 0.0
  %vm3041 = vcmp.gt.f32.partialorder %v3023, 0.0
  %v3042 = vmul.f32 %v2964, 1.442695
  %v3043 = vpow.pop %v3042
  %v3044 = vmul.f32 %v2967, 1.442695
  %v3045 = vpow.pop %v3044
  %v3046 = vmul.f32 %v2972, 1.442695
  %v3047 = vpow.pop %v3046
  %v3048 = vmul.f32 %v2975, 1.442695
  %v3049 = vpow.pop %v3048
  %v3050 = vmul.f32 %v2980, 1.442695
  %v3051 = vpow.pop %v3050
  %v3052 = vmul.f32 %v2983, 1.442695
  %v3053 = vpow.pop %v3052
  %v3054 = vmul.f32 %v2988, 1.442695
  %v3055 = vpow.pop %v3054
  %v3056 = vmul.f32 %v2991, 1.442695
  %v3057 = vpow.pop %v3056
  %v3058 = vmul.f32 %v2996, 1.442695
  %v3059 = vpow.pop %v3058
  %v3060 = vmul.f32 %v2999, 1.442695
  %v3061 = vpow.pop %v3060
  %v3062 = vmul.f32 %v3004, 1.442695
  %v3063 = vpow.pop %v3062
  %v3064 = vmul.f32 %v3007, 1.442695
  %v3065 = vpow.pop %v3064
  %v3066 = vmul.f32 %v3012, 1.442695
  %v3067 = vpow.pop %v3066
  %v3068 = vmul.f32 %v3015, 1.442695
  %v3069 = vpow.pop %v3068
  %v3070 = vmul.f32 %v3020, 1.442695
  %v3071 = vpow.pop %v3070
  %v3072 = vmul.f32 %v3023, 1.442695
  %v3073 = vpow.pop %v3072
  %v3074 = vsub.f32 %v3043, 1.0
  %v3075 = vsub.f32 %v3045, 1.0
  %v3076 = vsub.f32 %v3047, 1.0
  %v3077 = vsub.f32 %v3049, 1.0
  %v3078 = vsub.f32 %v3051, 1.0
  %v3079 = vsub.f32 %v3053, 1.0
  %v3080 = vsub.f32 %v3055, 1.0
  %v3081 = vsub.f32 %v3057, 1.0
  %v3082 = vsub.f32 %v3059, 1.0
  %v3083 = vsub.f32 %v3061, 1.0
  %v3084 = vsub.f32 %v3063, 1.0
  %v3085 = vsub.f32 %v3065, 1.0
  %v3086 = vsub.f32 %v3067, 1.0
  %v3087 = vsub.f32 %v3069, 1.0
  %v3088 = vsub.f32 %v3071, 1.0
  %v3089 = vsub.f32 %v3073, 1.0
  %v3090 = vsel %vm3026, %v2964, %v3074
  %v3091 = vsel %vm3027, %v2967, %v3075
  %v3092 = vsel %vm3028, %v2972, %v3076
  %v3093 = vsel %vm3029, %v2975, %v3077
  %v3094 = vsel %vm3030, %v2980, %v3078
  %v3095 = vsel %vm3031, %v2983, %v3079
  %v3096 = vsel %vm3032, %v2988, %v3080
  %v3097 = vsel %vm3033, %v2991, %v3081
  %v3098 = vsel %vm3034, %v2996, %v3082
  %v3099 = vsel %vm3035, %v2999, %v3083
  %v3100 = vsel %vm3036, %v3004, %v3084
  %v3101 = vsel %vm3037, %v3007, %v3085
  %v3102 = vsel %vm3038, %v3012, %v3086
  %v3103 = vsel %vm3039, %v3015, %v3087
  %v3104 = vsel %vm3040, %v3020, %v3088
  %v3105 = vsel %vm3041, %v3023, %v3089
  %v3106 = vpack.c.bf16 %v3091, %v3090
  %v3107 = vpack.c.bf16 %v3093, %v3092
  %v3108 = vpack.c.bf16 %v3095, %v3094
  %v3109 = vpack.c.bf16 %v3097, %v3096
  %v3110 = vpack.c.bf16 %v3099, %v3098
  %v3111 = vpack.c.bf16 %v3101, %v3100
  %v3112 = vpack.c.bf16 %v3103, %v3102
  %v3113 = vpack.c.bf16 %v3105, %v3104
  %v3114 = vld [vmem:[%s5] sm:$0xf]
  %v3115 = vld [vmem:[%s5 + $0x4] sm:$0xf]
  %v3116 = vld [vmem:[%s5 + $0x8] sm:$0xf]
  %v3117 = vld [vmem:[%s5 + $0xc] sm:$0xf]
  %v3118 = vld [vmem:[%s5 + $0x10] sm:$0xf]
  %v3119 = vld [vmem:[%s5 + $0x14] sm:$0xf]
  %v3120 = vld [vmem:[%s5 + $0x18] sm:$0xf]
  %v3121 = vld [vmem:[%s5 + $0x1c] sm:$0xf]
  %v3122 = vld [vmem:[%s5 + $0x20] sm:$0xf]
  %v3123 = vld [vmem:[%s5 + $0x24] sm:$0xf]
  %v3124 = vld [vmem:[%s5 + $0x28] sm:$0xf]
  %v3125 = vld [vmem:[%s5 + $0x2c] sm:$0xf]
  %v3126 = vld [vmem:[%s5 + $0x30] sm:$0xf]
  %v3127 = vld [vmem:[%s5 + $0x34] sm:$0xf]
  %v3128 = vld [vmem:[%s5 + $0x38] sm:$0xf]
  %v3129 = vld [vmem:[%s5 + $0x3c] sm:$0xf]
  %v3130 = vld [vmem:[%s6] sm:$0x1]
  %v3132 = vlaneseq
  %v3133 = vshrl.u32 %v3132, 7
  %v3134 = vsub.s32 0, %v3133
  %v3135 = vrot.slane %v3130, %v3134
  %v3153 = vunpack.c.l.b16 %v3114
  %v3154 = vunpack.c.l.b16 %v3115
  %v3155 = vunpack.c.l.b16 %v3116
  %v3156 = vunpack.c.l.b16 %v3117
  %v3157 = vunpack.c.l.b16 %v3118
  %v3158 = vunpack.c.l.b16 %v3119
  %v3159 = vunpack.c.l.b16 %v3120
  %v3160 = vunpack.c.l.b16 %v3121
  %v3161 = vunpack.c.l.b16 %v3122
  %v3162 = vunpack.c.l.b16 %v3123
  %v3163 = vunpack.c.l.b16 %v3124
  %v3164 = vunpack.c.l.b16 %v3125
  %v3165 = vunpack.c.l.b16 %v3126
  %v3166 = vunpack.c.l.b16 %v3127
  %v3167 = vunpack.c.l.b16 %v3128
  %v3168 = vunpack.c.l.b16 %v3129
  %v3169 = vpack.c.b16 %v3154, %v3153
  %v3170 = vpack.c.b16 %v3156, %v3155
  %v3171 = vpack.c.b16 %v3158, %v3157
  %v3172 = vpack.c.b16 %v3160, %v3159
  %v3173 = vpack.c.b16 %v3162, %v3161
  %v3174 = vpack.c.b16 %v3164, %v3163
  %v3175 = vpack.c.b16 %v3166, %v3165
  %v3176 = vpack.c.b16 %v3168, %v3167
  %3185 = vmatprep.subr.bf16.mxu0 0
  %3186 = vmatpush1.bf16.msra.mxu0 %v3176
  %3187 = vmatprep.subr.bf16.mxu0 0
  %3188 = vmatpush1.bf16.msra.mxu0 %v3175
  %3189 = vmatprep.subr.bf16.mxu0 0
  %3190 = vmatpush1.bf16.msra.mxu0 %v3174
  %3191 = vmatprep.subr.bf16.mxu0 0
  %3192 = vmatpush1.bf16.msra.mxu0 %v3173
  %3193 = vmatprep.subr.bf16.mxu0 0
  %3194 = vmatpush1.bf16.msra.mxu0 %v3172
  %3195 = vmatprep.subr.bf16.mxu0 0
  %3196 = vmatpush1.bf16.msra.mxu0 %v3171
  %3197 = vmatprep.subr.bf16.mxu0 0
  %3198 = vmatpush1.bf16.msra.mxu0 %v3170
  %3199 = vmatprep.subr.bf16.mxu0 0
  %3200 = vmatpush1.bf16.msra.mxu0 %v3169
  %3201 = vmatprep.subr.bf16.mxu0 0
  %3202 = vmatpush2.bf16.msra.mxu0 0
  %3203 = vmatprep.subr.bf16.mxu0 0
  %3204 = vmatpush2.bf16.msra.mxu0 0
  %3205 = vmatprep.subr.bf16.mxu0 0
  %3206 = vmatpush2.bf16.msra.mxu0 0
  %3207 = vmatprep.subr.bf16.mxu0 0
  %3208 = vmatpush2.bf16.msra.mxu0 0
  %3209 = vmatprep.subr.bf16.mxu0 0
  %3210 = vmatpush2.bf16.msra.mxu0 0
  %3211 = vmatprep.subr.bf16.mxu0 0
  %3212 = vmatpush2.bf16.msra.mxu0 0
  %3213 = vmatprep.subr.bf16.mxu0 0
  %3214 = vmatpush2.bf16.msra.mxu0 0
  %3215 = vmatprep.subr.bf16.mxu0 0
  %3216 = vmatpush2.bf16.msra.mxu0 0
  %3217 = vmatprep.mubr.bf16.mxu0 0
  %3218 = vmatmul.mubr.bf16.gmra.mxu0 %v3106
  %v3219 = vpop.f32.mrf.mxu0
  %v3220 = vadd.f32 %v3135, %v3219
  %v3221 = vpop.f32.mrf.mxu0
  %v3222 = vpop.f32.mrf.mxu0
  %v3223 = vadd.f32 %v3135, %v3222
  %v3224 = vpop.f32.mrf.mxu0
  %3225 = vmatprep.mubr.bf16.mxu0 0
  %3226 = vmatmul.mubr.bf16.gmra.mxu0 %v3107
  %v3227 = vpop.f32.mrf.mxu0
  %v3228 = vadd.f32 %v3135, %v3227
  %v3229 = vpop.f32.mrf.mxu0
  %v3230 = vpop.f32.mrf.mxu0
  %v3231 = vadd.f32 %v3135, %v3230
  %v3232 = vpop.f32.mrf.mxu0
  %3233 = vmatprep.mubr.bf16.mxu0 0
  %3234 = vmatmul.mubr.bf16.gmra.mxu0 %v3108
  %v3235 = vpop.f32.mrf.mxu0
  %v3236 = vadd.f32 %v3135, %v3235
  %v3237 = vpop.f32.mrf.mxu0
  %v3238 = vpop.f32.mrf.mxu0
  %v3239 = vadd.f32 %v3135, %v3238
  %v3240 = vpop.f32.mrf.mxu0
  %3241 = vmatprep.mubr.bf16.mxu0 0
  %3242 = vmatmul.mubr.bf16.gmra.mxu0 %v3109
  %v3243 = vpop.f32.mrf.mxu0
  %v3244 = vadd.f32 %v3135, %v3243
  %v3245 = vpop.f32.mrf.mxu0
  %v3246 = vpop.f32.mrf.mxu0
  %v3247 = vadd.f32 %v3135, %v3246
  %v3248 = vpop.f32.mrf.mxu0
  %3249 = vmatprep.mubr.bf16.mxu0 0
  %3250 = vmatmul.mubr.bf16.gmra.mxu0 %v3110
  %v3251 = vpop.f32.mrf.mxu0
  %v3252 = vadd.f32 %v3135, %v3251
  %v3253 = vpop.f32.mrf.mxu0
  %v3254 = vpop.f32.mrf.mxu0
  %v3255 = vadd.f32 %v3135, %v3254
  %v3256 = vpop.f32.mrf.mxu0
  %3257 = vmatprep.mubr.bf16.mxu0 0
  %3258 = vmatmul.mubr.bf16.gmra.mxu0 %v3111
  %v3259 = vpop.f32.mrf.mxu0
  %v3260 = vadd.f32 %v3135, %v3259
  %v3261 = vpop.f32.mrf.mxu0
  %v3262 = vpop.f32.mrf.mxu0
  %v3263 = vadd.f32 %v3135, %v3262
  %v3264 = vpop.f32.mrf.mxu0
  %3265 = vmatprep.mubr.bf16.mxu0 0
  %3266 = vmatmul.mubr.bf16.gmra.mxu0 %v3112
  %v3267 = vpop.f32.mrf.mxu0
  %v3268 = vadd.f32 %v3135, %v3267
  %v3269 = vpop.f32.mrf.mxu0
  %v3270 = vpop.f32.mrf.mxu0
  %v3271 = vadd.f32 %v3135, %v3270
  %v3272 = vpop.f32.mrf.mxu0
  %3273 = vmatprep.mubr.bf16.mxu0 0
  %3274 = vmatmul.mubr.bf16.gmra.mxu0 %v3113
  %v3275 = vpop.f32.mrf.mxu0
  %v3276 = vadd.f32 %v3135, %v3275
  %v3277 = vpop.f32.mrf.mxu0
  %v3278 = vpop.f32.mrf.mxu0
  %v3279 = vadd.f32 %v3135, %v3278
  %v3280 = vpop.f32.mrf.mxu0
  %3281 = vdwg.mxu0
  %v3282 = vpack.c.bf16 %v3223, %v3220
  %v3283 = vpack.c.bf16 %v3231, %v3228
  %v3284 = vpack.c.bf16 %v3239, %v3236
  %v3285 = vpack.c.bf16 %v3247, %v3244
  %v3286 = vpack.c.bf16 %v3255, %v3252
  %v3287 = vpack.c.bf16 %v3263, %v3260
  %v3288 = vpack.c.bf16 %v3271, %v3268
  %v3289 = vpack.c.bf16 %v3279, %v3276
  %v3298 = vunpack.c.l.b16 %v3282
  %v3299 = vunpack.c.h.b16 %v3282
  %v3300 = vunpack.c.l.b16 %v3283
  %v3301 = vunpack.c.h.b16 %v3283
  %v3302 = vunpack.c.l.b16 %v3284
  %v3303 = vunpack.c.h.b16 %v3284
  %v3304 = vunpack.c.l.b16 %v3285
  %v3305 = vunpack.c.h.b16 %v3285
  %v3306 = vunpack.c.l.b16 %v3286
  %v3307 = vunpack.c.h.b16 %v3286
  %v3308 = vunpack.c.l.b16 %v3287
  %v3309 = vunpack.c.h.b16 %v3287
  %v3310 = vunpack.c.l.b16 %v3288
  %v3311 = vunpack.c.h.b16 %v3288
  %v3312 = vunpack.c.l.b16 %v3289
  %v3313 = vunpack.c.h.b16 %v3289
  %v3314 = vpack.c.b16 %v3298, %v3298
  %v3315 = vpack.c.b16 %v3299, %v3299
  %v3316 = vpack.c.b16 %v3300, %v3300
  %v3317 = vpack.c.b16 %v3301, %v3301
  %v3318 = vpack.c.b16 %v3302, %v3302
  %v3319 = vpack.c.b16 %v3303, %v3303
  %v3320 = vpack.c.b16 %v3304, %v3304
  %v3321 = vpack.c.b16 %v3305, %v3305
  %v3322 = vpack.c.b16 %v3306, %v3306
  %v3323 = vpack.c.b16 %v3307, %v3307
  %v3324 = vpack.c.b16 %v3308, %v3308
  %v3325 = vpack.c.b16 %v3309, %v3309
  %v3326 = vpack.c.b16 %v3310, %v3310
  %v3327 = vpack.c.b16 %v3311, %v3311
  %v3328 = vpack.c.b16 %v3312, %v3312
  %v3329 = vpack.c.b16 %v3313, %v3313
  %3346 = vst [vmem:[%s7] sm:$0xf] %v3314
  %3347 = vst [vmem:[%s7 + $0x4] sm:$0xf] %v3315
  %3348 = vst [vmem:[%s7 + $0x8] sm:$0xf] %v3316
  %3349 = vst [vmem:[%s7 + $0xc] sm:$0xf] %v3317
  %3350 = vst [vmem:[%s7 + $0x10] sm:$0xf] %v3318
  %3351 = vst [vmem:[%s7 + $0x14] sm:$0xf] %v3319
  %3352 = vst [vmem:[%s7 + $0x18] sm:$0xf] %v3320
  %3353 = vst [vmem:[%s7 + $0x1c] sm:$0xf] %v3321
  %3354 = vst [vmem:[%s7 + $0x20] sm:$0xf] %v3322
  %3355 = vst [vmem:[%s7 + $0x24] sm:$0xf] %v3323
  %3356 = vst [vmem:[%s7 + $0x28] sm:$0xf] %v3324
  %3357 = vst [vmem:[%s7 + $0x2c] sm:$0xf] %v3325
  %3358 = vst [vmem:[%s7 + $0x30] sm:$0xf] %v3326
  %3359 = vst [vmem:[%s7 + $0x34] sm:$0xf] %v3327
  %3360 = vst [vmem:[%s7 + $0x38] sm:$0xf] %v3328
  %3361 = vst [vmem:[%s7 + $0x3c] sm:$0xf] %v3329
  // Predicated region
  $region30: #{mlp_elu_forward.1} parent=0 // pred_check
    _
  $region31: #{mlp_elu_forward.1} parent=0 // pred_check_branch
    %3363 = sbr.rel (0) target = $region33
  $region32: #{mlp_elu_forward.1} parent=0 // pred_region
    _
  $region33: #{mlp_elu_forward.1} parent=0 // pred_fallthru
    _
  // Predicated region
  $region34: #{mlp_elu_forward.1} parent=0 // pred_check
    _
  $region35: #{mlp_elu_forward.1} parent=0 // pred_check_branch
    %3365 = sbr.rel (0) target = $region37
  $region36: #{mlp_elu_forward.1} parent=0 // pred_region
    _
  $region37: #{mlp_elu_forward.1} parent=0 // pred_fallthru
    _

</llo_original>
